<compile_context>
chip_gen: v7x
topology: tpu7x:2x2x1
jax: 0.10.0
libtpu: 0.0.40
codegen_flags: <defaults>
</compile_context>

<pallas_src>
import functools

import jax
import jax.numpy as jnp
from jax import lax
from jax.experimental import pallas as pl
from jax.experimental.pallas import tpu as pltpu


# -----------------------------------------------------------------------------
# Fused kernel: BiLSTM(2 layers) + LayerNorm + classifier
# -----------------------------------------------------------------------------
def fused_ner_kernel(x_ref,
                     w0f_ih_ref, w0b_ih_ref, b0f_ref, b0b_ref, whh0_ref,
                     w1f_ih_ref, w1b_ih_ref, b1f_ref, b1b_ref, whh1_ref,
                     ln_g_ref, ln_b_ref, cls_w_ref, cls_b_ref,
                     out_ref,
                     gxf_scr, gxb_scr, h_scr,
                     *, T, B, H):
    """
    x_ref:      (N, E)     time-major rows (row = t*B + b), batch padded, compute dtype
    w*_ih_ref:  (Din, 4H)  input->gates weights (pre-transposed), gate order [i,f,g,o]
    b*_ref:     (1, 4H)    combined bias (b_ih + b_hh), f32
    whh*_ref:   (2H, 8H)   block-diagonal fused hidden->gates weight:
                           [h_fwd | h_bwd] @ whh -> [fwd gates 4H | bwd gates 4H]
    ln_g/ln_b:  (1, 2H)    f32
    cls_w_ref:  (2H, Lpad) classifier weight, zero-padded to lane-dense Lpad, f32
    cls_b_ref:  (1, Lpad)  f32
    out_ref:    (N, Lpad)  f32
    gx*_scr:    (N, 4H)    precomputed gate input projections (reused per layer)
    h_scr:      (N, 2H)    packed hidden states [fwd | bwd] (layer 0, then layer 1)
    """
    unroll = True if T <= 16 else 4

    def recurrence(whh_ref):
        """Fwd + bwd LSTM recurrence; one fused MXU push per step.

        Only [h_fwd | h_bwd] @ whh_fused is on the serial critical path; the
        gate input projections (biases folded in) are read from gx*_scr.
        """
        whh = whh_ref[...]
        zeros = jnp.zeros((B, H), jnp.float32)

        def step(s, carry):
            hf, hb, cf, cb = carry
            rf = pl.multiple_of(s * B, B)             # forward time-step rows
            rb = pl.multiple_of((T - 1 - s) * B, B)   # backward time-step rows
            # (B, 8H) gate pre-activations = [fwd i,f,g,o | bwd i,f,g,o]
            gx = jnp.concatenate(
                [gxf_scr[pl.ds(rf, B), :], gxb_scr[pl.ds(rb, B), :]], axis=-1)
            h = jnp.concatenate([hf, hb], axis=-1).astype(whh.dtype)   # (B, 2H)
            gates = gx + jnp.dot(h, whh, preferred_element_type=jnp.float32)
            # Lane-dense nonlinearities: one sigmoid over all 8H lanes, tanh
            # only on the two g-gate slices (vs. 8 H-wide EUP pushes).
            sig = jax.nn.sigmoid(gates)
            g_f = jnp.tanh(gates[:, 2 * H:3 * H])
            g_b = jnp.tanh(gates[:, 6 * H:7 * H])
            cf = sig[:, 1 * H:2 * H] * cf + sig[:, 0 * H:1 * H] * g_f
            cb = sig[:, 5 * H:6 * H] * cb + sig[:, 4 * H:5 * H] * g_b
            hf = sig[:, 3 * H:4 * H] * jnp.tanh(cf)
            hb = sig[:, 7 * H:8 * H] * jnp.tanh(cb)
            h_scr[pl.ds(rf, B), pl.ds(0, H)] = hf.astype(h_scr.dtype)
            h_scr[pl.ds(rb, B), pl.ds(H, H)] = hb.astype(h_scr.dtype)
            return hf, hb, cf, cb

        lax.fori_loop(0, T, step, (zeros, zeros, zeros, zeros), unroll=unroll)

    # ---- layer 0 input projection: two batched (N,E)@(E,4H) matmuls ----------
    x = x_ref[...]
    gxf_scr[...] = (jnp.dot(x, w0f_ih_ref[...], preferred_element_type=jnp.float32)
                    + b0f_ref[...]).astype(gxf_scr.dtype)
    gxb_scr[...] = (jnp.dot(x, w0b_ih_ref[...], preferred_element_type=jnp.float32)
                    + b0b_ref[...]).astype(gxb_scr.dtype)
    recurrence(whh0_ref)                       # writes layer-0 hidden into h_scr

    # ---- layer 1 input projection from packed (N, 2H) layer-0 hidden ---------
    h1 = h_scr[...]
    gxf_scr[...] = (jnp.dot(h1, w1f_ih_ref[...], preferred_element_type=jnp.float32)
                    + b1f_ref[...]).astype(gxf_scr.dtype)
    gxb_scr[...] = (jnp.dot(h1, w1b_ih_ref[...], preferred_element_type=jnp.float32)
                    + b1b_ref[...]).astype(gxb_scr.dtype)
    recurrence(whh1_ref)                       # overwrites h_scr with layer-1 hidden

    # ---- LayerNorm + classifier on the whole (N, 2H) slab ---------------------
    h2 = h_scr[...].astype(jnp.float32)
    mu = jnp.mean(h2, axis=-1, keepdims=True)
    d = h2 - mu
    var = jnp.mean(d * d, axis=-1, keepdims=True)
    y = d * lax.rsqrt(var + 1e-5) * ln_g_ref[...] + ln_b_ref[...]
    out_ref[...] = (jnp.dot(y, cls_w_ref[...], preferred_element_type=jnp.float32)
                    + cls_b_ref[...])


# -----------------------------------------------------------------------------
# Wrapper
# -----------------------------------------------------------------------------
def ner_forward(params, input_ids, input_mask, *, compute_dtype=jnp.bfloat16):
    """Equivalent of NERModel.forward (eval mode).

    compute_dtype=bfloat16 (default) uses the bf16 MXU fast path + bf16 scratch
    with f32 accumulation / carries / LayerNorm.  compute_dtype=float32 matches
    the pure-JAX reference closely (used for the strict check).
    """
    emb = params["embedding"]
    E = emb.shape[1]
    H = params["l0f"]["whh_t"].shape[0]
    L = params["cls_b"].shape[-1]
    B, T = input_ids.shape

    cdt = jnp.dtype(compute_dtype)
    sub = 16 if cdt.itemsize < 4 else 8        # sublane tile for the scratch dtype
    Bp = ((B + sub - 1) // sub) * sub          # pad batch -> tile-aligned per-step slices
    N = T * Bp
    Lpad = ((L + 127) // 128) * 128            # lane-dense classifier output

    # --- XLA glue: embedding gather + mask + time-major flatten (tiny) --------
    embs = jnp.take(emb, input_ids, axis=0)                        # (B, T, E)
    # TODO(synk): SpatialDropout / inter-layer LSTM dropout are identity in eval mode.
    mask = input_mask.astype(embs.dtype)[:, :, None]               # (B, T, 1)
    x = jnp.transpose(embs * mask, (1, 0, 2))                      # (T, B, E)
    x = jnp.pad(x, ((0, 0), (0, Bp - B), (0, 0)))                  # (T, Bp, E)
    x = x.reshape(N, E).astype(cdt)

    def fuse_whh(pf, pb):
        # Block-diagonal (2H, 8H): one MXU push per step covers both directions.
        z = jnp.zeros((H, 4 * H), jnp.float32)
        top = jnp.concatenate([pf["whh_t"], z], axis=1)            # fwd rows
        bot = jnp.concatenate([z, pb["whh_t"]], axis=1)            # bwd rows
        return jnp.concatenate([top, bot], axis=0).astype(cdt)

    cls_w_pad = jnp.zeros((2 * H, Lpad), jnp.float32).at[:, :L].set(params["cls_w_t"])
    cls_b_pad = jnp.zeros((1, Lpad), jnp.float32).at[:, :L].set(params["cls_b"])

    args = (x,
            params["l0f"]["wih_t"].astype(cdt), params["l0b"]["wih_t"].astype(cdt),
            params["l0f"]["b"], params["l0b"]["b"],
            fuse_whh(params["l0f"], params["l0b"]),
            params["l1f"]["wih_t"].astype(cdt), params["l1b"]["wih_t"].astype(cdt),
            params["l1f"]["b"], params["l1b"]["b"],
            fuse_whh(params["l1f"], params["l1b"]),
            params["ln_g"], params["ln_b"], cls_w_pad, cls_b_pad)

    # Explicit scoped-VMEM budget: scratch + (double-buffered) I/O blocks plus
    # headroom, clamped to a range that is safe on v5e/v6e/v7x.
    scratch_bytes = (2 * N * 4 * H + N * 2 * H) * cdt.itemsize
    io_bytes = sum(int(a.size) * a.dtype.itemsize for a in args) + N * Lpad * 4
    vmem_limit = int(min(max(scratch_bytes + 2 * io_bytes + (8 << 20), 32 << 20),
                         100 << 20))

    in_specs = [pl.BlockSpec(a.shape, lambda i, _nd=a.ndim: (0,) * _nd) for a in args]

    # No batch grid split: on single-TensorCore chips (v5e/v6e) a grid over B is
    # a purely serial loop; invariant weights would also be double-buffered for
    # nothing (else mark them pl.Buffered(1)).
    out = pl.pallas_call(
        functools.partial(fused_ner_kernel, T=T, B=Bp, H=H),
        out_shape=jax.ShapeDtypeStruct((N, Lpad), jnp.float32),
        grid=(1,),
        in_specs=in_specs,
        out_specs=pl.BlockSpec((N, Lpad), lambda i: (0, 0)),
        scratch_shapes=[
            pltpu.VMEM((N, 4 * H), cdt),   # gxf (reused by layer 0 and layer 1)
            pltpu.VMEM((N, 4 * H), cdt),   # gxb
            pltpu.VMEM((N, 2 * H), cdt),   # packed hidden states (layer 0, then 1)
        ],
        compiler_params=pltpu.CompilerParams(
            dimension_semantics=("arbitrary",),
            vmem_limit_bytes=vmem_limit),
    )(*args)

    # Only the tiny (T, B, L) result is sliced / reordered back to batch-first.
    out = out.reshape(T, Bp, Lpad)[:, :B, :L]
    return jnp.transpose(out, (1, 0, 2))                           # (B, T, L)


# -----------------------------------------------------------------------------
# Deterministic parameter init (matches PyTorch module shapes)
# -----------------------------------------------------------------------------
def init_params(key, vocab_size, embedding_size, hidden_size, num_labels):
    E, H, L = embedding_size, hidden_size, num_labels
    keys = jax.random.split(key, 32)
    kid = iter(range(32))

    def u(shape, bound):
        return jax.random.uniform(keys[next(kid)], shape, jnp.float32, -bound, bound)

    params = {"embedding": jax.random.normal(keys[next(kid)], (vocab_size, E), jnp.float32)}

    bound = 1.0 / float(H) ** 0.5
    for name, din in (("l0f", E), ("l0b", E), ("l1f", 2 * H), ("l1b", 2 * H)):
        wih = u((4 * H, din), bound)       # torch weight_ih_l*: (4H, din)
        whh = u((4 * H, H), bound)         # torch weight_hh_l*: (4H, H)
        bih = u((4 * H,), bound)
        bhh = u((4 * H,), bound)
        params[name] = {
            "wih_t": wih.T,                         # (din, 4H)
            "whh_t": whh.T,                         # (H, 4H)
            "b": (bih + bhh).reshape(1, 4 * H),     # (1, 4H)
        }

    params["ln_g"] = jnp.ones((1, 2 * H), jnp.float32)
    params["ln_b"] = jnp.zeros((1, 2 * H), jnp.float32)

    cls_bound = 1.0 / float(2 * H) ** 0.5
    cls_w = u((L, 2 * H), cls_bound)
    cls_b = u((L,), cls_bound)
    params["cls_w_t"] = cls_w.T                      # (2H, L)
    params["cls_b"] = cls_b.reshape(1, L)            # (1, L)
    return params


# -----------------------------------------------------------------------------
# Pure-JAX reference (for correctness check)
# -----------------------------------------------------------------------------
def _lstm_dir_ref(x, mask, p, reverse):
    T, B, _ = x.shape
    H = p["whh_t"].shape[0]
    xs = x * mask
    if reverse:
        xs = xs[::-1]

    def step(carry, x_t):
        h, c = carry
        gates = x_t @ p["wih_t"] + h @ p["whh_t"] + p["b"]
        i = jax.nn.sigmoid(gates[:, 0 * H:1 * H])
        f = jax.nn.sigmoid(gates[:, 1 * H:2 * H])
        g = jnp.tanh(gates[:, 2 * H:3 * H])
        o = jax.nn.sigmoid(gates[:, 3 * H:4 * H])
        c = f * c + i * g
        h = o * jnp.tanh(c)
        return (h, c), h

    init = (jnp.zeros((B, H), jnp.float32), jnp.zeros((B, H), jnp.float32))
    _, hs = lax.scan(step, init, xs)
    if reverse:
        hs = hs[::-1]
    return hs


def ner_forward_ref(params, input_ids, input_mask):
    embs = jnp.take(params["embedding"], input_ids, axis=0)
    x = jnp.transpose(embs, (1, 0, 2))
    mask = jnp.transpose(input_mask.astype(jnp.float32), (1, 0))[:, :, None]
    ones = jnp.ones_like(mask)
    h1 = jnp.concatenate([_lstm_dir_ref(x, mask, params["l0f"], False),
                          _lstm_dir_ref(x, mask, params["l0b"], True)], axis=-1)
    h2 = jnp.concatenate([_lstm_dir_ref(h1, ones, params["l1f"], False),
                          _lstm_dir_ref(h1, ones, params["l1b"], True)], axis=-1)
    seq_out = jnp.transpose(h2, (1, 0, 2))
    mean = jnp.mean(seq_out, axis=-1, keepdims=True)
    var = jnp.mean((seq_out - mean) ** 2, axis=-1, keepdims=True)
    xn = (seq_out - mean) * lax.rsqrt(var + 1e-5)
    y = xn * params["ln_g"][0] + params["ln_b"][0]
    return y @ params["cls_w_t"] + params["cls_b"][0]


# -----------------------------------------------------------------------------
# Main
# -----------------------------------------------------------------------------
if __name__ == "__main__":
    VOCAB = 50
    EMB = 16
    HID = 32
    LABELS = 9          # e.g. BIO scheme with 4 entity types + O
    B, T = 2, 8

    key = jax.random.PRNGKey(0)
    k_params, k_ids = jax.random.split(key)
    params = init_params(k_params, VOCAB, EMB, HID, LABELS)

    input_ids = jax.random.randint(k_ids, (B, T), 0, VOCAB, dtype=jnp.int32)
    lens = jnp.array([T, T - 2], dtype=jnp.int32)
    input_mask = (jnp.arange(T)[None, :] < lens[:, None]).astype(jnp.int32)

    fwd_f32 = jax.jit(lambda p, i, m: ner_forward(p, i, m, compute_dtype=jnp.float32))
    fwd_bf16 = jax.jit(lambda p, i, m: ner_forward(p, i, m, compute_dtype=jnp.bfloat16))

    ref = ner_forward_ref(params, input_ids, input_mask)

    # Strict check on the f32 path.
    feats = jax.block_until_ready(fwd_f32(params, input_ids, input_mask))
    assert feats.shape == (B, T, LABELS), feats.shape
    err_f32 = float(jnp.max(jnp.abs(feats - ref)))
    assert err_f32 < 1e-3, err_f32

    # Loose sanity check on the bf16 fast path (output scale is ~O(1)).
    feats_bf16 = jax.block_until_ready(fwd_bf16(params, input_ids, input_mask))
    assert feats_bf16.shape == (B, T, LABELS), feats_bf16.shape
    assert bool(jnp.all(jnp.isfinite(feats_bf16)))
    err_bf16 = float(jnp.max(jnp.abs(feats_bf16 - ref)))
    assert err_bf16 < 0.3, err_bf16

    print("KERNEL_OK")
</pallas_src>

<mosaic_0001>
module attributes {stable_mosaic.version = 11 : i64} {
  func.func @fused_ner_kernel(%arg0: i32, %arg1: memref<64x16xf32, #tpu.memory_space<vmem>>, %arg2: memref<16x128xf32, #tpu.memory_space<vmem>>, %arg3: memref<16x128xf32, #tpu.memory_space<vmem>>, %arg4: memref<1x128xf32, #tpu.memory_space<vmem>>, %arg5: memref<1x128xf32, #tpu.memory_space<vmem>>, %arg6: memref<64x256xf32, #tpu.memory_space<vmem>>, %arg7: memref<64x128xf32, #tpu.memory_space<vmem>>, %arg8: memref<64x128xf32, #tpu.memory_space<vmem>>, %arg9: memref<1x128xf32, #tpu.memory_space<vmem>>, %arg10: memref<1x128xf32, #tpu.memory_space<vmem>>, %arg11: memref<64x256xf32, #tpu.memory_space<vmem>>, %arg12: memref<1x64xf32, #tpu.memory_space<vmem>>, %arg13: memref<1x64xf32, #tpu.memory_space<vmem>>, %arg14: memref<64x128xf32, #tpu.memory_space<vmem>>, %arg15: memref<1x128xf32, #tpu.memory_space<vmem>>, %arg16: memref<64x128xf32, #tpu.memory_space<vmem>>, %arg17: memref<64x128xf32, #tpu.memory_space<vmem>>, %arg18: memref<64x128xf32, #tpu.memory_space<vmem>>, %arg19: memref<64x64xf32, #tpu.memory_space<vmem>>) attributes {dimension_semantics = [#tpu.dimension_semantics<arbitrary>], iteration_bounds = array<i64: 1>, scalar_prefetch = 0 : i64, scratch_operands = 3 : i64, tpu.core_type = #tpu.core_type<tc>, window_params = [{pipeline_mode = #tpu.pipeline_mode<synchronous>, transform_indices = @transform_0, window_bounds = array<i64: 64, 16>}, {pipeline_mode = #tpu.pipeline_mode<synchronous>, transform_indices = @transform_1, window_bounds = array<i64: 16, 128>}, {pipeline_mode = #tpu.pipeline_mode<synchronous>, transform_indices = @transform_2, window_bounds = array<i64: 16, 128>}, {pipeline_mode = #tpu.pipeline_mode<synchronous>, transform_indices = @transform_3, window_bounds = array<i64: 1, 128>}, {pipeline_mode = #tpu.pipeline_mode<synchronous>, transform_indices = @transform_4, window_bounds = array<i64: 1, 128>}, {pipeline_mode = #tpu.pipeline_mode<synchronous>, transform_indices = @transform_5, window_bounds = array<i64: 64, 256>}, {pipeline_mode = #tpu.pipeline_mode<synchronous>, transform_indices = @transform_6, window_bounds = array<i64: 64, 128>}, {pipeline_mode = #tpu.pipeline_mode<synchronous>, transform_indices = @transform_7, window_bounds = array<i64: 64, 128>}, {pipeline_mode = #tpu.pipeline_mode<synchronous>, transform_indices = @transform_8, window_bounds = array<i64: 1, 128>}, {pipeline_mode = #tpu.pipeline_mode<synchronous>, transform_indices = @transform_9, window_bounds = array<i64: 1, 128>}, {pipeline_mode = #tpu.pipeline_mode<synchronous>, transform_indices = @transform_10, window_bounds = array<i64: 64, 256>}, {pipeline_mode = #tpu.pipeline_mode<synchronous>, transform_indices = @transform_11, window_bounds = array<i64: 1, 64>}, {pipeline_mode = #tpu.pipeline_mode<synchronous>, transform_indices = @transform_12, window_bounds = array<i64: 1, 64>}, {pipeline_mode = #tpu.pipeline_mode<synchronous>, transform_indices = @transform_13, window_bounds = array<i64: 64, 128>}, {pipeline_mode = #tpu.pipeline_mode<synchronous>, transform_indices = @transform_14, window_bounds = array<i64: 1, 128>}, {pipeline_mode = #tpu.pipeline_mode<synchronous>, transform_indices = @transform_15, window_bounds = array<i64: 64, 128>}]} {
    %c0 = arith.constant 0 : index
    %c0_0 = arith.constant 0 : index
    %0 = vector.load %arg1[%c0, %c0_0] : memref<64x16xf32, #tpu.memory_space<vmem>>, vector<64x16xf32>
    %c0_1 = arith.constant 0 : index
    %c0_2 = arith.constant 0 : index
    %1 = vector.load %arg2[%c0_1, %c0_2] : memref<16x128xf32, #tpu.memory_space<vmem>>, vector<16x128xf32>
    %cst = arith.constant dense<0.000000e+00> : vector<64x128xf32>
    %2 = tpu.matmul %0, %1, %cst {dimension_numbers = #tpu.dot_dimension_numbers<[1], [0], [0], [1], [0, 0, 1, 1], [], []>} : vector<64x16xf32>, vector<16x128xf32>, vector<64x128xf32> -> vector<64x128xf32>
    %c0_3 = arith.constant 0 : index
    %c0_4 = arith.constant 0 : index
    %3 = vector.load %arg4[%c0_3, %c0_4] : memref<1x128xf32, #tpu.memory_space<vmem>>, vector<1x128xf32>
    %4 = vector.broadcast %3 : vector<1x128xf32> to vector<64x128xf32>
    %5 = arith.addf %2, %4 : vector<64x128xf32>
    %c0_5 = arith.constant 0 : index
    %c0_6 = arith.constant 0 : index
    %6 = vector.load %arg17[%c0_5, %c0_6] : memref<64x128xf32, #tpu.memory_space<vmem>>, vector<64x128xf32>
    tpu.vector_store %arg17[%c0_5, %c0_6], %5 {strides = array<i32>} : memref<64x128xf32, #tpu.memory_space<vmem>>, vector<64x128xf32>,
    %c0_7 = arith.constant 0 : index
    %c0_8 = arith.constant 0 : index
    %7 = vector.load %arg3[%c0_7, %c0_8] : memref<16x128xf32, #tpu.memory_space<vmem>>, vector<16x128xf32>
    %cst_9 = arith.constant dense<0.000000e+00> : vector<64x128xf32>
    %8 = tpu.matmul %0, %7, %cst_9 {dimension_numbers = #tpu.dot_dimension_numbers<[1], [0], [0], [1], [0, 0, 1, 1], [], []>} : vector<64x16xf32>, vector<16x128xf32>, vector<64x128xf32> -> vector<64x128xf32>
    %c0_10 = arith.constant 0 : index
    %c0_11 = arith.constant 0 : index
    %9 = vector.load %arg5[%c0_10, %c0_11] : memref<1x128xf32, #tpu.memory_space<vmem>>, vector<1x128xf32>
    %10 = vector.broadcast %9 : vector<1x128xf32> to vector<64x128xf32>
    %11 = arith.addf %8, %10 : vector<64x128xf32>
    %c0_12 = arith.constant 0 : index
    %c0_13 = arith.constant 0 : index
    %12 = vector.load %arg18[%c0_12, %c0_13] : memref<64x128xf32, #tpu.memory_space<vmem>>, vector<64x128xf32>
    tpu.vector_store %arg18[%c0_12, %c0_13], %11 {strides = array<i32>} : memref<64x128xf32, #tpu.memory_space<vmem>>, vector<64x128xf32>,
    %c0_14 = arith.constant 0 : index
    %c0_15 = arith.constant 0 : index
    %13 = vector.load %arg6[%c0_14, %c0_15] : memref<64x256xf32, #tpu.memory_space<vmem>>, vector<64x256xf32>
    %cst_16 = arith.constant 0.000000e+00 : f32
    %14 = vector.broadcast %cst_16 : f32 to vector<8x32xf32>
    %c0_i32 = arith.constant 0 : i32
    %c8_i32 = arith.constant 8 : i32
    %15 = arith.muli %c0_i32, %c8_i32 : i32
    %16 = tpu.assume_multiple %15, 8 : i32
    %c7_i32 = arith.constant 7 : i32
    %17 = arith.subi %c7_i32, %c0_i32 : i32
    %c8_i32_17 = arith.constant 8 : i32
    %18 = arith.muli %17, %c8_i32_17 : i32
    %19 = tpu.assume_multiple %18, 8 : i32
    %20 = arith.index_cast %16 : i32 to index
    %c0_18 = arith.constant 0 : index
    %21 = vector.load %arg17[%20, %c0_18] : memref<64x128xf32, #tpu.memory_space<vmem>>, vector<8x128xf32>
    %22 = arith.index_cast %19 : i32 to index
    %c0_19 = arith.constant 0 : index
    %23 = vector.load %arg18[%22, %c0_19] : memref<64x128xf32, #tpu.memory_space<vmem>>, vector<8x128xf32>
    %24 = tpu.concatenate %21, %23 in 1 : vector<8x128xf32>, vector<8x128xf32> -> vector<8x256xf32>
    %25 = tpu.concatenate %14, %14 in 1 : vector<8x32xf32>, vector<8x32xf32> -> vector<8x64xf32>
    %cst_20 = arith.constant dense<0.000000e+00> : vector<8x256xf32>
    %26 = tpu.matmul %25, %13, %cst_20 {dimension_numbers = #tpu.dot_dimension_numbers<[1], [0], [0], [1], [0, 0, 1, 1], [], []>} : vector<8x64xf32>, vector<64x256xf32>, vector<8x256xf32> -> vector<8x256xf32>
    %27 = arith.addf %24, %26 : vector<8x256xf32>
    %28 = arith.negf %27 : vector<8x256xf32>
    %29 = math.exp %28 : vector<8x256xf32>
    %cst_21 = arith.constant 1.000000e+00 : f32
    %30 = vector.broadcast %cst_21 : f32 to vector<8x256xf32>
    %31 = arith.addf %30, %29 : vector<8x256xf32>
    %32 = arith.divf %30, %31 : vector<8x256xf32>
    %33 = vector.extract_strided_slice %27 {offsets = [0, 64], sizes = [8, 32], strides = [1, 1]} : vector<8x256xf32> to vector<8x32xf32>
    %34 = math.tanh %33 : vector<8x32xf32>
    %35 = vector.extract_strided_slice %27 {offsets = [0, 192], sizes = [8, 32], strides = [1, 1]} : vector<8x256xf32> to vector<8x32xf32>
    %36 = math.tanh %35 : vector<8x32xf32>
    %37 = vector.extract_strided_slice %32 {offsets = [0, 32], sizes = [8, 32], strides = [1, 1]} : vector<8x256xf32> to vector<8x32xf32>
    %38 = arith.mulf %37, %14 : vector<8x32xf32>
    %39 = vector.extract_strided_slice %32 {offsets = [0, 0], sizes = [8, 32], strides = [1, 1]} : vector<8x256xf32> to vector<8x32xf32>
    %40 = arith.mulf %39, %34 : vector<8x32xf32>
    %41 = arith.addf %38, %40 : vector<8x32xf32>
    %42 = vector.extract_strided_slice %32 {offsets = [0, 160], sizes = [8, 32], strides = [1, 1]} : vector<8x256xf32> to vector<8x32xf32>
    %43 = arith.mulf %42, %14 : vector<8x32xf32>
    %44 = vector.extract_strided_slice %32 {offsets = [0, 128], sizes = [8, 32], strides = [1, 1]} : vector<8x256xf32> to vector<8x32xf32>
    %45 = arith.mulf %44, %36 : vector<8x32xf32>
    %46 = arith.addf %43, %45 : vector<8x32xf32>
    %47 = vector.extract_strided_slice %32 {offsets = [0, 96], sizes = [8, 32], strides = [1, 1]} : vector<8x256xf32> to vector<8x32xf32>
    %48 = math.tanh %41 : vector<8x32xf32>
    %49 = arith.mulf %47, %48 : vector<8x32xf32>
    %50 = vector.extract_strided_slice %32 {offsets = [0, 224], sizes = [8, 32], strides = [1, 1]} : vector<8x256xf32> to vector<8x32xf32>
    %51 = math.tanh %46 : vector<8x32xf32>
    %52 = arith.mulf %50, %51 : vector<8x32xf32>
    %53 = arith.index_cast %16 : i32 to index
    %c0_22 = arith.constant 0 : index
    %54 = vector.load %arg19[%53, %c0_22] : memref<64x64xf32, #tpu.memory_space<vmem>>, vector<8x32xf32>
    tpu.vector_store %arg19[%53, %c0_22], %49 {strides = array<i32>} : memref<64x64xf32, #tpu.memory_space<vmem>>, vector<8x32xf32>,
    %55 = arith.index_cast %19 : i32 to index
    %c32 = arith.constant 32 : index
    %56 = vector.load %arg19[%55, %c32] : memref<64x64xf32, #tpu.memory_space<vmem>>, vector<8x32xf32>
    tpu.vector_store %arg19[%55, %c32], %52 {strides = array<i32>} : memref<64x64xf32, #tpu.memory_space<vmem>>, vector<8x32xf32>,
    %c1_i32 = arith.constant 1 : i32
    %c8_i32_23 = arith.constant 8 : i32
    %57 = arith.muli %c1_i32, %c8_i32_23 : i32
    %58 = tpu.assume_multiple %57, 8 : i32
    %c7_i32_24 = arith.constant 7 : i32
    %59 = arith.subi %c7_i32_24, %c1_i32 : i32
    %c8_i32_25 = arith.constant 8 : i32
    %60 = arith.muli %59, %c8_i32_25 : i32
    %61 = tpu.assume_multiple %60, 8 : i32
    %62 = arith.index_cast %58 : i32 to index
    %c0_26 = arith.constant 0 : index
    %63 = vector.load %arg17[%62, %c0_26] : memref<64x128xf32, #tpu.memory_space<vmem>>, vector<8x128xf32>
    %64 = arith.index_cast %61 : i32 to index
    %c0_27 = arith.constant 0 : index
    %65 = vector.load %arg18[%64, %c0_27] : memref<64x128xf32, #tpu.memory_space<vmem>>, vector<8x128xf32>
    %66 = tpu.concatenate %63, %65 in 1 : vector<8x128xf32>, vector<8x128xf32> -> vector<8x256xf32>
    %67 = tpu.concatenate %49, %52 in 1 : vector<8x32xf32>, vector<8x32xf32> -> vector<8x64xf32>
    %cst_28 = arith.constant dense<0.000000e+00> : vector<8x256xf32>
    %68 = tpu.matmul %67, %13, %cst_28 {dimension_numbers = #tpu.dot_dimension_numbers<[1], [0], [0], [1], [0, 0, 1, 1], [], []>} : vector<8x64xf32>, vector<64x256xf32>, vector<8x256xf32> -> vector<8x256xf32>
    %69 = arith.addf %66, %68 : vector<8x256xf32>
    %70 = arith.negf %69 : vector<8x256xf32>
    %71 = math.exp %70 : vector<8x256xf32>
    %cst_29 = arith.constant 1.000000e+00 : f32
    %72 = vector.broadcast %cst_29 : f32 to vector<8x256xf32>
    %73 = arith.addf %72, %71 : vector<8x256xf32>
    %74 = arith.divf %72, %73 : vector<8x256xf32>
    %75 = vector.extract_strided_slice %69 {offsets = [0, 64], sizes = [8, 32], strides = [1, 1]} : vector<8x256xf32> to vector<8x32xf32>
    %76 = math.tanh %75 : vector<8x32xf32>
    %77 = vector.extract_strided_slice %69 {offsets = [0, 192], sizes = [8, 32], strides = [1, 1]} : vector<8x256xf32> to vector<8x32xf32>
    %78 = math.tanh %77 : vector<8x32xf32>
    %79 = vector.extract_strided_slice %74 {offsets = [0, 32], sizes = [8, 32], strides = [1, 1]} : vector<8x256xf32> to vector<8x32xf32>
    %80 = arith.mulf %79, %41 : vector<8x32xf32>
    %81 = vector.extract_strided_slice %74 {offsets = [0, 0], sizes = [8, 32], strides = [1, 1]} : vector<8x256xf32> to vector<8x32xf32>
    %82 = arith.mulf %81, %76 : vector<8x32xf32>
    %83 = arith.addf %80, %82 : vector<8x32xf32>
    %84 = vector.extract_strided_slice %74 {offsets = [0, 160], sizes = [8, 32], strides = [1, 1]} : vector<8x256xf32> to vector<8x32xf32>
    %85 = arith.mulf %84, %46 : vector<8x32xf32>
    %86 = vector.extract_strided_slice %74 {offsets = [0, 128], sizes = [8, 32], strides = [1, 1]} : vector<8x256xf32> to vector<8x32xf32>
    %87 = arith.mulf %86, %78 : vector<8x32xf32>
    %88 = arith.addf %85, %87 : vector<8x32xf32>
    %89 = vector.extract_strided_slice %74 {offsets = [0, 96], sizes = [8, 32], strides = [1, 1]} : vector<8x256xf32> to vector<8x32xf32>
    %90 = math.tanh %83 : vector<8x32xf32>
    %91 = arith.mulf %89, %90 : vector<8x32xf32>
    %92 = vector.extract_strided_slice %74 {offsets = [0, 224], sizes = [8, 32], strides = [1, 1]} : vector<8x256xf32> to vector<8x32xf32>
    %93 = math.tanh %88 : vector<8x32xf32>
    %94 = arith.mulf %92, %93 : vector<8x32xf32>
    %95 = arith.index_cast %58 : i32 to index
    %c0_30 = arith.constant 0 : index
    %96 = vector.load %arg19[%95, %c0_30] : memref<64x64xf32, #tpu.memory_space<vmem>>, vector<8x32xf32>
    tpu.vector_store %arg19[%95, %c0_30], %91 {strides = array<i32>} : memref<64x64xf32, #tpu.memory_space<vmem>>, vector<8x32xf32>,
    %97 = arith.index_cast %61 : i32 to index
    %c32_31 = arith.constant 32 : index
    %98 = vector.load %arg19[%97, %c32_31] : memref<64x64xf32, #tpu.memory_space<vmem>>, vector<8x32xf32>
    tpu.vector_store %arg19[%97, %c32_31], %94 {strides = array<i32>} : memref<64x64xf32, #tpu.memory_space<vmem>>, vector<8x32xf32>,
    %c2_i32 = arith.constant 2 : i32
    %c8_i32_32 = arith.constant 8 : i32
    %99 = arith.muli %c2_i32, %c8_i32_32 : i32
    %100 = tpu.assume_multiple %99, 8 : i32
    %c7_i32_33 = arith.constant 7 : i32
    %101 = arith.subi %c7_i32_33, %c2_i32 : i32
    %c8_i32_34 = arith.constant 8 : i32
    %102 = arith.muli %101, %c8_i32_34 : i32
    %103 = tpu.assume_multiple %102, 8 : i32
    %104 = arith.index_cast %100 : i32 to index
    %c0_35 = arith.constant 0 : index
    %105 = vector.load %arg17[%104, %c0_35] : memref<64x128xf32, #tpu.memory_space<vmem>>, vector<8x128xf32>
    %106 = arith.index_cast %103 : i32 to index
    %c0_36 = arith.constant 0 : index
    %107 = vector.load %arg18[%106, %c0_36] : memref<64x128xf32, #tpu.memory_space<vmem>>, vector<8x128xf32>
    %108 = tpu.concatenate %105, %107 in 1 : vector<8x128xf32>, vector<8x128xf32> -> vector<8x256xf32>
    %109 = tpu.concatenate %91, %94 in 1 : vector<8x32xf32>, vector<8x32xf32> -> vector<8x64xf32>
    %cst_37 = arith.constant dense<0.000000e+00> : vector<8x256xf32>
    %110 = tpu.matmul %109, %13, %cst_37 {dimension_numbers = #tpu.dot_dimension_numbers<[1], [0], [0], [1], [0, 0, 1, 1], [], []>} : vector<8x64xf32>, vector<64x256xf32>, vector<8x256xf32> -> vector<8x256xf32>
    %111 = arith.addf %108, %110 : vector<8x256xf32>
    %112 = arith.negf %111 : vector<8x256xf32>
    %113 = math.exp %112 : vector<8x256xf32>
    %cst_38 = arith.constant 1.000000e+00 : f32
    %114 = vector.broadcast %cst_38 : f32 to vector<8x256xf32>
    %115 = arith.addf %114, %113 : vector<8x256xf32>
    %116 = arith.divf %114, %115 : vector<8x256xf32>
    %117 = vector.extract_strided_slice %111 {offsets = [0, 64], sizes = [8, 32], strides = [1, 1]} : vector<8x256xf32> to vector<8x32xf32>
    %118 = math.tanh %117 : vector<8x32xf32>
    %119 = vector.extract_strided_slice %111 {offsets = [0, 192], sizes = [8, 32], strides = [1, 1]} : vector<8x256xf32> to vector<8x32xf32>
    %120 = math.tanh %119 : vector<8x32xf32>
    %121 = vector.extract_strided_slice %116 {offsets = [0, 32], sizes = [8, 32], strides = [1, 1]} : vector<8x256xf32> to vector<8x32xf32>
    %122 = arith.mulf %121, %83 : vector<8x32xf32>
    %123 = vector.extract_strided_slice %116 {offsets = [0, 0], sizes = [8, 32], strides = [1, 1]} : vector<8x256xf32> to vector<8x32xf32>
    %124 = arith.mulf %123, %118 : vector<8x32xf32>
    %125 = arith.addf %122, %124 : vector<8x32xf32>
    %126 = vector.extract_strided_slice %116 {offsets = [0, 160], sizes = [8, 32], strides = [1, 1]} : vector<8x256xf32> to vector<8x32xf32>
    %127 = arith.mulf %126, %88 : vector<8x32xf32>
    %128 = vector.extract_strided_slice %116 {offsets = [0, 128], sizes = [8, 32], strides = [1, 1]} : vector<8x256xf32> to vector<8x32xf32>
    %129 = arith.mulf %128, %120 : vector<8x32xf32>
    %130 = arith.addf %127, %129 : vector<8x32xf32>
    %131 = vector.extract_strided_slice %116 {offsets = [0, 96], sizes = [8, 32], strides = [1, 1]} : vector<8x256xf32> to vector<8x32xf32>
    %132 = math.tanh %125 : vector<8x32xf32>
    %133 = arith.mulf %131, %132 : vector<8x32xf32>
    %134 = vector.extract_strided_slice %116 {offsets = [0, 224], sizes = [8, 32], strides = [1, 1]} : vector<8x256xf32> to vector<8x32xf32>
    %135 = math.tanh %130 : vector<8x32xf32>
    %136 = arith.mulf %134, %135 : vector<8x32xf32>
    %137 = arith.index_cast %100 : i32 to index
    %c0_39 = arith.constant 0 : index
    %138 = vector.load %arg19[%137, %c0_39] : memref<64x64xf32, #tpu.memory_space<vmem>>, vector<8x32xf32>
    tpu.vector_store %arg19[%137, %c0_39], %133 {strides = array<i32>} : memref<64x64xf32, #tpu.memory_space<vmem>>, vector<8x32xf32>,
    %139 = arith.index_cast %103 : i32 to index
    %c32_40 = arith.constant 32 : index
    %140 = vector.load %arg19[%139, %c32_40] : memref<64x64xf32, #tpu.memory_space<vmem>>, vector<8x32xf32>
    tpu.vector_store %arg19[%139, %c32_40], %136 {strides = array<i32>} : memref<64x64xf32, #tpu.memory_space<vmem>>, vector<8x32xf32>,
    %c3_i32 = arith.constant 3 : i32
    %c8_i32_41 = arith.constant 8 : i32
    %141 = arith.muli %c3_i32, %c8_i32_41 : i32
    %142 = tpu.assume_multiple %141, 8 : i32
    %c7_i32_42 = arith.constant 7 : i32
    %143 = arith.subi %c7_i32_42, %c3_i32 : i32
    %c8_i32_43 = arith.constant 8 : i32
    %144 = arith.muli %143, %c8_i32_43 : i32
    %145 = tpu.assume_multiple %144, 8 : i32
    %146 = arith.index_cast %142 : i32 to index
    %c0_44 = arith.constant 0 : index
    %147 = vector.load %arg17[%146, %c0_44] : memref<64x128xf32, #tpu.memory_space<vmem>>, vector<8x128xf32>
    %148 = arith.index_cast %145 : i32 to index
    %c0_45 = arith.constant 0 : index
    %149 = vector.load %arg18[%148, %c0_45] : memref<64x128xf32, #tpu.memory_space<vmem>>, vector<8x128xf32>
    %150 = tpu.concatenate %147, %149 in 1 : vector<8x128xf32>, vector<8x128xf32> -> vector<8x256xf32>
    %151 = tpu.concatenate %133, %136 in 1 : vector<8x32xf32>, vector<8x32xf32> -> vector<8x64xf32>
    %cst_46 = arith.constant dense<0.000000e+00> : vector<8x256xf32>
    %152 = tpu.matmul %151, %13, %cst_46 {dimension_numbers = #tpu.dot_dimension_numbers<[1], [0], [0], [1], [0, 0, 1, 1], [], []>} : vector<8x64xf32>, vector<64x256xf32>, vector<8x256xf32> -> vector<8x256xf32>
    %153 = arith.addf %150, %152 : vector<8x256xf32>
    %154 = arith.negf %153 : vector<8x256xf32>
    %155 = math.exp %154 : vector<8x256xf32>
    %cst_47 = arith.constant 1.000000e+00 : f32
    %156 = vector.broadcast %cst_47 : f32 to vector<8x256xf32>
    %157 = arith.addf %156, %155 : vector<8x256xf32>
    %158 = arith.divf %156, %157 : vector<8x256xf32>
    %159 = vector.extract_strided_slice %153 {offsets = [0, 64], sizes = [8, 32], strides = [1, 1]} : vector<8x256xf32> to vector<8x32xf32>
    %160 = math.tanh %159 : vector<8x32xf32>
    %161 = vector.extract_strided_slice %153 {offsets = [0, 192], sizes = [8, 32], strides = [1, 1]} : vector<8x256xf32> to vector<8x32xf32>
    %162 = math.tanh %161 : vector<8x32xf32>
    %163 = vector.extract_strided_slice %158 {offsets = [0, 32], sizes = [8, 32], strides = [1, 1]} : vector<8x256xf32> to vector<8x32xf32>
    %164 = arith.mulf %163, %125 : vector<8x32xf32>
    %165 = vector.extract_strided_slice %158 {offsets = [0, 0], sizes = [8, 32], strides = [1, 1]} : vector<8x256xf32> to vector<8x32xf32>
    %166 = arith.mulf %165, %160 : vector<8x32xf32>
    %167 = arith.addf %164, %166 : vector<8x32xf32>
    %168 = vector.extract_strided_slice %158 {offsets = [0, 160], sizes = [8, 32], strides = [1, 1]} : vector<8x256xf32> to vector<8x32xf32>
    %169 = arith.mulf %168, %130 : vector<8x32xf32>
    %170 = vector.extract_strided_slice %158 {offsets = [0, 128], sizes = [8, 32], strides = [1, 1]} : vector<8x256xf32> to vector<8x32xf32>
    %171 = arith.mulf %170, %162 : vector<8x32xf32>
    %172 = arith.addf %169, %171 : vector<8x32xf32>
    %173 = vector.extract_strided_slice %158 {offsets = [0, 96], sizes = [8, 32], strides = [1, 1]} : vector<8x256xf32> to vector<8x32xf32>
    %174 = math.tanh %167 : vector<8x32xf32>
    %175 = arith.mulf %173, %174 : vector<8x32xf32>
    %176 = vector.extract_strided_slice %158 {offsets = [0, 224], sizes = [8, 32], strides = [1, 1]} : vector<8x256xf32> to vector<8x32xf32>
    %177 = math.tanh %172 : vector<8x32xf32>
    %178 = arith.mulf %176, %177 : vector<8x32xf32>
    %179 = arith.index_cast %142 : i32 to index
    %c0_48 = arith.constant 0 : index
    %180 = vector.load %arg19[%179, %c0_48] : memref<64x64xf32, #tpu.memory_space<vmem>>, vector<8x32xf32>
    tpu.vector_store %arg19[%179, %c0_48], %175 {strides = array<i32>} : memref<64x64xf32, #tpu.memory_space<vmem>>, vector<8x32xf32>,
    %181 = arith.index_cast %145 : i32 to index
    %c32_49 = arith.constant 32 : index
    %182 = vector.load %arg19[%181, %c32_49] : memref<64x64xf32, #tpu.memory_space<vmem>>, vector<8x32xf32>
    tpu.vector_store %arg19[%181, %c32_49], %178 {strides = array<i32>} : memref<64x64xf32, #tpu.memory_space<vmem>>, vector<8x32xf32>,
    %c4_i32 = arith.constant 4 : i32
    %c8_i32_50 = arith.constant 8 : i32
    %183 = arith.muli %c4_i32, %c8_i32_50 : i32
    %184 = tpu.assume_multiple %183, 8 : i32
    %c7_i32_51 = arith.constant 7 : i32
    %185 = arith.subi %c7_i32_51, %c4_i32 : i32
    %c8_i32_52 = arith.constant 8 : i32
    %186 = arith.muli %185, %c8_i32_52 : i32
    %187 = tpu.assume_multiple %186, 8 : i32
    %188 = arith.index_cast %184 : i32 to index
    %c0_53 = arith.constant 0 : index
    %189 = vector.load %arg17[%188, %c0_53] : memref<64x128xf32, #tpu.memory_space<vmem>>, vector<8x128xf32>
    %190 = arith.index_cast %187 : i32 to index
    %c0_54 = arith.constant 0 : index
    %191 = vector.load %arg18[%190, %c0_54] : memref<64x128xf32, #tpu.memory_space<vmem>>, vector<8x128xf32>
    %192 = tpu.concatenate %189, %191 in 1 : vector<8x128xf32>, vector<8x128xf32> -> vector<8x256xf32>
    %193 = tpu.concatenate %175, %178 in 1 : vector<8x32xf32>, vector<8x32xf32> -> vector<8x64xf32>
    %cst_55 = arith.constant dense<0.000000e+00> : vector<8x256xf32>
    %194 = tpu.matmul %193, %13, %cst_55 {dimension_numbers = #tpu.dot_dimension_numbers<[1], [0], [0], [1], [0, 0, 1, 1], [], []>} : vector<8x64xf32>, vector<64x256xf32>, vector<8x256xf32> -> vector<8x256xf32>
    %195 = arith.addf %192, %194 : vector<8x256xf32>
    %196 = arith.negf %195 : vector<8x256xf32>
    %197 = math.exp %196 : vector<8x256xf32>
    %cst_56 = arith.constant 1.000000e+00 : f32
    %198 = vector.broadcast %cst_56 : f32 to vector<8x256xf32>
    %199 = arith.addf %198, %197 : vector<8x256xf32>
    %200 = arith.divf %198, %199 : vector<8x256xf32>
    %201 = vector.extract_strided_slice %195 {offsets = [0, 64], sizes = [8, 32], strides = [1, 1]} : vector<8x256xf32> to vector<8x32xf32>
    %202 = math.tanh %201 : vector<8x32xf32>
    %203 = vector.extract_strided_slice %195 {offsets = [0, 192], sizes = [8, 32], strides = [1, 1]} : vector<8x256xf32> to vector<8x32xf32>
    %204 = math.tanh %203 : vector<8x32xf32>
    %205 = vector.extract_strided_slice %200 {offsets = [0, 32], sizes = [8, 32], strides = [1, 1]} : vector<8x256xf32> to vector<8x32xf32>
    %206 = arith.mulf %205, %167 : vector<8x32xf32>
    %207 = vector.extract_strided_slice %200 {offsets = [0, 0], sizes = [8, 32], strides = [1, 1]} : vector<8x256xf32> to vector<8x32xf32>
    %208 = arith.mulf %207, %202 : vector<8x32xf32>
    %209 = arith.addf %206, %208 : vector<8x32xf32>
    %210 = vector.extract_strided_slice %200 {offsets = [0, 160], sizes = [8, 32], strides = [1, 1]} : vector<8x256xf32> to vector<8x32xf32>
    %211 = arith.mulf %210, %172 : vector<8x32xf32>
    %212 = vector.extract_strided_slice %200 {offsets = [0, 128], sizes = [8, 32], strides = [1, 1]} : vector<8x256xf32> to vector<8x32xf32>
    %213 = arith.mulf %212, %204 : vector<8x32xf32>
    %214 = arith.addf %211, %213 : vector<8x32xf32>
    %215 = vector.extract_strided_slice %200 {offsets = [0, 96], sizes = [8, 32], strides = [1, 1]} : vector<8x256xf32> to vector<8x32xf32>
    %216 = math.tanh %209 : vector<8x32xf32>
    %217 = arith.mulf %215, %216 : vector<8x32xf32>
    %218 = vector.extract_strided_slice %200 {offsets = [0, 224], sizes = [8, 32], strides = [1, 1]} : vector<8x256xf32> to vector<8x32xf32>
    %219 = math.tanh %214 : vector<8x32xf32>
    %220 = arith.mulf %218, %219 : vector<8x32xf32>
    %221 = arith.index_cast %184 : i32 to index
    %c0_57 = arith.constant 0 : index
    %222 = vector.load %arg19[%221, %c0_57] : memref<64x64xf32, #tpu.memory_space<vmem>>, vector<8x32xf32>
    tpu.vector_store %arg19[%221, %c0_57], %217 {strides = array<i32>} : memref<64x64xf32, #tpu.memory_space<vmem>>, vector<8x32xf32>,
    %223 = arith.index_cast %187 : i32 to index
    %c32_58 = arith.constant 32 : index
    %224 = vector.load %arg19[%223, %c32_58] : memref<64x64xf32, #tpu.memory_space<vmem>>, vector<8x32xf32>
    tpu.vector_store %arg19[%223, %c32_58], %220 {strides = array<i32>} : memref<64x64xf32, #tpu.memory_space<vmem>>, vector<8x32xf32>,
    %c5_i32 = arith.constant 5 : i32
    %c8_i32_59 = arith.constant 8 : i32
    %225 = arith.muli %c5_i32, %c8_i32_59 : i32
    %226 = tpu.assume_multiple %225, 8 : i32
    %c7_i32_60 = arith.constant 7 : i32
    %227 = arith.subi %c7_i32_60, %c5_i32 : i32
    %c8_i32_61 = arith.constant 8 : i32
    %228 = arith.muli %227, %c8_i32_61 : i32
    %229 = tpu.assume_multiple %228, 8 : i32
    %230 = arith.index_cast %226 : i32 to index
    %c0_62 = arith.constant 0 : index
    %231 = vector.load %arg17[%230, %c0_62] : memref<64x128xf32, #tpu.memory_space<vmem>>, vector<8x128xf32>
    %232 = arith.index_cast %229 : i32 to index
    %c0_63 = arith.constant 0 : index
    %233 = vector.load %arg18[%232, %c0_63] : memref<64x128xf32, #tpu.memory_space<vmem>>, vector<8x128xf32>
    %234 = tpu.concatenate %231, %233 in 1 : vector<8x128xf32>, vector<8x128xf32> -> vector<8x256xf32>
    %235 = tpu.concatenate %217, %220 in 1 : vector<8x32xf32>, vector<8x32xf32> -> vector<8x64xf32>
    %cst_64 = arith.constant dense<0.000000e+00> : vector<8x256xf32>
    %236 = tpu.matmul %235, %13, %cst_64 {dimension_numbers = #tpu.dot_dimension_numbers<[1], [0], [0], [1], [0, 0, 1, 1], [], []>} : vector<8x64xf32>, vector<64x256xf32>, vector<8x256xf32> -> vector<8x256xf32>
    %237 = arith.addf %234, %236 : vector<8x256xf32>
    %238 = arith.negf %237 : vector<8x256xf32>
    %239 = math.exp %238 : vector<8x256xf32>
    %cst_65 = arith.constant 1.000000e+00 : f32
    %240 = vector.broadcast %cst_65 : f32 to vector<8x256xf32>
    %241 = arith.addf %240, %239 : vector<8x256xf32>
    %242 = arith.divf %240, %241 : vector<8x256xf32>
    %243 = vector.extract_strided_slice %237 {offsets = [0, 64], sizes = [8, 32], strides = [1, 1]} : vector<8x256xf32> to vector<8x32xf32>
    %244 = math.tanh %243 : vector<8x32xf32>
    %245 = vector.extract_strided_slice %237 {offsets = [0, 192], sizes = [8, 32], strides = [1, 1]} : vector<8x256xf32> to vector<8x32xf32>
    %246 = math.tanh %245 : vector<8x32xf32>
    %247 = vector.extract_strided_slice %242 {offsets = [0, 32], sizes = [8, 32], strides = [1, 1]} : vector<8x256xf32> to vector<8x32xf32>
    %248 = arith.mulf %247, %209 : vector<8x32xf32>
    %249 = vector.extract_strided_slice %242 {offsets = [0, 0], sizes = [8, 32], strides = [1, 1]} : vector<8x256xf32> to vector<8x32xf32>
    %250 = arith.mulf %249, %244 : vector<8x32xf32>
    %251 = arith.addf %248, %250 : vector<8x32xf32>
    %252 = vector.extract_strided_slice %242 {offsets = [0, 160], sizes = [8, 32], strides = [1, 1]} : vector<8x256xf32> to vector<8x32xf32>
    %253 = arith.mulf %252, %214 : vector<8x32xf32>
    %254 = vector.extract_strided_slice %242 {offsets = [0, 128], sizes = [8, 32], strides = [1, 1]} : vector<8x256xf32> to vector<8x32xf32>
    %255 = arith.mulf %254, %246 : vector<8x32xf32>
    %256 = arith.addf %253, %255 : vector<8x32xf32>
    %257 = vector.extract_strided_slice %242 {offsets = [0, 96], sizes = [8, 32], strides = [1, 1]} : vector<8x256xf32> to vector<8x32xf32>
    %258 = math.tanh %251 : vector<8x32xf32>
    %259 = arith.mulf %257, %258 : vector<8x32xf32>
    %260 = vector.extract_strided_slice %242 {offsets = [0, 224], sizes = [8, 32], strides = [1, 1]} : vector<8x256xf32> to vector<8x32xf32>
    %261 = math.tanh %256 : vector<8x32xf32>
    %262 = arith.mulf %260, %261 : vector<8x32xf32>
    %263 = arith.index_cast %226 : i32 to index
    %c0_66 = arith.constant 0 : index
    %264 = vector.load %arg19[%263, %c0_66] : memref<64x64xf32, #tpu.memory_space<vmem>>, vector<8x32xf32>
    tpu.vector_store %arg19[%263, %c0_66], %259 {strides = array<i32>} : memref<64x64xf32, #tpu.memory_space<vmem>>, vector<8x32xf32>,
    %265 = arith.index_cast %229 : i32 to index
    %c32_67 = arith.constant 32 : index
    %266 = vector.load %arg19[%265, %c32_67] : memref<64x64xf32, #tpu.memory_space<vmem>>, vector<8x32xf32>
    tpu.vector_store %arg19[%265, %c32_67], %262 {strides = array<i32>} : memref<64x64xf32, #tpu.memory_space<vmem>>, vector<8x32xf32>,
    %c6_i32 = arith.constant 6 : i32
    %c8_i32_68 = arith.constant 8 : i32
    %267 = arith.muli %c6_i32, %c8_i32_68 : i32
    %268 = tpu.assume_multiple %267, 8 : i32
    %c7_i32_69 = arith.constant 7 : i32
    %269 = arith.subi %c7_i32_69, %c6_i32 : i32
    %c8_i32_70 = arith.constant 8 : i32
    %270 = arith.muli %269, %c8_i32_70 : i32
    %271 = tpu.assume_multiple %270, 8 : i32
    %272 = arith.index_cast %268 : i32 to index
    %c0_71 = arith.constant 0 : index
    %273 = vector.load %arg17[%272, %c0_71] : memref<64x128xf32, #tpu.memory_space<vmem>>, vector<8x128xf32>
    %274 = arith.index_cast %271 : i32 to index
    %c0_72 = arith.constant 0 : index
    %275 = vector.load %arg18[%274, %c0_72] : memref<64x128xf32, #tpu.memory_space<vmem>>, vector<8x128xf32>
    %276 = tpu.concatenate %273, %275 in 1 : vector<8x128xf32>, vector<8x128xf32> -> vector<8x256xf32>
    %277 = tpu.concatenate %259, %262 in 1 : vector<8x32xf32>, vector<8x32xf32> -> vector<8x64xf32>
    %cst_73 = arith.constant dense<0.000000e+00> : vector<8x256xf32>
    %278 = tpu.matmul %277, %13, %cst_73 {dimension_numbers = #tpu.dot_dimension_numbers<[1], [0], [0], [1], [0, 0, 1, 1], [], []>} : vector<8x64xf32>, vector<64x256xf32>, vector<8x256xf32> -> vector<8x256xf32>
    %279 = arith.addf %276, %278 : vector<8x256xf32>
    %280 = arith.negf %279 : vector<8x256xf32>
    %281 = math.exp %280 : vector<8x256xf32>
    %cst_74 = arith.constant 1.000000e+00 : f32
    %282 = vector.broadcast %cst_74 : f32 to vector<8x256xf32>
    %283 = arith.addf %282, %281 : vector<8x256xf32>
    %284 = arith.divf %282, %283 : vector<8x256xf32>
    %285 = vector.extract_strided_slice %279 {offsets = [0, 64], sizes = [8, 32], strides = [1, 1]} : vector<8x256xf32> to vector<8x32xf32>
    %286 = math.tanh %285 : vector<8x32xf32>
    %287 = vector.extract_strided_slice %279 {offsets = [0, 192], sizes = [8, 32], strides = [1, 1]} : vector<8x256xf32> to vector<8x32xf32>
    %288 = math.tanh %287 : vector<8x32xf32>
    %289 = vector.extract_strided_slice %284 {offsets = [0, 32], sizes = [8, 32], strides = [1, 1]} : vector<8x256xf32> to vector<8x32xf32>
    %290 = arith.mulf %289, %251 : vector<8x32xf32>
    %291 = vector.extract_strided_slice %284 {offsets = [0, 0], sizes = [8, 32], strides = [1, 1]} : vector<8x256xf32> to vector<8x32xf32>
    %292 = arith.mulf %291, %286 : vector<8x32xf32>
    %293 = arith.addf %290, %292 : vector<8x32xf32>
    %294 = vector.extract_strided_slice %284 {offsets = [0, 160], sizes = [8, 32], strides = [1, 1]} : vector<8x256xf32> to vector<8x32xf32>
    %295 = arith.mulf %294, %256 : vector<8x32xf32>
    %296 = vector.extract_strided_slice %284 {offsets = [0, 128], sizes = [8, 32], strides = [1, 1]} : vector<8x256xf32> to vector<8x32xf32>
    %297 = arith.mulf %296, %288 : vector<8x32xf32>
    %298 = arith.addf %295, %297 : vector<8x32xf32>
    %299 = vector.extract_strided_slice %284 {offsets = [0, 96], sizes = [8, 32], strides = [1, 1]} : vector<8x256xf32> to vector<8x32xf32>
    %300 = math.tanh %293 : vector<8x32xf32>
    %301 = arith.mulf %299, %300 : vector<8x32xf32>
    %302 = vector.extract_strided_slice %284 {offsets = [0, 224], sizes = [8, 32], strides = [1, 1]} : vector<8x256xf32> to vector<8x32xf32>
    %303 = math.tanh %298 : vector<8x32xf32>
    %304 = arith.mulf %302, %303 : vector<8x32xf32>
    %305 = arith.index_cast %268 : i32 to index
    %c0_75 = arith.constant 0 : index
    %306 = vector.load %arg19[%305, %c0_75] : memref<64x64xf32, #tpu.memory_space<vmem>>, vector<8x32xf32>
    tpu.vector_store %arg19[%305, %c0_75], %301 {strides = array<i32>} : memref<64x64xf32, #tpu.memory_space<vmem>>, vector<8x32xf32>,
    %307 = arith.index_cast %271 : i32 to index
    %c32_76 = arith.constant 32 : index
    %308 = vector.load %arg19[%307, %c32_76] : memref<64x64xf32, #tpu.memory_space<vmem>>, vector<8x32xf32>
    tpu.vector_store %arg19[%307, %c32_76], %304 {strides = array<i32>} : memref<64x64xf32, #tpu.memory_space<vmem>>, vector<8x32xf32>,
    %c7_i32_77 = arith.constant 7 : i32
    %c8_i32_78 = arith.constant 8 : i32
    %309 = arith.muli %c7_i32_77, %c8_i32_78 : i32
    %310 = tpu.assume_multiple %309, 8 : i32
    %c7_i32_79 = arith.constant 7 : i32
    %311 = arith.subi %c7_i32_79, %c7_i32_77 : i32
    %c8_i32_80 = arith.constant 8 : i32
    %312 = arith.muli %311, %c8_i32_80 : i32
    %313 = tpu.assume_multiple %312, 8 : i32
    %314 = arith.index_cast %310 : i32 to index
    %c0_81 = arith.constant 0 : index
    %315 = vector.load %arg17[%314, %c0_81] : memref<64x128xf32, #tpu.memory_space<vmem>>, vector<8x128xf32>
    %316 = arith.index_cast %313 : i32 to index
    %c0_82 = arith.constant 0 : index
    %317 = vector.load %arg18[%316, %c0_82] : memref<64x128xf32, #tpu.memory_space<vmem>>, vector<8x128xf32>
    %318 = tpu.concatenate %315, %317 in 1 : vector<8x128xf32>, vector<8x128xf32> -> vector<8x256xf32>
    %319 = tpu.concatenate %301, %304 in 1 : vector<8x32xf32>, vector<8x32xf32> -> vector<8x64xf32>
    %cst_83 = arith.constant dense<0.000000e+00> : vector<8x256xf32>
    %320 = tpu.matmul %319, %13, %cst_83 {dimension_numbers = #tpu.dot_dimension_numbers<[1], [0], [0], [1], [0, 0, 1, 1], [], []>} : vector<8x64xf32>, vector<64x256xf32>, vector<8x256xf32> -> vector<8x256xf32>
    %321 = arith.addf %318, %320 : vector<8x256xf32>
    %322 = arith.negf %321 : vector<8x256xf32>
    %323 = math.exp %322 : vector<8x256xf32>
    %cst_84 = arith.constant 1.000000e+00 : f32
    %324 = vector.broadcast %cst_84 : f32 to vector<8x256xf32>
    %325 = arith.addf %324, %323 : vector<8x256xf32>
    %326 = arith.divf %324, %325 : vector<8x256xf32>
    %327 = vector.extract_strided_slice %321 {offsets = [0, 64], sizes = [8, 32], strides = [1, 1]} : vector<8x256xf32> to vector<8x32xf32>
    %328 = math.tanh %327 : vector<8x32xf32>
    %329 = vector.extract_strided_slice %321 {offsets = [0, 192], sizes = [8, 32], strides = [1, 1]} : vector<8x256xf32> to vector<8x32xf32>
    %330 = math.tanh %329 : vector<8x32xf32>
    %331 = vector.extract_strided_slice %326 {offsets = [0, 32], sizes = [8, 32], strides = [1, 1]} : vector<8x256xf32> to vector<8x32xf32>
    %332 = arith.mulf %331, %293 : vector<8x32xf32>
    %333 = vector.extract_strided_slice %326 {offsets = [0, 0], sizes = [8, 32], strides = [1, 1]} : vector<8x256xf32> to vector<8x32xf32>
    %334 = arith.mulf %333, %328 : vector<8x32xf32>
    %335 = arith.addf %332, %334 : vector<8x32xf32>
    %336 = vector.extract_strided_slice %326 {offsets = [0, 160], sizes = [8, 32], strides = [1, 1]} : vector<8x256xf32> to vector<8x32xf32>
    %337 = arith.mulf %336, %298 : vector<8x32xf32>
    %338 = vector.extract_strided_slice %326 {offsets = [0, 128], sizes = [8, 32], strides = [1, 1]} : vector<8x256xf32> to vector<8x32xf32>
    %339 = arith.mulf %338, %330 : vector<8x32xf32>
    %340 = arith.addf %337, %339 : vector<8x32xf32>
    %341 = vector.extract_strided_slice %326 {offsets = [0, 96], sizes = [8, 32], strides = [1, 1]} : vector<8x256xf32> to vector<8x32xf32>
    %342 = math.tanh %335 : vector<8x32xf32>
    %343 = arith.mulf %341, %342 : vector<8x32xf32>
    %344 = vector.extract_strided_slice %326 {offsets = [0, 224], sizes = [8, 32], strides = [1, 1]} : vector<8x256xf32> to vector<8x32xf32>
    %345 = math.tanh %340 : vector<8x32xf32>
    %346 = arith.mulf %344, %345 : vector<8x32xf32>
    %347 = arith.index_cast %310 : i32 to index
    %c0_85 = arith.constant 0 : index
    %348 = vector.load %arg19[%347, %c0_85] : memref<64x64xf32, #tpu.memory_space<vmem>>, vector<8x32xf32>
    tpu.vector_store %arg19[%347, %c0_85], %343 {strides = array<i32>} : memref<64x64xf32, #tpu.memory_space<vmem>>, vector<8x32xf32>,
    %349 = arith.index_cast %313 : i32 to index
    %c32_86 = arith.constant 32 : index
    %350 = vector.load %arg19[%349, %c32_86] : memref<64x64xf32, #tpu.memory_space<vmem>>, vector<8x32xf32>
    tpu.vector_store %arg19[%349, %c32_86], %346 {strides = array<i32>} : memref<64x64xf32, #tpu.memory_space<vmem>>, vector<8x32xf32>,
    %c8_i32_87 = arith.constant 8 : i32
    %c0_88 = arith.constant 0 : index
    %c0_89 = arith.constant 0 : index
    %351 = vector.load %arg19[%c0_88, %c0_89] : memref<64x64xf32, #tpu.memory_space<vmem>>, vector<64x64xf32>
    %c0_90 = arith.constant 0 : index
    %c0_91 = arith.constant 0 : index
    %352 = vector.load %arg7[%c0_90, %c0_91] : memref<64x128xf32, #tpu.memory_space<vmem>>, vector<64x128xf32>
    %cst_92 = arith.constant dense<0.000000e+00> : vector<64x128xf32>
    %353 = tpu.matmul %351, %352, %cst_92 {dimension_numbers = #tpu.dot_dimension_numbers<[1], [0], [0], [1], [0, 0, 1, 1], [], []>} : vector<64x64xf32>, vector<64x128xf32>, vector<64x128xf32> -> vector<64x128xf32>
    %c0_93 = arith.constant 0 : index
    %c0_94 = arith.constant 0 : index
    %354 = vector.load %arg9[%c0_93, %c0_94] : memref<1x128xf32, #tpu.memory_space<vmem>>, vector<1x128xf32>
    %355 = vector.broadcast %354 : vector<1x128xf32> to vector<64x128xf32>
    %356 = arith.addf %353, %355 : vector<64x128xf32>
    %c0_95 = arith.constant 0 : index
    %c0_96 = arith.constant 0 : index
    %357 = vector.load %arg17[%c0_95, %c0_96] : memref<64x128xf32, #tpu.memory_space<vmem>>, vector<64x128xf32>
    tpu.vector_store %arg17[%c0_95, %c0_96], %356 {strides = array<i32>} : memref<64x128xf32, #tpu.memory_space<vmem>>, vector<64x128xf32>,
    %c0_97 = arith.constant 0 : index
    %c0_98 = arith.constant 0 : index
    %358 = vector.load %arg8[%c0_97, %c0_98] : memref<64x128xf32, #tpu.memory_space<vmem>>, vector<64x128xf32>
    %cst_99 = arith.constant dense<0.000000e+00> : vector<64x128xf32>
    %359 = tpu.matmul %351, %358, %cst_99 {dimension_numbers = #tpu.dot_dimension_numbers<[1], [0], [0], [1], [0, 0, 1, 1], [], []>} : vector<64x64xf32>, vector<64x128xf32>, vector<64x128xf32> -> vector<64x128xf32>
    %c0_100 = arith.constant 0 : index
    %c0_101 = arith.constant 0 : index
    %360 = vector.load %arg10[%c0_100, %c0_101] : memref<1x128xf32, #tpu.memory_space<vmem>>, vector<1x128xf32>
    %361 = vector.broadcast %360 : vector<1x128xf32> to vector<64x128xf32>
    %362 = arith.addf %359, %361 : vector<64x128xf32>
    %c0_102 = arith.constant 0 : index
    %c0_103 = arith.constant 0 : index
    %363 = vector.load %arg18[%c0_102, %c0_103] : memref<64x128xf32, #tpu.memory_space<vmem>>, vector<64x128xf32>
    tpu.vector_store %arg18[%c0_102, %c0_103], %362 {strides = array<i32>} : memref<64x128xf32, #tpu.memory_space<vmem>>, vector<64x128xf32>,
    %c0_104 = arith.constant 0 : index
    %c0_105 = arith.constant 0 : index
    %364 = vector.load %arg11[%c0_104, %c0_105] : memref<64x256xf32, #tpu.memory_space<vmem>>, vector<64x256xf32>
    %cst_106 = arith.constant 0.000000e+00 : f32
    %365 = vector.broadcast %cst_106 : f32 to vector<8x32xf32>
    %c0_i32_107 = arith.constant 0 : i32
    %c8_i32_108 = arith.constant 8 : i32
    %366 = arith.muli %c0_i32_107, %c8_i32_108 : i32
    %367 = tpu.assume_multiple %366, 8 : i32
    %c7_i32_109 = arith.constant 7 : i32
    %368 = arith.subi %c7_i32_109, %c0_i32_107 : i32
    %c8_i32_110 = arith.constant 8 : i32
    %369 = arith.muli %368, %c8_i32_110 : i32
    %370 = tpu.assume_multiple %369, 8 : i32
    %371 = arith.index_cast %367 : i32 to index
    %c0_111 = arith.constant 0 : index
    %372 = vector.load %arg17[%371, %c0_111] : memref<64x128xf32, #tpu.memory_space<vmem>>, vector<8x128xf32>
    %373 = arith.index_cast %370 : i32 to index
    %c0_112 = arith.constant 0 : index
    %374 = vector.load %arg18[%373, %c0_112] : memref<64x128xf32, #tpu.memory_space<vmem>>, vector<8x128xf32>
    %375 = tpu.concatenate %372, %374 in 1 : vector<8x128xf32>, vector<8x128xf32> -> vector<8x256xf32>
    %376 = tpu.concatenate %365, %365 in 1 : vector<8x32xf32>, vector<8x32xf32> -> vector<8x64xf32>
    %cst_113 = arith.constant dense<0.000000e+00> : vector<8x256xf32>
    %377 = tpu.matmul %376, %364, %cst_113 {dimension_numbers = #tpu.dot_dimension_numbers<[1], [0], [0], [1], [0, 0, 1, 1], [], []>} : vector<8x64xf32>, vector<64x256xf32>, vector<8x256xf32> -> vector<8x256xf32>
    %378 = arith.addf %375, %377 : vector<8x256xf32>
    %379 = arith.negf %378 : vector<8x256xf32>
    %380 = math.exp %379 : vector<8x256xf32>
    %cst_114 = arith.constant 1.000000e+00 : f32
    %381 = vector.broadcast %cst_114 : f32 to vector<8x256xf32>
    %382 = arith.addf %381, %380 : vector<8x256xf32>
    %383 = arith.divf %381, %382 : vector<8x256xf32>
    %384 = vector.extract_strided_slice %378 {offsets = [0, 64], sizes = [8, 32], strides = [1, 1]} : vector<8x256xf32> to vector<8x32xf32>
    %385 = math.tanh %384 : vector<8x32xf32>
    %386 = vector.extract_strided_slice %378 {offsets = [0, 192], sizes = [8, 32], strides = [1, 1]} : vector<8x256xf32> to vector<8x32xf32>
    %387 = math.tanh %386 : vector<8x32xf32>
    %388 = vector.extract_strided_slice %383 {offsets = [0, 32], sizes = [8, 32], strides = [1, 1]} : vector<8x256xf32> to vector<8x32xf32>
    %389 = arith.mulf %388, %365 : vector<8x32xf32>
    %390 = vector.extract_strided_slice %383 {offsets = [0, 0], sizes = [8, 32], strides = [1, 1]} : vector<8x256xf32> to vector<8x32xf32>
    %391 = arith.mulf %390, %385 : vector<8x32xf32>
    %392 = arith.addf %389, %391 : vector<8x32xf32>
    %393 = vector.extract_strided_slice %383 {offsets = [0, 160], sizes = [8, 32], strides = [1, 1]} : vector<8x256xf32> to vector<8x32xf32>
    %394 = arith.mulf %393, %365 : vector<8x32xf32>
    %395 = vector.extract_strided_slice %383 {offsets = [0, 128], sizes = [8, 32], strides = [1, 1]} : vector<8x256xf32> to vector<8x32xf32>
    %396 = arith.mulf %395, %387 : vector<8x32xf32>
    %397 = arith.addf %394, %396 : vector<8x32xf32>
    %398 = vector.extract_strided_slice %383 {offsets = [0, 96], sizes = [8, 32], strides = [1, 1]} : vector<8x256xf32> to vector<8x32xf32>
    %399 = math.tanh %392 : vector<8x32xf32>
    %400 = arith.mulf %398, %399 : vector<8x32xf32>
    %401 = vector.extract_strided_slice %383 {offsets = [0, 224], sizes = [8, 32], strides = [1, 1]} : vector<8x256xf32> to vector<8x32xf32>
    %402 = math.tanh %397 : vector<8x32xf32>
    %403 = arith.mulf %401, %402 : vector<8x32xf32>
    %404 = arith.index_cast %367 : i32 to index
    %c0_115 = arith.constant 0 : index
    %405 = vector.load %arg19[%404, %c0_115] : memref<64x64xf32, #tpu.memory_space<vmem>>, vector<8x32xf32>
    tpu.vector_store %arg19[%404, %c0_115], %400 {strides = array<i32>} : memref<64x64xf32, #tpu.memory_space<vmem>>, vector<8x32xf32>,
    %406 = arith.index_cast %370 : i32 to index
    %c32_116 = arith.constant 32 : index
    %407 = vector.load %arg19[%406, %c32_116] : memref<64x64xf32, #tpu.memory_space<vmem>>, vector<8x32xf32>
    tpu.vector_store %arg19[%406, %c32_116], %403 {strides = array<i32>} : memref<64x64xf32, #tpu.memory_space<vmem>>, vector<8x32xf32>,
    %c1_i32_117 = arith.constant 1 : i32
    %c8_i32_118 = arith.constant 8 : i32
    %408 = arith.muli %c1_i32_117, %c8_i32_118 : i32
    %409 = tpu.assume_multiple %408, 8 : i32
    %c7_i32_119 = arith.constant 7 : i32
    %410 = arith.subi %c7_i32_119, %c1_i32_117 : i32
    %c8_i32_120 = arith.constant 8 : i32
    %411 = arith.muli %410, %c8_i32_120 : i32
    %412 = tpu.assume_multiple %411, 8 : i32
    %413 = arith.index_cast %409 : i32 to index
    %c0_121 = arith.constant 0 : index
    %414 = vector.load %arg17[%413, %c0_121] : memref<64x128xf32, #tpu.memory_space<vmem>>, vector<8x128xf32>
    %415 = arith.index_cast %412 : i32 to index
    %c0_122 = arith.constant 0 : index
    %416 = vector.load %arg18[%415, %c0_122] : memref<64x128xf32, #tpu.memory_space<vmem>>, vector<8x128xf32>
    %417 = tpu.concatenate %414, %416 in 1 : vector<8x128xf32>, vector<8x128xf32> -> vector<8x256xf32>
    %418 = tpu.concatenate %400, %403 in 1 : vector<8x32xf32>, vector<8x32xf32> -> vector<8x64xf32>
    %cst_123 = arith.constant dense<0.000000e+00> : vector<8x256xf32>
    %419 = tpu.matmul %418, %364, %cst_123 {dimension_numbers = #tpu.dot_dimension_numbers<[1], [0], [0], [1], [0, 0, 1, 1], [], []>} : vector<8x64xf32>, vector<64x256xf32>, vector<8x256xf32> -> vector<8x256xf32>
    %420 = arith.addf %417, %419 : vector<8x256xf32>
    %421 = arith.negf %420 : vector<8x256xf32>
    %422 = math.exp %421 : vector<8x256xf32>
    %cst_124 = arith.constant 1.000000e+00 : f32
    %423 = vector.broadcast %cst_124 : f32 to vector<8x256xf32>
    %424 = arith.addf %423, %422 : vector<8x256xf32>
    %425 = arith.divf %423, %424 : vector<8x256xf32>
    %426 = vector.extract_strided_slice %420 {offsets = [0, 64], sizes = [8, 32], strides = [1, 1]} : vector<8x256xf32> to vector<8x32xf32>
    %427 = math.tanh %426 : vector<8x32xf32>
    %428 = vector.extract_strided_slice %420 {offsets = [0, 192], sizes = [8, 32], strides = [1, 1]} : vector<8x256xf32> to vector<8x32xf32>
    %429 = math.tanh %428 : vector<8x32xf32>
    %430 = vector.extract_strided_slice %425 {offsets = [0, 32], sizes = [8, 32], strides = [1, 1]} : vector<8x256xf32> to vector<8x32xf32>
    %431 = arith.mulf %430, %392 : vector<8x32xf32>
    %432 = vector.extract_strided_slice %425 {offsets = [0, 0], sizes = [8, 32], strides = [1, 1]} : vector<8x256xf32> to vector<8x32xf32>
    %433 = arith.mulf %432, %427 : vector<8x32xf32>
    %434 = arith.addf %431, %433 : vector<8x32xf32>
    %435 = vector.extract_strided_slice %425 {offsets = [0, 160], sizes = [8, 32], strides = [1, 1]} : vector<8x256xf32> to vector<8x32xf32>
    %436 = arith.mulf %435, %397 : vector<8x32xf32>
    %437 = vector.extract_strided_slice %425 {offsets = [0, 128], sizes = [8, 32], strides = [1, 1]} : vector<8x256xf32> to vector<8x32xf32>
    %438 = arith.mulf %437, %429 : vector<8x32xf32>
    %439 = arith.addf %436, %438 : vector<8x32xf32>
    %440 = vector.extract_strided_slice %425 {offsets = [0, 96], sizes = [8, 32], strides = [1, 1]} : vector<8x256xf32> to vector<8x32xf32>
    %441 = math.tanh %434 : vector<8x32xf32>
    %442 = arith.mulf %440, %441 : vector<8x32xf32>
    %443 = vector.extract_strided_slice %425 {offsets = [0, 224], sizes = [8, 32], strides = [1, 1]} : vector<8x256xf32> to vector<8x32xf32>
    %444 = math.tanh %439 : vector<8x32xf32>
    %445 = arith.mulf %443, %444 : vector<8x32xf32>
    %446 = arith.index_cast %409 : i32 to index
    %c0_125 = arith.constant 0 : index
    %447 = vector.load %arg19[%446, %c0_125] : memref<64x64xf32, #tpu.memory_space<vmem>>, vector<8x32xf32>
    tpu.vector_store %arg19[%446, %c0_125], %442 {strides = array<i32>} : memref<64x64xf32, #tpu.memory_space<vmem>>, vector<8x32xf32>,
    %448 = arith.index_cast %412 : i32 to index
    %c32_126 = arith.constant 32 : index
    %449 = vector.load %arg19[%448, %c32_126] : memref<64x64xf32, #tpu.memory_space<vmem>>, vector<8x32xf32>
    tpu.vector_store %arg19[%448, %c32_126], %445 {strides = array<i32>} : memref<64x64xf32, #tpu.memory_space<vmem>>, vector<8x32xf32>,
    %c2_i32_127 = arith.constant 2 : i32
    %c8_i32_128 = arith.constant 8 : i32
    %450 = arith.muli %c2_i32_127, %c8_i32_128 : i32
    %451 = tpu.assume_multiple %450, 8 : i32
    %c7_i32_129 = arith.constant 7 : i32
    %452 = arith.subi %c7_i32_129, %c2_i32_127 : i32
    %c8_i32_130 = arith.constant 8 : i32
    %453 = arith.muli %452, %c8_i32_130 : i32
    %454 = tpu.assume_multiple %453, 8 : i32
    %455 = arith.index_cast %451 : i32 to index
    %c0_131 = arith.constant 0 : index
    %456 = vector.load %arg17[%455, %c0_131] : memref<64x128xf32, #tpu.memory_space<vmem>>, vector<8x128xf32>
    %457 = arith.index_cast %454 : i32 to index
    %c0_132 = arith.constant 0 : index
    %458 = vector.load %arg18[%457, %c0_132] : memref<64x128xf32, #tpu.memory_space<vmem>>, vector<8x128xf32>
    %459 = tpu.concatenate %456, %458 in 1 : vector<8x128xf32>, vector<8x128xf32> -> vector<8x256xf32>
    %460 = tpu.concatenate %442, %445 in 1 : vector<8x32xf32>, vector<8x32xf32> -> vector<8x64xf32>
    %cst_133 = arith.constant dense<0.000000e+00> : vector<8x256xf32>
    %461 = tpu.matmul %460, %364, %cst_133 {dimension_numbers = #tpu.dot_dimension_numbers<[1], [0], [0], [1], [0, 0, 1, 1], [], []>} : vector<8x64xf32>, vector<64x256xf32>, vector<8x256xf32> -> vector<8x256xf32>
    %462 = arith.addf %459, %461 : vector<8x256xf32>
    %463 = arith.negf %462 : vector<8x256xf32>
    %464 = math.exp %463 : vector<8x256xf32>
    %cst_134 = arith.constant 1.000000e+00 : f32
    %465 = vector.broadcast %cst_134 : f32 to vector<8x256xf32>
    %466 = arith.addf %465, %464 : vector<8x256xf32>
    %467 = arith.divf %465, %466 : vector<8x256xf32>
    %468 = vector.extract_strided_slice %462 {offsets = [0, 64], sizes = [8, 32], strides = [1, 1]} : vector<8x256xf32> to vector<8x32xf32>
    %469 = math.tanh %468 : vector<8x32xf32>
    %470 = vector.extract_strided_slice %462 {offsets = [0, 192], sizes = [8, 32], strides = [1, 1]} : vector<8x256xf32> to vector<8x32xf32>
    %471 = math.tanh %470 : vector<8x32xf32>
    %472 = vector.extract_strided_slice %467 {offsets = [0, 32], sizes = [8, 32], strides = [1, 1]} : vector<8x256xf32> to vector<8x32xf32>
    %473 = arith.mulf %472, %434 : vector<8x32xf32>
    %474 = vector.extract_strided_slice %467 {offsets = [0, 0], sizes = [8, 32], strides = [1, 1]} : vector<8x256xf32> to vector<8x32xf32>
    %475 = arith.mulf %474, %469 : vector<8x32xf32>
    %476 = arith.addf %473, %475 : vector<8x32xf32>
    %477 = vector.extract_strided_slice %467 {offsets = [0, 160], sizes = [8, 32], strides = [1, 1]} : vector<8x256xf32> to vector<8x32xf32>
    %478 = arith.mulf %477, %439 : vector<8x32xf32>
    %479 = vector.extract_strided_slice %467 {offsets = [0, 128], sizes = [8, 32], strides = [1, 1]} : vector<8x256xf32> to vector<8x32xf32>
    %480 = arith.mulf %479, %471 : vector<8x32xf32>
    %481 = arith.addf %478, %480 : vector<8x32xf32>
    %482 = vector.extract_strided_slice %467 {offsets = [0, 96], sizes = [8, 32], strides = [1, 1]} : vector<8x256xf32> to vector<8x32xf32>
    %483 = math.tanh %476 : vector<8x32xf32>
    %484 = arith.mulf %482, %483 : vector<8x32xf32>
    %485 = vector.extract_strided_slice %467 {offsets = [0, 224], sizes = [8, 32], strides = [1, 1]} : vector<8x256xf32> to vector<8x32xf32>
    %486 = math.tanh %481 : vector<8x32xf32>
    %487 = arith.mulf %485, %486 : vector<8x32xf32>
    %488 = arith.index_cast %451 : i32 to index
    %c0_135 = arith.constant 0 : index
    %489 = vector.load %arg19[%488, %c0_135] : memref<64x64xf32, #tpu.memory_space<vmem>>, vector<8x32xf32>
    tpu.vector_store %arg19[%488, %c0_135], %484 {strides = array<i32>} : memref<64x64xf32, #tpu.memory_space<vmem>>, vector<8x32xf32>,
    %490 = arith.index_cast %454 : i32 to index
    %c32_136 = arith.constant 32 : index
    %491 = vector.load %arg19[%490, %c32_136] : memref<64x64xf32, #tpu.memory_space<vmem>>, vector<8x32xf32>
    tpu.vector_store %arg19[%490, %c32_136], %487 {strides = array<i32>} : memref<64x64xf32, #tpu.memory_space<vmem>>, vector<8x32xf32>,
    %c3_i32_137 = arith.constant 3 : i32
    %c8_i32_138 = arith.constant 8 : i32
    %492 = arith.muli %c3_i32_137, %c8_i32_138 : i32
    %493 = tpu.assume_multiple %492, 8 : i32
    %c7_i32_139 = arith.constant 7 : i32
    %494 = arith.subi %c7_i32_139, %c3_i32_137 : i32
    %c8_i32_140 = arith.constant 8 : i32
    %495 = arith.muli %494, %c8_i32_140 : i32
    %496 = tpu.assume_multiple %495, 8 : i32
    %497 = arith.index_cast %493 : i32 to index
    %c0_141 = arith.constant 0 : index
    %498 = vector.load %arg17[%497, %c0_141] : memref<64x128xf32, #tpu.memory_space<vmem>>, vector<8x128xf32>
    %499 = arith.index_cast %496 : i32 to index
    %c0_142 = arith.constant 0 : index
    %500 = vector.load %arg18[%499, %c0_142] : memref<64x128xf32, #tpu.memory_space<vmem>>, vector<8x128xf32>
    %501 = tpu.concatenate %498, %500 in 1 : vector<8x128xf32>, vector<8x128xf32> -> vector<8x256xf32>
    %502 = tpu.concatenate %484, %487 in 1 : vector<8x32xf32>, vector<8x32xf32> -> vector<8x64xf32>
    %cst_143 = arith.constant dense<0.000000e+00> : vector<8x256xf32>
    %503 = tpu.matmul %502, %364, %cst_143 {dimension_numbers = #tpu.dot_dimension_numbers<[1], [0], [0], [1], [0, 0, 1, 1], [], []>} : vector<8x64xf32>, vector<64x256xf32>, vector<8x256xf32> -> vector<8x256xf32>
    %504 = arith.addf %501, %503 : vector<8x256xf32>
    %505 = arith.negf %504 : vector<8x256xf32>
    %506 = math.exp %505 : vector<8x256xf32>
    %cst_144 = arith.constant 1.000000e+00 : f32
    %507 = vector.broadcast %cst_144 : f32 to vector<8x256xf32>
    %508 = arith.addf %507, %506 : vector<8x256xf32>
    %509 = arith.divf %507, %508 : vector<8x256xf32>
    %510 = vector.extract_strided_slice %504 {offsets = [0, 64], sizes = [8, 32], strides = [1, 1]} : vector<8x256xf32> to vector<8x32xf32>
    %511 = math.tanh %510 : vector<8x32xf32>
    %512 = vector.extract_strided_slice %504 {offsets = [0, 192], sizes = [8, 32], strides = [1, 1]} : vector<8x256xf32> to vector<8x32xf32>
    %513 = math.tanh %512 : vector<8x32xf32>
    %514 = vector.extract_strided_slice %509 {offsets = [0, 32], sizes = [8, 32], strides = [1, 1]} : vector<8x256xf32> to vector<8x32xf32>
    %515 = arith.mulf %514, %476 : vector<8x32xf32>
    %516 = vector.extract_strided_slice %509 {offsets = [0, 0], sizes = [8, 32], strides = [1, 1]} : vector<8x256xf32> to vector<8x32xf32>
    %517 = arith.mulf %516, %511 : vector<8x32xf32>
    %518 = arith.addf %515, %517 : vector<8x32xf32>
    %519 = vector.extract_strided_slice %509 {offsets = [0, 160], sizes = [8, 32], strides = [1, 1]} : vector<8x256xf32> to vector<8x32xf32>
    %520 = arith.mulf %519, %481 : vector<8x32xf32>
    %521 = vector.extract_strided_slice %509 {offsets = [0, 128], sizes = [8, 32], strides = [1, 1]} : vector<8x256xf32> to vector<8x32xf32>
    %522 = arith.mulf %521, %513 : vector<8x32xf32>
    %523 = arith.addf %520, %522 : vector<8x32xf32>
    %524 = vector.extract_strided_slice %509 {offsets = [0, 96], sizes = [8, 32], strides = [1, 1]} : vector<8x256xf32> to vector<8x32xf32>
    %525 = math.tanh %518 : vector<8x32xf32>
    %526 = arith.mulf %524, %525 : vector<8x32xf32>
    %527 = vector.extract_strided_slice %509 {offsets = [0, 224], sizes = [8, 32], strides = [1, 1]} : vector<8x256xf32> to vector<8x32xf32>
    %528 = math.tanh %523 : vector<8x32xf32>
    %529 = arith.mulf %527, %528 : vector<8x32xf32>
    %530 = arith.index_cast %493 : i32 to index
    %c0_145 = arith.constant 0 : index
    %531 = vector.load %arg19[%530, %c0_145] : memref<64x64xf32, #tpu.memory_space<vmem>>, vector<8x32xf32>
    tpu.vector_store %arg19[%530, %c0_145], %526 {strides = array<i32>} : memref<64x64xf32, #tpu.memory_space<vmem>>, vector<8x32xf32>,
    %532 = arith.index_cast %496 : i32 to index
    %c32_146 = arith.constant 32 : index
    %533 = vector.load %arg19[%532, %c32_146] : memref<64x64xf32, #tpu.memory_space<vmem>>, vector<8x32xf32>
    tpu.vector_store %arg19[%532, %c32_146], %529 {strides = array<i32>} : memref<64x64xf32, #tpu.memory_space<vmem>>, vector<8x32xf32>,
    %c4_i32_147 = arith.constant 4 : i32
    %c8_i32_148 = arith.constant 8 : i32
    %534 = arith.muli %c4_i32_147, %c8_i32_148 : i32
    %535 = tpu.assume_multiple %534, 8 : i32
    %c7_i32_149 = arith.constant 7 : i32
    %536 = arith.subi %c7_i32_149, %c4_i32_147 : i32
    %c8_i32_150 = arith.constant 8 : i32
    %537 = arith.muli %536, %c8_i32_150 : i32
    %538 = tpu.assume_multiple %537, 8 : i32
    %539 = arith.index_cast %535 : i32 to index
    %c0_151 = arith.constant 0 : index
    %540 = vector.load %arg17[%539, %c0_151] : memref<64x128xf32, #tpu.memory_space<vmem>>, vector<8x128xf32>
    %541 = arith.index_cast %538 : i32 to index
    %c0_152 = arith.constant 0 : index
    %542 = vector.load %arg18[%541, %c0_152] : memref<64x128xf32, #tpu.memory_space<vmem>>, vector<8x128xf32>
    %543 = tpu.concatenate %540, %542 in 1 : vector<8x128xf32>, vector<8x128xf32> -> vector<8x256xf32>
    %544 = tpu.concatenate %526, %529 in 1 : vector<8x32xf32>, vector<8x32xf32> -> vector<8x64xf32>
    %cst_153 = arith.constant dense<0.000000e+00> : vector<8x256xf32>
    %545 = tpu.matmul %544, %364, %cst_153 {dimension_numbers = #tpu.dot_dimension_numbers<[1], [0], [0], [1], [0, 0, 1, 1], [], []>} : vector<8x64xf32>, vector<64x256xf32>, vector<8x256xf32> -> vector<8x256xf32>
    %546 = arith.addf %543, %545 : vector<8x256xf32>
    %547 = arith.negf %546 : vector<8x256xf32>
    %548 = math.exp %547 : vector<8x256xf32>
    %cst_154 = arith.constant 1.000000e+00 : f32
    %549 = vector.broadcast %cst_154 : f32 to vector<8x256xf32>
    %550 = arith.addf %549, %548 : vector<8x256xf32>
    %551 = arith.divf %549, %550 : vector<8x256xf32>
    %552 = vector.extract_strided_slice %546 {offsets = [0, 64], sizes = [8, 32], strides = [1, 1]} : vector<8x256xf32> to vector<8x32xf32>
    %553 = math.tanh %552 : vector<8x32xf32>
    %554 = vector.extract_strided_slice %546 {offsets = [0, 192], sizes = [8, 32], strides = [1, 1]} : vector<8x256xf32> to vector<8x32xf32>
    %555 = math.tanh %554 : vector<8x32xf32>
    %556 = vector.extract_strided_slice %551 {offsets = [0, 32], sizes = [8, 32], strides = [1, 1]} : vector<8x256xf32> to vector<8x32xf32>
    %557 = arith.mulf %556, %518 : vector<8x32xf32>
    %558 = vector.extract_strided_slice %551 {offsets = [0, 0], sizes = [8, 32], strides = [1, 1]} : vector<8x256xf32> to vector<8x32xf32>
    %559 = arith.mulf %558, %553 : vector<8x32xf32>
    %560 = arith.addf %557, %559 : vector<8x32xf32>
    %561 = vector.extract_strided_slice %551 {offsets = [0, 160], sizes = [8, 32], strides = [1, 1]} : vector<8x256xf32> to vector<8x32xf32>
    %562 = arith.mulf %561, %523 : vector<8x32xf32>
    %563 = vector.extract_strided_slice %551 {offsets = [0, 128], sizes = [8, 32], strides = [1, 1]} : vector<8x256xf32> to vector<8x32xf32>
    %564 = arith.mulf %563, %555 : vector<8x32xf32>
    %565 = arith.addf %562, %564 : vector<8x32xf32>
    %566 = vector.extract_strided_slice %551 {offsets = [0, 96], sizes = [8, 32], strides = [1, 1]} : vector<8x256xf32> to vector<8x32xf32>
    %567 = math.tanh %560 : vector<8x32xf32>
    %568 = arith.mulf %566, %567 : vector<8x32xf32>
    %569 = vector.extract_strided_slice %551 {offsets = [0, 224], sizes = [8, 32], strides = [1, 1]} : vector<8x256xf32> to vector<8x32xf32>
    %570 = math.tanh %565 : vector<8x32xf32>
    %571 = arith.mulf %569, %570 : vector<8x32xf32>
    %572 = arith.index_cast %535 : i32 to index
    %c0_155 = arith.constant 0 : index
    %573 = vector.load %arg19[%572, %c0_155] : memref<64x64xf32, #tpu.memory_space<vmem>>, vector<8x32xf32>
    tpu.vector_store %arg19[%572, %c0_155], %568 {strides = array<i32>} : memref<64x64xf32, #tpu.memory_space<vmem>>, vector<8x32xf32>,
    %574 = arith.index_cast %538 : i32 to index
    %c32_156 = arith.constant 32 : index
    %575 = vector.load %arg19[%574, %c32_156] : memref<64x64xf32, #tpu.memory_space<vmem>>, vector<8x32xf32>
    tpu.vector_store %arg19[%574, %c32_156], %571 {strides = array<i32>} : memref<64x64xf32, #tpu.memory_space<vmem>>, vector<8x32xf32>,
    %c5_i32_157 = arith.constant 5 : i32
    %c8_i32_158 = arith.constant 8 : i32
    %576 = arith.muli %c5_i32_157, %c8_i32_158 : i32
    %577 = tpu.assume_multiple %576, 8 : i32
    %c7_i32_159 = arith.constant 7 : i32
    %578 = arith.subi %c7_i32_159, %c5_i32_157 : i32
    %c8_i32_160 = arith.constant 8 : i32
    %579 = arith.muli %578, %c8_i32_160 : i32
    %580 = tpu.assume_multiple %579, 8 : i32
    %581 = arith.index_cast %577 : i32 to index
    %c0_161 = arith.constant 0 : index
    %582 = vector.load %arg17[%581, %c0_161] : memref<64x128xf32, #tpu.memory_space<vmem>>, vector<8x128xf32>
    %583 = arith.index_cast %580 : i32 to index
    %c0_162 = arith.constant 0 : index
    %584 = vector.load %arg18[%583, %c0_162] : memref<64x128xf32, #tpu.memory_space<vmem>>, vector<8x128xf32>
    %585 = tpu.concatenate %582, %584 in 1 : vector<8x128xf32>, vector<8x128xf32> -> vector<8x256xf32>
    %586 = tpu.concatenate %568, %571 in 1 : vector<8x32xf32>, vector<8x32xf32> -> vector<8x64xf32>
    %cst_163 = arith.constant dense<0.000000e+00> : vector<8x256xf32>
    %587 = tpu.matmul %586, %364, %cst_163 {dimension_numbers = #tpu.dot_dimension_numbers<[1], [0], [0], [1], [0, 0, 1, 1], [], []>} : vector<8x64xf32>, vector<64x256xf32>, vector<8x256xf32> -> vector<8x256xf32>
    %588 = arith.addf %585, %587 : vector<8x256xf32>
    %589 = arith.negf %588 : vector<8x256xf32>
    %590 = math.exp %589 : vector<8x256xf32>
    %cst_164 = arith.constant 1.000000e+00 : f32
    %591 = vector.broadcast %cst_164 : f32 to vector<8x256xf32>
    %592 = arith.addf %591, %590 : vector<8x256xf32>
    %593 = arith.divf %591, %592 : vector<8x256xf32>
    %594 = vector.extract_strided_slice %588 {offsets = [0, 64], sizes = [8, 32], strides = [1, 1]} : vector<8x256xf32> to vector<8x32xf32>
    %595 = math.tanh %594 : vector<8x32xf32>
    %596 = vector.extract_strided_slice %588 {offsets = [0, 192], sizes = [8, 32], strides = [1, 1]} : vector<8x256xf32> to vector<8x32xf32>
    %597 = math.tanh %596 : vector<8x32xf32>
    %598 = vector.extract_strided_slice %593 {offsets = [0, 32], sizes = [8, 32], strides = [1, 1]} : vector<8x256xf32> to vector<8x32xf32>
    %599 = arith.mulf %598, %560 : vector<8x32xf32>
    %600 = vector.extract_strided_slice %593 {offsets = [0, 0], sizes = [8, 32], strides = [1, 1]} : vector<8x256xf32> to vector<8x32xf32>
    %601 = arith.mulf %600, %595 : vector<8x32xf32>
    %602 = arith.addf %599, %601 : vector<8x32xf32>
    %603 = vector.extract_strided_slice %593 {offsets = [0, 160], sizes = [8, 32], strides = [1, 1]} : vector<8x256xf32> to vector<8x32xf32>
    %604 = arith.mulf %603, %565 : vector<8x32xf32>
    %605 = vector.extract_strided_slice %593 {offsets = [0, 128], sizes = [8, 32], strides = [1, 1]} : vector<8x256xf32> to vector<8x32xf32>
    %606 = arith.mulf %605, %597 : vector<8x32xf32>
    %607 = arith.addf %604, %606 : vector<8x32xf32>
    %608 = vector.extract_strided_slice %593 {offsets = [0, 96], sizes = [8, 32], strides = [1, 1]} : vector<8x256xf32> to vector<8x32xf32>
    %609 = math.tanh %602 : vector<8x32xf32>
    %610 = arith.mulf %608, %609 : vector<8x32xf32>
    %611 = vector.extract_strided_slice %593 {offsets = [0, 224], sizes = [8, 32], strides = [1, 1]} : vector<8x256xf32> to vector<8x32xf32>
    %612 = math.tanh %607 : vector<8x32xf32>
    %613 = arith.mulf %611, %612 : vector<8x32xf32>
    %614 = arith.index_cast %577 : i32 to index
    %c0_165 = arith.constant 0 : index
    %615 = vector.load %arg19[%614, %c0_165] : memref<64x64xf32, #tpu.memory_space<vmem>>, vector<8x32xf32>
    tpu.vector_store %arg19[%614, %c0_165], %610 {strides = array<i32>} : memref<64x64xf32, #tpu.memory_space<vmem>>, vector<8x32xf32>,
    %616 = arith.index_cast %580 : i32 to index
    %c32_166 = arith.constant 32 : index
    %617 = vector.load %arg19[%616, %c32_166] : memref<64x64xf32, #tpu.memory_space<vmem>>, vector<8x32xf32>
    tpu.vector_store %arg19[%616, %c32_166], %613 {strides = array<i32>} : memref<64x64xf32, #tpu.memory_space<vmem>>, vector<8x32xf32>,
    %c6_i32_167 = arith.constant 6 : i32
    %c8_i32_168 = arith.constant 8 : i32
    %618 = arith.muli %c6_i32_167, %c8_i32_168 : i32
    %619 = tpu.assume_multiple %618, 8 : i32
    %c7_i32_169 = arith.constant 7 : i32
    %620 = arith.subi %c7_i32_169, %c6_i32_167 : i32
    %c8_i32_170 = arith.constant 8 : i32
    %621 = arith.muli %620, %c8_i32_170 : i32
    %622 = tpu.assume_multiple %621, 8 : i32
    %623 = arith.index_cast %619 : i32 to index
    %c0_171 = arith.constant 0 : index
    %624 = vector.load %arg17[%623, %c0_171] : memref<64x128xf32, #tpu.memory_space<vmem>>, vector<8x128xf32>
    %625 = arith.index_cast %622 : i32 to index
    %c0_172 = arith.constant 0 : index
    %626 = vector.load %arg18[%625, %c0_172] : memref<64x128xf32, #tpu.memory_space<vmem>>, vector<8x128xf32>
    %627 = tpu.concatenate %624, %626 in 1 : vector<8x128xf32>, vector<8x128xf32> -> vector<8x256xf32>
    %628 = tpu.concatenate %610, %613 in 1 : vector<8x32xf32>, vector<8x32xf32> -> vector<8x64xf32>
    %cst_173 = arith.constant dense<0.000000e+00> : vector<8x256xf32>
    %629 = tpu.matmul %628, %364, %cst_173 {dimension_numbers = #tpu.dot_dimension_numbers<[1], [0], [0], [1], [0, 0, 1, 1], [], []>} : vector<8x64xf32>, vector<64x256xf32>, vector<8x256xf32> -> vector<8x256xf32>
    %630 = arith.addf %627, %629 : vector<8x256xf32>
    %631 = arith.negf %630 : vector<8x256xf32>
    %632 = math.exp %631 : vector<8x256xf32>
    %cst_174 = arith.constant 1.000000e+00 : f32
    %633 = vector.broadcast %cst_174 : f32 to vector<8x256xf32>
    %634 = arith.addf %633, %632 : vector<8x256xf32>
    %635 = arith.divf %633, %634 : vector<8x256xf32>
    %636 = vector.extract_strided_slice %630 {offsets = [0, 64], sizes = [8, 32], strides = [1, 1]} : vector<8x256xf32> to vector<8x32xf32>
    %637 = math.tanh %636 : vector<8x32xf32>
    %638 = vector.extract_strided_slice %630 {offsets = [0, 192], sizes = [8, 32], strides = [1, 1]} : vector<8x256xf32> to vector<8x32xf32>
    %639 = math.tanh %638 : vector<8x32xf32>
    %640 = vector.extract_strided_slice %635 {offsets = [0, 32], sizes = [8, 32], strides = [1, 1]} : vector<8x256xf32> to vector<8x32xf32>
    %641 = arith.mulf %640, %602 : vector<8x32xf32>
    %642 = vector.extract_strided_slice %635 {offsets = [0, 0], sizes = [8, 32], strides = [1, 1]} : vector<8x256xf32> to vector<8x32xf32>
    %643 = arith.mulf %642, %637 : vector<8x32xf32>
    %644 = arith.addf %641, %643 : vector<8x32xf32>
    %645 = vector.extract_strided_slice %635 {offsets = [0, 160], sizes = [8, 32], strides = [1, 1]} : vector<8x256xf32> to vector<8x32xf32>
    %646 = arith.mulf %645, %607 : vector<8x32xf32>
    %647 = vector.extract_strided_slice %635 {offsets = [0, 128], sizes = [8, 32], strides = [1, 1]} : vector<8x256xf32> to vector<8x32xf32>
    %648 = arith.mulf %647, %639 : vector<8x32xf32>
    %649 = arith.addf %646, %648 : vector<8x32xf32>
    %650 = vector.extract_strided_slice %635 {offsets = [0, 96], sizes = [8, 32], strides = [1, 1]} : vector<8x256xf32> to vector<8x32xf32>
    %651 = math.tanh %644 : vector<8x32xf32>
    %652 = arith.mulf %650, %651 : vector<8x32xf32>
    %653 = vector.extract_strided_slice %635 {offsets = [0, 224], sizes = [8, 32], strides = [1, 1]} : vector<8x256xf32> to vector<8x32xf32>
    %654 = math.tanh %649 : vector<8x32xf32>
    %655 = arith.mulf %653, %654 : vector<8x32xf32>
    %656 = arith.index_cast %619 : i32 to index
    %c0_175 = arith.constant 0 : index
    %657 = vector.load %arg19[%656, %c0_175] : memref<64x64xf32, #tpu.memory_space<vmem>>, vector<8x32xf32>
    tpu.vector_store %arg19[%656, %c0_175], %652 {strides = array<i32>} : memref<64x64xf32, #tpu.memory_space<vmem>>, vector<8x32xf32>,
    %658 = arith.index_cast %622 : i32 to index
    %c32_176 = arith.constant 32 : index
    %659 = vector.load %arg19[%658, %c32_176] : memref<64x64xf32, #tpu.memory_space<vmem>>, vector<8x32xf32>
    tpu.vector_store %arg19[%658, %c32_176], %655 {strides = array<i32>} : memref<64x64xf32, #tpu.memory_space<vmem>>, vector<8x32xf32>,
    %c7_i32_177 = arith.constant 7 : i32
    %c8_i32_178 = arith.constant 8 : i32
    %660 = arith.muli %c7_i32_177, %c8_i32_178 : i32
    %661 = tpu.assume_multiple %660, 8 : i32
    %c7_i32_179 = arith.constant 7 : i32
    %662 = arith.subi %c7_i32_179, %c7_i32_177 : i32
    %c8_i32_180 = arith.constant 8 : i32
    %663 = arith.muli %662, %c8_i32_180 : i32
    %664 = tpu.assume_multiple %663, 8 : i32
    %665 = arith.index_cast %661 : i32 to index
    %c0_181 = arith.constant 0 : index
    %666 = vector.load %arg17[%665, %c0_181] : memref<64x128xf32, #tpu.memory_space<vmem>>, vector<8x128xf32>
    %667 = arith.index_cast %664 : i32 to index
    %c0_182 = arith.constant 0 : index
    %668 = vector.load %arg18[%667, %c0_182] : memref<64x128xf32, #tpu.memory_space<vmem>>, vector<8x128xf32>
    %669 = tpu.concatenate %666, %668 in 1 : vector<8x128xf32>, vector<8x128xf32> -> vector<8x256xf32>
    %670 = tpu.concatenate %652, %655 in 1 : vector<8x32xf32>, vector<8x32xf32> -> vector<8x64xf32>
    %cst_183 = arith.constant dense<0.000000e+00> : vector<8x256xf32>
    %671 = tpu.matmul %670, %364, %cst_183 {dimension_numbers = #tpu.dot_dimension_numbers<[1], [0], [0], [1], [0, 0, 1, 1], [], []>} : vector<8x64xf32>, vector<64x256xf32>, vector<8x256xf32> -> vector<8x256xf32>
    %672 = arith.addf %669, %671 : vector<8x256xf32>
    %673 = arith.negf %672 : vector<8x256xf32>
    %674 = math.exp %673 : vector<8x256xf32>
    %cst_184 = arith.constant 1.000000e+00 : f32
    %675 = vector.broadcast %cst_184 : f32 to vector<8x256xf32>
    %676 = arith.addf %675, %674 : vector<8x256xf32>
    %677 = arith.divf %675, %676 : vector<8x256xf32>
    %678 = vector.extract_strided_slice %672 {offsets = [0, 64], sizes = [8, 32], strides = [1, 1]} : vector<8x256xf32> to vector<8x32xf32>
    %679 = math.tanh %678 : vector<8x32xf32>
    %680 = vector.extract_strided_slice %672 {offsets = [0, 192], sizes = [8, 32], strides = [1, 1]} : vector<8x256xf32> to vector<8x32xf32>
    %681 = math.tanh %680 : vector<8x32xf32>
    %682 = vector.extract_strided_slice %677 {offsets = [0, 32], sizes = [8, 32], strides = [1, 1]} : vector<8x256xf32> to vector<8x32xf32>
    %683 = arith.mulf %682, %644 : vector<8x32xf32>
    %684 = vector.extract_strided_slice %677 {offsets = [0, 0], sizes = [8, 32], strides = [1, 1]} : vector<8x256xf32> to vector<8x32xf32>
    %685 = arith.mulf %684, %679 : vector<8x32xf32>
    %686 = arith.addf %683, %685 : vector<8x32xf32>
    %687 = vector.extract_strided_slice %677 {offsets = [0, 160], sizes = [8, 32], strides = [1, 1]} : vector<8x256xf32> to vector<8x32xf32>
    %688 = arith.mulf %687, %649 : vector<8x32xf32>
    %689 = vector.extract_strided_slice %677 {offsets = [0, 128], sizes = [8, 32], strides = [1, 1]} : vector<8x256xf32> to vector<8x32xf32>
    %690 = arith.mulf %689, %681 : vector<8x32xf32>
    %691 = arith.addf %688, %690 : vector<8x32xf32>
    %692 = vector.extract_strided_slice %677 {offsets = [0, 96], sizes = [8, 32], strides = [1, 1]} : vector<8x256xf32> to vector<8x32xf32>
    %693 = math.tanh %686 : vector<8x32xf32>
    %694 = arith.mulf %692, %693 : vector<8x32xf32>
    %695 = vector.extract_strided_slice %677 {offsets = [0, 224], sizes = [8, 32], strides = [1, 1]} : vector<8x256xf32> to vector<8x32xf32>
    %696 = math.tanh %691 : vector<8x32xf32>
    %697 = arith.mulf %695, %696 : vector<8x32xf32>
    %698 = arith.index_cast %661 : i32 to index
    %c0_185 = arith.constant 0 : index
    %699 = vector.load %arg19[%698, %c0_185] : memref<64x64xf32, #tpu.memory_space<vmem>>, vector<8x32xf32>
    tpu.vector_store %arg19[%698, %c0_185], %694 {strides = array<i32>} : memref<64x64xf32, #tpu.memory_space<vmem>>, vector<8x32xf32>,
    %700 = arith.index_cast %664 : i32 to index
    %c32_186 = arith.constant 32 : index
    %701 = vector.load %arg19[%700, %c32_186] : memref<64x64xf32, #tpu.memory_space<vmem>>, vector<8x32xf32>
    tpu.vector_store %arg19[%700, %c32_186], %697 {strides = array<i32>} : memref<64x64xf32, #tpu.memory_space<vmem>>, vector<8x32xf32>,
    %c8_i32_187 = arith.constant 8 : i32
    %c0_188 = arith.constant 0 : index
    %c0_189 = arith.constant 0 : index
    %702 = vector.load %arg19[%c0_188, %c0_189] : memref<64x64xf32, #tpu.memory_space<vmem>>, vector<64x64xf32>
    %cst_190 = arith.constant dense<0.000000e+00> : vector<64xf32>
    %703 = vector.multi_reduction <add>, %702, %cst_190 [1] : vector<64x64xf32> to vector<64xf32>
    %704 = vector.shape_cast %703 : vector<64xf32> to vector<64x1xf32>
    %cst_191 = arith.constant 6.400000e+01 : f32
    %705 = vector.broadcast %cst_191 : f32 to vector<64x1xf32>
    %706 = arith.divf %704, %705 : vector<64x1xf32>
    %707 = vector.broadcast %706 : vector<64x1xf32> to vector<64x64xf32>
    %708 = arith.subf %702, %707 : vector<64x64xf32>
    %709 = arith.mulf %708, %708 : vector<64x64xf32>
    %cst_192 = arith.constant dense<0.000000e+00> : vector<64xf32>
    %710 = vector.multi_reduction <add>, %709, %cst_192 [1] : vector<64x64xf32> to vector<64xf32>
    %711 = vector.shape_cast %710 : vector<64xf32> to vector<64x1xf32>
    %cst_193 = arith.constant 6.400000e+01 : f32
    %712 = vector.broadcast %cst_193 : f32 to vector<64x1xf32>
    %713 = arith.divf %711, %712 : vector<64x1xf32>
    %cst_194 = arith.constant 9.99999974E-6 : f32
    %714 = vector.broadcast %cst_194 : f32 to vector<64x1xf32>
    %715 = arith.addf %713, %714 : vector<64x1xf32>
    %716 = math.rsqrt %715 : vector<64x1xf32>
    %717 = vector.broadcast %716 : vector<64x1xf32> to vector<64x64xf32>
    %718 = arith.mulf %708, %717 : vector<64x64xf32>
    %c0_195 = arith.constant 0 : index
    %c0_196 = arith.constant 0 : index
    %719 = vector.load %arg12[%c0_195, %c0_196] : memref<1x64xf32, #tpu.memory_space<vmem>>, vector<1x64xf32>
    %720 = vector.broadcast %719 : vector<1x64xf32> to vector<64x64xf32>
    %721 = arith.mulf %718, %720 : vector<64x64xf32>
    %c0_197 = arith.constant 0 : index
    %c0_198 = arith.constant 0 : index
    %722 = vector.load %arg13[%c0_197, %c0_198] : memref<1x64xf32, #tpu.memory_space<vmem>>, vector<1x64xf32>
    %723 = vector.broadcast %722 : vector<1x64xf32> to vector<64x64xf32>
    %724 = arith.addf %721, %723 : vector<64x64xf32>
    %c0_199 = arith.constant 0 : index
    %c0_200 = arith.constant 0 : index
    %725 = vector.load %arg14[%c0_199, %c0_200] : memref<64x128xf32, #tpu.memory_space<vmem>>, vector<64x128xf32>
    %cst_201 = arith.constant dense<0.000000e+00> : vector<64x128xf32>
    %726 = tpu.matmul %724, %725, %cst_201 {dimension_numbers = #tpu.dot_dimension_numbers<[1], [0], [0], [1], [0, 0, 1, 1], [], []>} : vector<64x64xf32>, vector<64x128xf32>, vector<64x128xf32> -> vector<64x128xf32>
    %c0_202 = arith.constant 0 : index
    %c0_203 = arith.constant 0 : index
    %727 = vector.load %arg15[%c0_202, %c0_203] : memref<1x128xf32, #tpu.memory_space<vmem>>, vector<1x128xf32>
    %728 = vector.broadcast %727 : vector<1x128xf32> to vector<64x128xf32>
    %729 = arith.addf %726, %728 : vector<64x128xf32>
    %c0_204 = arith.constant 0 : index
    %c0_205 = arith.constant 0 : index
    %730 = vector.load %arg16[%c0_204, %c0_205] : memref<64x128xf32, #tpu.memory_space<vmem>>, vector<64x128xf32>
    tpu.vector_store %arg16[%c0_204, %c0_205], %729 {strides = array<i32>} : memref<64x128xf32, #tpu.memory_space<vmem>>, vector<64x128xf32>,
    return
  }
  func.func @transform_0(%arg0: i32) -> (i32, i32) {
    %c0_i32 = arith.constant 0 : i32
    %c0_i32_0 = arith.constant 0 : i32
    %c0_i32_1 = arith.constant 0 : i32
    return %c0_i32, %c0_i32_0 : i32, i32
  }
  func.func @transform_1(%arg0: i32) -> (i32, i32) {
    %c0_i32 = arith.constant 0 : i32
    %c0_i32_0 = arith.constant 0 : i32
    %c0_i32_1 = arith.constant 0 : i32
    return %c0_i32, %c0_i32_0 : i32, i32
  }
  func.func @transform_2(%arg0: i32) -> (i32, i32) {
    %c0_i32 = arith.constant 0 : i32
    %c0_i32_0 = arith.constant 0 : i32
    %c0_i32_1 = arith.constant 0 : i32
    return %c0_i32, %c0_i32_0 : i32, i32
  }
  func.func @transform_3(%arg0: i32) -> (i32, i32) {
    %c0_i32 = arith.constant 0 : i32
    %c0_i32_0 = arith.constant 0 : i32
    %c0_i32_1 = arith.constant 0 : i32
    return %c0_i32, %c0_i32_0 : i32, i32
  }
  func.func @transform_4(%arg0: i32) -> (i32, i32) {
    %c0_i32 = arith.constant 0 : i32
    %c0_i32_0 = arith.constant 0 : i32
    %c0_i32_1 = arith.constant 0 : i32
    return %c0_i32, %c0_i32_0 : i32, i32
  }
  func.func @transform_5(%arg0: i32) -> (i32, i32) {
    %c0_i32 = arith.constant 0 : i32
    %c0_i32_0 = arith.constant 0 : i32
    %c0_i32_1 = arith.constant 0 : i32
    return %c0_i32, %c0_i32_0 : i32, i32
  }
  func.func @transform_6(%arg0: i32) -> (i32, i32) {
    %c0_i32 = arith.constant 0 : i32
    %c0_i32_0 = arith.constant 0 : i32
    %c0_i32_1 = arith.constant 0 : i32
    return %c0_i32, %c0_i32_0 : i32, i32
  }
  func.func @transform_7(%arg0: i32) -> (i32, i32) {
    %c0_i32 = arith.constant 0 : i32
    %c0_i32_0 = arith.constant 0 : i32
    %c0_i32_1 = arith.constant 0 : i32
    return %c0_i32, %c0_i32_0 : i32, i32
  }
  func.func @transform_8(%arg0: i32) -> (i32, i32) {
    %c0_i32 = arith.constant 0 : i32
    %c0_i32_0 = arith.constant 0 : i32
    %c0_i32_1 = arith.constant 0 : i32
    return %c0_i32, %c0_i32_0 : i32, i32
  }
  func.func @transform_9(%arg0: i32) -> (i32, i32) {
    %c0_i32 = arith.constant 0 : i32
    %c0_i32_0 = arith.constant 0 : i32
    %c0_i32_1 = arith.constant 0 : i32
    return %c0_i32, %c0_i32_0 : i32, i32
  }
  func.func @transform_10(%arg0: i32) -> (i32, i32) {
    %c0_i32 = arith.constant 0 : i32
    %c0_i32_0 = arith.constant 0 : i32
    %c0_i32_1 = arith.constant 0 : i32
    return %c0_i32, %c0_i32_0 : i32, i32
  }
  func.func @transform_11(%arg0: i32) -> (i32, i32) {
    %c0_i32 = arith.constant 0 : i32
    %c0_i32_0 = arith.constant 0 : i32
    %c0_i32_1 = arith.constant 0 : i32
    return %c0_i32, %c0_i32_0 : i32, i32
  }
  func.func @transform_12(%arg0: i32) -> (i32, i32) {
    %c0_i32 = arith.constant 0 : i32
    %c0_i32_0 = arith.constant 0 : i32
    %c0_i32_1 = arith.constant 0 : i32
    return %c0_i32, %c0_i32_0 : i32, i32
  }
  func.func @transform_13(%arg0: i32) -> (i32, i32) {
    %c0_i32 = arith.constant 0 : i32
    %c0_i32_0 = arith.constant 0 : i32
    %c0_i32_1 = arith.constant 0 : i32
    return %c0_i32, %c0_i32_0 : i32, i32
  }
  func.func @transform_14(%arg0: i32) -> (i32, i32) {
    %c0_i32 = arith.constant 0 : i32
    %c0_i32_0 = arith.constant 0 : i32
    %c0_i32_1 = arith.constant 0 : i32
    return %c0_i32, %c0_i32_0 : i32, i32
  }
  func.func @transform_15(%arg0: i32) -> (i32, i32) {
    %c0_i32 = arith.constant 0 : i32
    %c0_i32_0 = arith.constant 0 : i32
    %c0_i32_1 = arith.constant 0 : i32
    return %c0_i32, %c0_i32_0 : i32, i32
  }
}

</mosaic_0001>

<llo_original>
// kernel: _lambda_.1
$region0: #{_lambda_.1}
  #allocation0 [shape = 'u32[]', space=smem, size = 0x4, offset = 0x4, fixed_abs, tag = 'smem constant byte address 0x4 - core index']
  #allocation1 [shape = 'u32[144,128]{1,0:T(1,128)}', space=vmem, size = 0x12000, scoped, tag = 'internal scratch']
  #allocation2 [shape = 'f32[64,128]{1,0:T(8,128)}', space=vmem, size = 0x8000, scoped, tag = 'scratch operand']
  #allocation3 [shape = 'f32[64,128]{1,0:T(8,128)}', space=vmem, size = 0x8000, scoped, tag = 'scratch operand']
  #allocation4 [shape = 'f32[64,64]{1,0:T(8,128)}', space=vmem, size = 0x8000, scoped, tag = 'scratch operand']
  %s0 = inlined_call_operand.vmem [shape: f32[64,16], index: 0, kind: input, shape index: {}]
  %s1 = inlined_call_operand.vmem [shape: f32[16,128], index: 1, kind: input, shape index: {}]
  %s2 = inlined_call_operand.vmem [shape: f32[16,128], index: 2, kind: input, shape index: {}]
  %s3 = inlined_call_operand.vmem [shape: f32[1,128], index: 3, kind: input, shape index: {}]
  %s4 = inlined_call_operand.vmem [shape: f32[1,128], index: 4, kind: input, shape index: {}]
  %s5 = inlined_call_operand.vmem [shape: f32[64,256], index: 5, kind: input, shape index: {}]
  %s6 = inlined_call_operand.vmem [shape: f32[64,128], index: 6, kind: input, shape index: {}]
  %s7 = inlined_call_operand.vmem [shape: f32[64,128], index: 7, kind: input, shape index: {}]
  %s8 = inlined_call_operand.vmem [shape: f32[1,128], index: 8, kind: input, shape index: {}]
  %s9 = inlined_call_operand.vmem [shape: f32[1,128], index: 9, kind: input, shape index: {}]
  %s10 = inlined_call_operand.vmem [shape: f32[64,256], index: 10, kind: input, shape index: {}]
  %s11 = inlined_call_operand.vmem [shape: f32[1,64], index: 11, kind: input, shape index: {}]
  %s12 = inlined_call_operand.vmem [shape: f32[1,64], index: 12, kind: input, shape index: {}]
  %s13 = inlined_call_operand.vmem [shape: f32[64,128], index: 13, kind: input, shape index: {}]
  %s14 = inlined_call_operand.vmem [shape: f32[1,128], index: 14, kind: input, shape index: {}]
  %s15 = inlined_call_operand.vmem [shape: f32[64,128], index: 15, kind: output, shape index: {}]
  %s16 = sld [smem:[#allocation0]]
  $region70: #{_lambda_.1} parent=0
    _
  %s18 = ssub.s32 1, %s16
  %s19 = scalar_select 0, %s18, %s16
  // Predicated region
  $region2: #{_lambda_.1} parent=0 // pred_check
    _
  $region3: #{_lambda_.1} parent=0 // pred_check_branch
    %21 = sbr.rel (0) target = $region5
  $region4: #{_lambda_.1} parent=0 // pred_region
    _
  $region5: #{_lambda_.1} parent=0 // pred_fallthru
    _
  // Predicated region
  $region6: #{_lambda_.1} parent=0 // pred_check
    _
  $region7: #{_lambda_.1} parent=0 // pred_check_branch
    %23 = sbr.rel (0) target = $region9
  $region8: #{_lambda_.1} parent=0 // pred_region
    _
  $region9: #{_lambda_.1} parent=0 // pred_fallthru
    _
  // Predicated region
  $region10: #{_lambda_.1} parent=0 // pred_check
    _
  $region11: #{_lambda_.1} parent=0 // pred_check_branch
    %25 = sbr.rel (0) target = $region13
  $region12: #{_lambda_.1} parent=0 // pred_region
    _
  $region13: #{_lambda_.1} parent=0 // pred_fallthru
    _
  // Predicated region
  $region14: #{_lambda_.1} parent=0 // pred_check
    _
  $region15: #{_lambda_.1} parent=0 // pred_check_branch
    %27 = sbr.rel (0) target = $region17
  $region16: #{_lambda_.1} parent=0 // pred_region
    _
  $region17: #{_lambda_.1} parent=0 // pred_fallthru
    _
  // Predicated region
  $region18: #{_lambda_.1} parent=0 // pred_check
    _
  $region19: #{_lambda_.1} parent=0 // pred_check_branch
    %29 = sbr.rel (0) target = $region21
  $region20: #{_lambda_.1} parent=0 // pred_region
    _
  $region21: #{_lambda_.1} parent=0 // pred_fallthru
    _
  // Predicated region
  $region22: #{_lambda_.1} parent=0 // pred_check
    _
  $region23: #{_lambda_.1} parent=0 // pred_check_branch
    %31 = sbr.rel (0) target = $region25
  $region24: #{_lambda_.1} parent=0 // pred_region
    _
  $region25: #{_lambda_.1} parent=0 // pred_fallthru
    _
  // Predicated region
  $region26: #{_lambda_.1} parent=0 // pred_check
    _
  $region27: #{_lambda_.1} parent=0 // pred_check_branch
    %33 = sbr.rel (0) target = $region29
  $region28: #{_lambda_.1} parent=0 // pred_region
    _
  $region29: #{_lambda_.1} parent=0 // pred_fallthru
    _
  // Predicated region
  $region30: #{_lambda_.1} parent=0 // pred_check
    _
  $region31: #{_lambda_.1} parent=0 // pred_check_branch
    %35 = sbr.rel (0) target = $region33
  $region32: #{_lambda_.1} parent=0 // pred_region
    _
  $region33: #{_lambda_.1} parent=0 // pred_fallthru
    _
  // Predicated region
  $region34: #{_lambda_.1} parent=0 // pred_check
    _
  $region35: #{_lambda_.1} parent=0 // pred_check_branch
    %37 = sbr.rel (0) target = $region37
  $region36: #{_lambda_.1} parent=0 // pred_region
    _
  $region37: #{_lambda_.1} parent=0 // pred_fallthru
    _
  // Predicated region
  $region38: #{_lambda_.1} parent=0 // pred_check
    _
  $region39: #{_lambda_.1} parent=0 // pred_check_branch
    %39 = sbr.rel (0) target = $region41
  $region40: #{_lambda_.1} parent=0 // pred_region
    _
  $region41: #{_lambda_.1} parent=0 // pred_fallthru
    _
  // Predicated region
  $region42: #{_lambda_.1} parent=0 // pred_check
    _
  $region43: #{_lambda_.1} parent=0 // pred_check_branch
    %41 = sbr.rel (0) target = $region45
  $region44: #{_lambda_.1} parent=0 // pred_region
    _
  $region45: #{_lambda_.1} parent=0 // pred_fallthru
    _
  // Predicated region
  $region46: #{_lambda_.1} parent=0 // pred_check
    _
  $region47: #{_lambda_.1} parent=0 // pred_check_branch
    %43 = sbr.rel (0) target = $region49
  $region48: #{_lambda_.1} parent=0 // pred_region
    _
  $region49: #{_lambda_.1} parent=0 // pred_fallthru
    _
  // Predicated region
  $region50: #{_lambda_.1} parent=0 // pred_check
    _
  $region51: #{_lambda_.1} parent=0 // pred_check_branch
    %45 = sbr.rel (0) target = $region53
  $region52: #{_lambda_.1} parent=0 // pred_region
    _
  $region53: #{_lambda_.1} parent=0 // pred_fallthru
    _
  // Predicated region
  $region54: #{_lambda_.1} parent=0 // pred_check
    _
  $region55: #{_lambda_.1} parent=0 // pred_check_branch
    %47 = sbr.rel (0) target = $region57
  $region56: #{_lambda_.1} parent=0 // pred_region
    _
  $region57: #{_lambda_.1} parent=0 // pred_fallthru
    _
  // Predicated region
  $region58: #{_lambda_.1} parent=0 // pred_check
    _
  $region59: #{_lambda_.1} parent=0 // pred_check_branch
    %49 = sbr.rel (0) target = $region61
  $region60: #{_lambda_.1} parent=0 // pred_region
    _
  $region61: #{_lambda_.1} parent=0 // pred_fallthru
    _
  %v50 = vld [vmem:[%s0] sm:$0xff]
  %v51 = vld [vmem:[%s0 + $0x8] sm:$0xff]
  %v52 = vld [vmem:[%s0 + $0x10] sm:$0xff]
  %v53 = vld [vmem:[%s0 + $0x18] sm:$0xff]
  %v54 = vld [vmem:[%s0 + $0x20] sm:$0xff]
  %v55 = vld [vmem:[%s0 + $0x28] sm:$0xff]
  %v56 = vld [vmem:[%s0 + $0x30] sm:$0xff]
  %v57 = vld [vmem:[%s0 + $0x38] sm:$0xff]
  %v58 = vld [vmem:[%s1] sm:$0xff]
  %v59 = vld [vmem:[%s1 + $0x8] sm:$0xff]
  %v60 = vld [vmem:[%s3] sm:$0x1]
  %v62 = vlaneseq
  %v63 = vshrl.u32 %v62, 7
  %v64 = vsub.s32 0, %v63
  %v65 = vrot.slane %v60, %v64
  %vm67 = vcmask 130048
  %v69 = vsel %vm67, %v50, 0
  %v72 = vsel %vm67, %v51, 0
  %v75 = vsel %vm67, %v52, 0
  %v78 = vsel %vm67, %v53, 0
  %v81 = vsel %vm67, %v54, 0
  %v84 = vsel %vm67, %v55, 0
  %v87 = vsel %vm67, %v56, 0
  %v90 = vsel %vm67, %v57, 0
  %92 = vmatprep.subr.mxu0 0.0
  %93 = vmatpush1.msra.mxu0 %v58
  %94 = vmatprep.subr.mxu0 0.0
  %95 = vmatpush1.msra.mxu0 %v59
  %96 = vmatprep.subr.mxu0 0.0
  %97 = vmatpush1.msra.mxu0 0.0
  %98 = vmatprep.subr.mxu0 0.0
  %99 = vmatpush1.msra.mxu0 0.0
  %100 = vmatprep.subr.mxu0 0.0
  %101 = vmatpush1.msra.mxu0 0.0
  %102 = vmatprep.subr.mxu0 0.0
  %103 = vmatpush1.msra.mxu0 0.0
  %104 = vmatprep.subr.mxu0 0.0
  %105 = vmatpush1.msra.mxu0 0.0
  %106 = vmatprep.subr.mxu0 0.0
  %107 = vmatpush1.msra.mxu0 0.0
  %108 = vmatprep.subr.mxu0 0.0
  %109 = vmatpush1.msra.mxu0 0.0
  %110 = vmatprep.subr.mxu0 0.0
  %111 = vmatpush1.msra.mxu0 0.0
  %112 = vmatprep.subr.mxu0 0.0
  %113 = vmatpush1.msra.mxu0 0.0
  %114 = vmatprep.subr.mxu0 0.0
  %115 = vmatpush1.msra.mxu0 0.0
  %116 = vmatprep.subr.mxu0 0.0
  %117 = vmatpush1.msra.mxu0 0.0
  %118 = vmatprep.subr.mxu0 0.0
  %119 = vmatpush1.msra.mxu0 0.0
  %120 = vmatprep.subr.mxu0 0.0
  %121 = vmatpush1.msra.mxu0 0.0
  %122 = vmatprep.subr.mxu0 0.0
  %123 = vmatpush1.msra.mxu0 0.0
  %124 = vmatprep.subr.mxu0 0.0
  %125 = vmatpush1.msra.mxu0 0.0
  %126 = vmatprep.subr.mxu0 0.0
  %127 = vmatpush1.msra.mxu0 0.0
  %128 = vmatprep.subr.mxu0 0.0
  %129 = vmatpush1.msra.mxu0 0.0
  %130 = vmatprep.subr.mxu0 0.0
  %131 = vmatpush1.msra.mxu0 0.0
  %132 = vmatprep.subr.mxu0 0.0
  %133 = vmatpush1.msra.mxu0 0.0
  %134 = vmatprep.subr.mxu0 0.0
  %135 = vmatpush1.msra.mxu0 0.0
  %136 = vmatprep.subr.mxu0 0.0
  %137 = vmatpush1.msra.mxu0 0.0
  %138 = vmatprep.subr.mxu0 0.0
  %139 = vmatpush1.msra.mxu0 0.0
  %140 = vmatprep.subr.mxu0 0.0
  %141 = vmatpush1.msra.mxu0 0.0
  %142 = vmatprep.subr.mxu0 0.0
  %143 = vmatpush1.msra.mxu0 0.0
  %144 = vmatprep.subr.mxu0 0.0
  %145 = vmatpush1.msra.mxu0 0.0
  %146 = vmatprep.subr.mxu0 0.0
  %147 = vmatpush1.msra.mxu0 0.0
  %148 = vmatprep.subr.mxu0 0.0
  %149 = vmatpush1.msra.mxu0 0.0
  %150 = vmatprep.subr.mxu0 0.0
  %151 = vmatpush1.msra.mxu0 0.0
  %152 = vmatprep.subr.mxu0 0.0
  %153 = vmatpush1.msra.mxu0 0.0
  %154 = vmatprep.subr.mxu0 0.0
  %155 = vmatpush1.msra.mxu0 0.0
  %156 = vmatprep.mubr.f32.mxu0 0.0
  %157 = vmatmul.mubr.f32.gmra.mrb[0].mxu0 %v69
  %v158 = vpop.f32.mrb[0].mxu0
  %v159 = vadd.f32 %v65, %v158
  %v160 = vpop.f32.mrb[0].mxu0
  %161 = vmatprep.mubr.f32.mxu0 0.0
  %162 = vmatmul.mubr.f32.gmra.mrb[0].mxu0 %v72
  %v163 = vpop.f32.mrb[0].mxu0
  %v164 = vadd.f32 %v65, %v163
  %v165 = vpop.f32.mrb[0].mxu0
  %166 = vmatprep.mubr.f32.mxu0 0.0
  %167 = vmatmul.mubr.f32.gmra.mrb[0].mxu0 %v75
  %v168 = vpop.f32.mrb[0].mxu0
  %v169 = vadd.f32 %v65, %v168
  %v170 = vpop.f32.mrb[0].mxu0
  %171 = vmatprep.mubr.f32.mxu0 0.0
  %172 = vmatmul.mubr.f32.gmra.mrb[0].mxu0 %v78
  %v173 = vpop.f32.mrb[0].mxu0
  %v174 = vadd.f32 %v65, %v173
  %v175 = vpop.f32.mrb[0].mxu0
  %176 = vmatprep.mubr.f32.mxu0 0.0
  %177 = vmatmul.mubr.f32.gmra.mrb[0].mxu0 %v81
  %v178 = vpop.f32.mrb[0].mxu0
  %v179 = vadd.f32 %v65, %v178
  %v180 = vpop.f32.mrb[0].mxu0
  %181 = vmatprep.mubr.f32.mxu0 0.0
  %182 = vmatmul.mubr.f32.gmra.mrb[0].mxu0 %v84
  %v183 = vpop.f32.mrb[0].mxu0
  %v184 = vadd.f32 %v65, %v183
  %v185 = vpop.f32.mrb[0].mxu0
  %186 = vmatprep.mubr.f32.mxu0 0.0
  %187 = vmatmul.mubr.f32.gmra.mrb[0].mxu0 %v87
  %v188 = vpop.f32.mrb[0].mxu0
  %v189 = vadd.f32 %v65, %v188
  %v190 = vpop.f32.mrb[0].mxu0
  %191 = vmatprep.mubr.f32.mxu0 0.0
  %192 = vmatmul.mubr.f32.gmra.mrb[0].mxu0 %v90
  %v193 = vpop.f32.mrb[0].mxu0
  %v194 = vadd.f32 %v65, %v193
  %v195 = vpop.f32.mrb[0].mxu0
  %196 = vdwg.mxu0
  %197 = vst [vmem:[#allocation2] sm:$0xff] %v159
  %198 = vst [vmem:[#allocation2 + $0x8] sm:$0xff] %v164
  %199 = vst [vmem:[#allocation2 + $0x10] sm:$0xff] %v169
  %200 = vst [vmem:[#allocation2 + $0x18] sm:$0xff] %v174
  %201 = vst [vmem:[#allocation2 + $0x20] sm:$0xff] %v179
  %202 = vst [vmem:[#allocation2 + $0x28] sm:$0xff] %v184
  %203 = vst [vmem:[#allocation2 + $0x30] sm:$0xff] %v189
  %204 = vst [vmem:[#allocation2 + $0x38] sm:$0xff] %v194
  %v205 = vld [vmem:[%s2] sm:$0xff]
  %v206 = vld [vmem:[%s2 + $0x8] sm:$0xff]
  %v207 = vld [vmem:[%s4] sm:$0x1]
  %v209 = vlaneseq
  %v210 = vshrl.u32 %v209, 7
  %v211 = vsub.s32 0, %v210
  %v212 = vrot.slane %v207, %v211
  %214 = vmatprep.subr.mxu0 0.0
  %215 = vmatpush1.msra.mxu0 %v205
  %216 = vmatprep.subr.mxu0 0.0
  %217 = vmatpush1.msra.mxu0 %v206
  %218 = vmatprep.subr.mxu0 0.0
  %219 = vmatpush1.msra.mxu0 0.0
  %220 = vmatprep.subr.mxu0 0.0
  %221 = vmatpush1.msra.mxu0 0.0
  %222 = vmatprep.subr.mxu0 0.0
  %223 = vmatpush1.msra.mxu0 0.0
  %224 = vmatprep.subr.mxu0 0.0
  %225 = vmatpush1.msra.mxu0 0.0
  %226 = vmatprep.subr.mxu0 0.0
  %227 = vmatpush1.msra.mxu0 0.0
  %228 = vmatprep.subr.mxu0 0.0
  %229 = vmatpush1.msra.mxu0 0.0
  %230 = vmatprep.subr.mxu0 0.0
  %231 = vmatpush1.msra.mxu0 0.0
  %232 = vmatprep.subr.mxu0 0.0
  %233 = vmatpush1.msra.mxu0 0.0
  %234 = vmatprep.subr.mxu0 0.0
  %235 = vmatpush1.msra.mxu0 0.0
  %236 = vmatprep.subr.mxu0 0.0
  %237 = vmatpush1.msra.mxu0 0.0
  %238 = vmatprep.subr.mxu0 0.0
  %239 = vmatpush1.msra.mxu0 0.0
  %240 = vmatprep.subr.mxu0 0.0
  %241 = vmatpush1.msra.mxu0 0.0
  %242 = vmatprep.subr.mxu0 0.0
  %243 = vmatpush1.msra.mxu0 0.0
  %244 = vmatprep.subr.mxu0 0.0
  %245 = vmatpush1.msra.mxu0 0.0
  %246 = vmatprep.subr.mxu0 0.0
  %247 = vmatpush1.msra.mxu0 0.0
  %248 = vmatprep.subr.mxu0 0.0
  %249 = vmatpush1.msra.mxu0 0.0
  %250 = vmatprep.subr.mxu0 0.0
  %251 = vmatpush1.msra.mxu0 0.0
  %252 = vmatprep.subr.mxu0 0.0
  %253 = vmatpush1.msra.mxu0 0.0
  %254 = vmatprep.subr.mxu0 0.0
  %255 = vmatpush1.msra.mxu0 0.0
  %256 = vmatprep.subr.mxu0 0.0
  %257 = vmatpush1.msra.mxu0 0.0
  %258 = vmatprep.subr.mxu0 0.0
  %259 = vmatpush1.msra.mxu0 0.0
  %260 = vmatprep.subr.mxu0 0.0
  %261 = vmatpush1.msra.mxu0 0.0
  %262 = vmatprep.subr.mxu0 0.0
  %263 = vmatpush1.msra.mxu0 0.0
  %264 = vmatprep.subr.mxu0 0.0
  %265 = vmatpush1.msra.mxu0 0.0
  %266 = vmatprep.subr.mxu0 0.0
  %267 = vmatpush1.msra.mxu0 0.0
  %268 = vmatprep.subr.mxu0 0.0
  %269 = vmatpush1.msra.mxu0 0.0
  %270 = vmatprep.subr.mxu0 0.0
  %271 = vmatpush1.msra.mxu0 0.0
  %272 = vmatprep.subr.mxu0 0.0
  %273 = vmatpush1.msra.mxu0 0.0
  %274 = vmatprep.subr.mxu0 0.0
  %275 = vmatpush1.msra.mxu0 0.0
  %276 = vmatprep.subr.mxu0 0.0
  %277 = vmatpush1.msra.mxu0 0.0
  %278 = vmatprep.mubr.f32.mxu0 0.0
  %279 = vmatmul.mubr.f32.gmra.mrb[0].mxu0 %v69
  %v280 = vpop.f32.mrb[0].mxu0
  %v281 = vadd.f32 %v212, %v280
  %v282 = vpop.f32.mrb[0].mxu0
  %283 = vmatprep.mubr.f32.mxu0 0.0
  %284 = vmatmul.mubr.f32.gmra.mrb[0].mxu0 %v72
  %v285 = vpop.f32.mrb[0].mxu0
  %v286 = vadd.f32 %v212, %v285
  %v287 = vpop.f32.mrb[0].mxu0
  %288 = vmatprep.mubr.f32.mxu0 0.0
  %289 = vmatmul.mubr.f32.gmra.mrb[0].mxu0 %v75
  %v290 = vpop.f32.mrb[0].mxu0
  %v291 = vadd.f32 %v212, %v290
  %v292 = vpop.f32.mrb[0].mxu0
  %293 = vmatprep.mubr.f32.mxu0 0.0
  %294 = vmatmul.mubr.f32.gmra.mrb[0].mxu0 %v78
  %v295 = vpop.f32.mrb[0].mxu0
  %v296 = vadd.f32 %v212, %v295
  %v297 = vpop.f32.mrb[0].mxu0
  %298 = vmatprep.mubr.f32.mxu0 0.0
  %299 = vmatmul.mubr.f32.gmra.mrb[0].mxu0 %v81
  %v300 = vpop.f32.mrb[0].mxu0
  %v301 = vadd.f32 %v212, %v300
  %v302 = vpop.f32.mrb[0].mxu0
  %303 = vmatprep.mubr.f32.mxu0 0.0
  %304 = vmatmul.mubr.f32.gmra.mrb[0].mxu0 %v84
  %v305 = vpop.f32.mrb[0].mxu0
  %v306 = vadd.f32 %v212, %v305
  %v307 = vpop.f32.mrb[0].mxu0
  %308 = vmatprep.mubr.f32.mxu0 0.0
  %309 = vmatmul.mubr.f32.gmra.mrb[0].mxu0 %v87
  %v310 = vpop.f32.mrb[0].mxu0
  %v311 = vadd.f32 %v212, %v310
  %v312 = vpop.f32.mrb[0].mxu0
  %313 = vmatprep.mubr.f32.mxu0 0.0
  %314 = vmatmul.mubr.f32.gmra.mrb[0].mxu0 %v90
  %v315 = vpop.f32.mrb[0].mxu0
  %v316 = vadd.f32 %v212, %v315
  %v317 = vpop.f32.mrb[0].mxu0
  %318 = vdwg.mxu0
  %319 = vst [vmem:[#allocation3] sm:$0xff] %v281
  %320 = vst [vmem:[#allocation3 + $0x8] sm:$0xff] %v286
  %321 = vst [vmem:[#allocation3 + $0x10] sm:$0xff] %v291
  %322 = vst [vmem:[#allocation3 + $0x18] sm:$0xff] %v296
  %323 = vst [vmem:[#allocation3 + $0x20] sm:$0xff] %v301
  %324 = vst [vmem:[#allocation3 + $0x28] sm:$0xff] %v306
  %325 = vst [vmem:[#allocation3 + $0x30] sm:$0xff] %v311
  %326 = vst [vmem:[#allocation3 + $0x38] sm:$0xff] %v316
  %v327 = vld [vmem:[%s5] sm:$0xff]
  %v328 = vld [vmem:[%s5 + $0x8] sm:$0xff]
  %v329 = vld [vmem:[%s5 + $0x10] sm:$0xff]
  %v330 = vld [vmem:[%s5 + $0x18] sm:$0xff]
  %v331 = vld [vmem:[%s5 + $0x20] sm:$0xff]
  %v332 = vld [vmem:[%s5 + $0x28] sm:$0xff]
  %v333 = vld [vmem:[%s5 + $0x30] sm:$0xff]
  %v334 = vld [vmem:[%s5 + $0x38] sm:$0xff]
  %v335 = vld [vmem:[%s5 + $0x40] sm:$0xff]
  %v336 = vld [vmem:[%s5 + $0x48] sm:$0xff]
  %v337 = vld [vmem:[%s5 + $0x50] sm:$0xff]
  %v338 = vld [vmem:[%s5 + $0x58] sm:$0xff]
  %v339 = vld [vmem:[%s5 + $0x60] sm:$0xff]
  %v340 = vld [vmem:[%s5 + $0x68] sm:$0xff]
  %v341 = vld [vmem:[%s5 + $0x70] sm:$0xff]
  %v342 = vld [vmem:[%s5 + $0x78] sm:$0xff]
  %v343 = vld [vmem:[#allocation2] sm:$0xff]
  %s344 = scalar_lea.vmem [#allocation3], 56
  %v345 = vld [vmem:[%s344] sm:$0xff]
  %vm346 = vcmask 523264
  %v348 = vsel %vm346, 0.0, 0
  %350 = vmatprep.subr.mxu0 %v328
  %351 = vmatpush1.msra.mxu0 %v327
  %352 = vmatprep.subr.mxu0 %v330
  %353 = vmatpush1.msra.mxu0 %v329
  %354 = vmatprep.subr.mxu0 %v332
  %355 = vmatpush1.msra.mxu0 %v331
  %356 = vmatprep.subr.mxu0 %v334
  %357 = vmatpush1.msra.mxu0 %v333
  %358 = vmatprep.subr.mxu0 %v336
  %359 = vmatpush1.msra.mxu0 %v335
  %360 = vmatprep.subr.mxu0 %v338
  %361 = vmatpush1.msra.mxu0 %v337
  %362 = vmatprep.subr.mxu0 %v340
  %363 = vmatpush1.msra.mxu0 %v339
  %364 = vmatprep.subr.mxu0 %v342
  %365 = vmatpush1.msra.mxu0 %v341
  %366 = vmatprep.subr.mxu0 0.0
  %367 = vmatpush1.msra.mxu0 0.0
  %368 = vmatprep.subr.mxu0 0.0
  %369 = vmatpush1.msra.mxu0 0.0
  %370 = vmatprep.subr.mxu0 0.0
  %371 = vmatpush1.msra.mxu0 0.0
  %372 = vmatprep.subr.mxu0 0.0
  %373 = vmatpush1.msra.mxu0 0.0
  %374 = vmatprep.subr.mxu0 0.0
  %375 = vmatpush1.msra.mxu0 0.0
  %376 = vmatprep.subr.mxu0 0.0
  %377 = vmatpush1.msra.mxu0 0.0
  %378 = vmatprep.subr.mxu0 0.0
  %379 = vmatpush1.msra.mxu0 0.0
  %380 = vmatprep.subr.mxu0 0.0
  %381 = vmatpush1.msra.mxu0 0.0
  %382 = vmatprep.subr.mxu0 0.0
  %383 = vmatpush1.msra.mxu0 0.0
  %384 = vmatprep.subr.mxu0 0.0
  %385 = vmatpush1.msra.mxu0 0.0
  %386 = vmatprep.subr.mxu0 0.0
  %387 = vmatpush1.msra.mxu0 0.0
  %388 = vmatprep.subr.mxu0 0.0
  %389 = vmatpush1.msra.mxu0 0.0
  %390 = vmatprep.subr.mxu0 0.0
  %391 = vmatpush1.msra.mxu0 0.0
  %392 = vmatprep.subr.mxu0 0.0
  %393 = vmatpush1.msra.mxu0 0.0
  %394 = vmatprep.subr.mxu0 0.0
  %395 = vmatpush1.msra.mxu0 0.0
  %396 = vmatprep.subr.mxu0 0.0
  %397 = vmatpush1.msra.mxu0 0.0
  %398 = vmatprep.subr.mxu0 0.0
  %399 = vmatpush1.msra.mxu0 0.0
  %400 = vmatprep.subr.mxu0 0.0
  %401 = vmatpush1.msra.mxu0 0.0
  %402 = vmatprep.subr.mxu0 0.0
  %403 = vmatpush1.msra.mxu0 0.0
  %404 = vmatprep.subr.mxu0 0.0
  %405 = vmatpush1.msra.mxu0 0.0
  %406 = vmatprep.subr.mxu0 0.0
  %407 = vmatpush1.msra.mxu0 0.0
  %408 = vmatprep.subr.mxu0 0.0
  %409 = vmatpush1.msra.mxu0 0.0
  %410 = vmatprep.subr.mxu0 0.0
  %411 = vmatpush1.msra.mxu0 0.0
  %412 = vmatprep.subr.mxu0 0.0
  %413 = vmatpush1.msra.mxu0 0.0
  %414 = vmatprep.mubr.f32.mxu0 0.0
  %415 = vmatmul.mubr.f32.gmra.mrb[0].mxu0 %v348
  %v416 = vpop.f32.mrb[0].mxu0
  %v417 = vadd.f32 0.0, %v416
  %v418 = vpop.f32.mrb[0].mxu0
  %v419 = vadd.f32 0.0, %v418
  %420 = vdwg.mxu0
  %v421 = vadd.f32 %v343, %v417
  %v422 = vadd.f32 %v345, %v419
  %v423 = vxor.u32 %v421, 2147483648
  %v424 = vxor.u32 %v422, 2147483648
  %v425 = vmul.f32 %v423, 1.442695
  %v426 = vpow.pop %v425
  %v427 = vmul.f32 %v424, 1.442695
  %v428 = vpow.pop %v427
  %v429 = vadd.f32 %v426, 1.0
  %v430 = vadd.f32 %v428, 1.0
  %v431 = vrcp.pop %v429
  %v432 = vmul.f32 1.0, %v431
  %v433 = vrcp.pop %v430
  %v434 = vmul.f32 1.0, %v433
  %v435 = vtanh.pop %v421
  %v436 = vtanh.pop %v422
  %v437 = vmul.f32 %v432, 0.0
  %439 = vrot.lane.b32.xlu0 %v435, 64
  %v440 = vpop.permute.xlu0 %439
  %v442 = vmul.f32 %v432, %v440
  %444 = vrot.lane.b32.xlu0 %v442, 32
  %v445 = vpop.permute.xlu0 %444
  %v447 = vadd.f32 %v437, %v445
  %v448 = vmul.f32 %v434, 0.0
  %450 = vrot.lane.b32.xlu0 %v436, 64
  %v451 = vpop.permute.xlu0 %450
  %v453 = vmul.f32 %v434, %v451
  %455 = vrot.lane.b32.xlu0 %v453, 32
  %v456 = vpop.permute.xlu0 %455
  %v458 = vadd.f32 %v448, %v456
  %v459 = vtanh.pop %v447
  %461 = vrot.lane.b32.xlu0 %v459, 64
  %v462 = vpop.permute.xlu0 %461
  %v464 = vmul.f32 %v432, %v462
  %v465 = vtanh.pop %v458
  %467 = vrot.lane.b32.xlu0 %v465, 64
  %v468 = vpop.permute.xlu0 %467
  %v470 = vmul.f32 %v434, %v468
  %472 = vrot.lane.b32.xlu0 %v464, 32
  %v473 = vpop.permute.xlu0 %472
  %vm475 = vcmask 261120
  %476 = vst.msk [vmem:[#allocation4] sm:$0xff] %vm475, %v473
  %478 = vrot.lane.b32.xlu0 %v470, 64
  %v479 = vpop.permute.xlu0 %478
  %s481 = scalar_lea.vmem [#allocation4], 56
  %vm482 = vcmask 523520
  %483 = vst.msk [vmem:[%s481] sm:$0xff] %vm482, %v479
  %s484 = scalar_lea.vmem [#allocation2], 8
  %v485 = vld [vmem:[%s484] sm:$0xff]
  %s486 = scalar_lea.vmem [#allocation3], 48
  %v487 = vld [vmem:[%s486] sm:$0xff]
  %v488 = vsel %vm475, %v473, %v479
  %v490 = vsel %vm346, %v488, 0
  %492 = vmatprep.subr.mxu0 %v328
  %493 = vmatpush1.msra.mxu0 %v327
  %494 = vmatprep.subr.mxu0 %v330
  %495 = vmatpush1.msra.mxu0 %v329
  %496 = vmatprep.subr.mxu0 %v332
  %497 = vmatpush1.msra.mxu0 %v331
  %498 = vmatprep.subr.mxu0 %v334
  %499 = vmatpush1.msra.mxu0 %v333
  %500 = vmatprep.subr.mxu0 %v336
  %501 = vmatpush1.msra.mxu0 %v335
  %502 = vmatprep.subr.mxu0 %v338
  %503 = vmatpush1.msra.mxu0 %v337
  %504 = vmatprep.subr.mxu0 %v340
  %505 = vmatpush1.msra.mxu0 %v339
  %506 = vmatprep.subr.mxu0 %v342
  %507 = vmatpush1.msra.mxu0 %v341
  %508 = vmatprep.subr.mxu0 0.0
  %509 = vmatpush1.msra.mxu0 0.0
  %510 = vmatprep.subr.mxu0 0.0
  %511 = vmatpush1.msra.mxu0 0.0
  %512 = vmatprep.subr.mxu0 0.0
  %513 = vmatpush1.msra.mxu0 0.0
  %514 = vmatprep.subr.mxu0 0.0
  %515 = vmatpush1.msra.mxu0 0.0
  %516 = vmatprep.subr.mxu0 0.0
  %517 = vmatpush1.msra.mxu0 0.0
  %518 = vmatprep.subr.mxu0 0.0
  %519 = vmatpush1.msra.mxu0 0.0
  %520 = vmatprep.subr.mxu0 0.0
  %521 = vmatpush1.msra.mxu0 0.0
  %522 = vmatprep.subr.mxu0 0.0
  %523 = vmatpush1.msra.mxu0 0.0
  %524 = vmatprep.subr.mxu0 0.0
  %525 = vmatpush1.msra.mxu0 0.0
  %526 = vmatprep.subr.mxu0 0.0
  %527 = vmatpush1.msra.mxu0 0.0
  %528 = vmatprep.subr.mxu0 0.0
  %529 = vmatpush1.msra.mxu0 0.0
  %530 = vmatprep.subr.mxu0 0.0
  %531 = vmatpush1.msra.mxu0 0.0
  %532 = vmatprep.subr.mxu0 0.0
  %533 = vmatpush1.msra.mxu0 0.0
  %534 = vmatprep.subr.mxu0 0.0
  %535 = vmatpush1.msra.mxu0 0.0
  %536 = vmatprep.subr.mxu0 0.0
  %537 = vmatpush1.msra.mxu0 0.0
  %538 = vmatprep.subr.mxu0 0.0
  %539 = vmatpush1.msra.mxu0 0.0
  %540 = vmatprep.subr.mxu0 0.0
  %541 = vmatpush1.msra.mxu0 0.0
  %542 = vmatprep.subr.mxu0 0.0
  %543 = vmatpush1.msra.mxu0 0.0
  %544 = vmatprep.subr.mxu0 0.0
  %545 = vmatpush1.msra.mxu0 0.0
  %546 = vmatprep.subr.mxu0 0.0
  %547 = vmatpush1.msra.mxu0 0.0
  %548 = vmatprep.subr.mxu0 0.0
  %549 = vmatpush1.msra.mxu0 0.0
  %550 = vmatprep.subr.mxu0 0.0
  %551 = vmatpush1.msra.mxu0 0.0
  %552 = vmatprep.subr.mxu0 0.0
  %553 = vmatpush1.msra.mxu0 0.0
  %554 = vmatprep.subr.mxu0 0.0
  %555 = vmatpush1.msra.mxu0 0.0
  %556 = vmatprep.mubr.f32.mxu0 0.0
  %557 = vmatmul.mubr.f32.gmra.mrb[0].mxu0 %v490
  %v558 = vpop.f32.mrb[0].mxu0
  %v559 = vadd.f32 0.0, %v558
  %v560 = vpop.f32.mrb[0].mxu0
  %v561 = vadd.f32 0.0, %v560
  %562 = vdwg.mxu0
  %v563 = vadd.f32 %v485, %v559
  %v564 = vadd.f32 %v487, %v561
  %v565 = vxor.u32 %v563, 2147483648
  %v566 = vxor.u32 %v564, 2147483648
  %v567 = vmul.f32 %v565, 1.442695
  %v568 = vpow.pop %v567
  %v569 = vmul.f32 %v566, 1.442695
  %v570 = vpow.pop %v569
  %v571 = vadd.f32 %v568, 1.0
  %v572 = vadd.f32 %v570, 1.0
  %v573 = vrcp.pop %v571
  %v574 = vmul.f32 1.0, %v573
  %v575 = vrcp.pop %v572
  %v576 = vmul.f32 1.0, %v575
  %v577 = vtanh.pop %v563
  %v578 = vtanh.pop %v564
  %v579 = vmul.f32 %v574, %v447
  %581 = vrot.lane.b32.xlu0 %v577, 64
  %v582 = vpop.permute.xlu0 %581
  %v584 = vmul.f32 %v574, %v582
  %586 = vrot.lane.b32.xlu0 %v584, 32
  %v587 = vpop.permute.xlu0 %586
  %v589 = vadd.f32 %v579, %v587
  %v590 = vmul.f32 %v576, %v458
  %592 = vrot.lane.b32.xlu0 %v578, 64
  %v593 = vpop.permute.xlu0 %592
  %v595 = vmul.f32 %v576, %v593
  %597 = vrot.lane.b32.xlu0 %v595, 32
  %v598 = vpop.permute.xlu0 %597
  %v600 = vadd.f32 %v590, %v598
  %v601 = vtanh.pop %v589
  %603 = vrot.lane.b32.xlu0 %v601, 64
  %v604 = vpop.permute.xlu0 %603
  %v606 = vmul.f32 %v574, %v604
  %v607 = vtanh.pop %v600
  %609 = vrot.lane.b32.xlu0 %v607, 64
  %v610 = vpop.permute.xlu0 %609
  %v612 = vmul.f32 %v576, %v610
  %614 = vrot.lane.b32.xlu0 %v606, 32
  %v615 = vpop.permute.xlu0 %614
  %s617 = scalar_lea.vmem [#allocation4], 8
  %618 = vst.msk [vmem:[%s617] sm:$0xff] %vm475, %v615
  %620 = vrot.lane.b32.xlu0 %v612, 64
  %v621 = vpop.permute.xlu0 %620
  %s623 = scalar_lea.vmem [#allocation4], 48
  %624 = vst.msk [vmem:[%s623] sm:$0xff] %vm482, %v621
  %s625 = scalar_lea.vmem [#allocation2], 16
  %v626 = vld [vmem:[%s625] sm:$0xff]
  %s627 = scalar_lea.vmem [#allocation3], 40
  %v628 = vld [vmem:[%s627] sm:$0xff]
  %v629 = vsel %vm475, %v615, %v621
  %v631 = vsel %vm346, %v629, 0
  %633 = vmatprep.subr.mxu0 %v328
  %634 = vmatpush1.msra.mxu0 %v327
  %635 = vmatprep.subr.mxu0 %v330
  %636 = vmatpush1.msra.mxu0 %v329
  %637 = vmatprep.subr.mxu0 %v332
  %638 = vmatpush1.msra.mxu0 %v331
  %639 = vmatprep.subr.mxu0 %v334
  %640 = vmatpush1.msra.mxu0 %v333
  %641 = vmatprep.subr.mxu0 %v336
  %642 = vmatpush1.msra.mxu0 %v335
  %643 = vmatprep.subr.mxu0 %v338
  %644 = vmatpush1.msra.mxu0 %v337
  %645 = vmatprep.subr.mxu0 %v340
  %646 = vmatpush1.msra.mxu0 %v339
  %647 = vmatprep.subr.mxu0 %v342
  %648 = vmatpush1.msra.mxu0 %v341
  %649 = vmatprep.subr.mxu0 0.0
  %650 = vmatpush1.msra.mxu0 0.0
  %651 = vmatprep.subr.mxu0 0.0
  %652 = vmatpush1.msra.mxu0 0.0
  %653 = vmatprep.subr.mxu0 0.0
  %654 = vmatpush1.msra.mxu0 0.0
  %655 = vmatprep.subr.mxu0 0.0
  %656 = vmatpush1.msra.mxu0 0.0
  %657 = vmatprep.subr.mxu0 0.0
  %658 = vmatpush1.msra.mxu0 0.0
  %659 = vmatprep.subr.mxu0 0.0
  %660 = vmatpush1.msra.mxu0 0.0
  %661 = vmatprep.subr.mxu0 0.0
  %662 = vmatpush1.msra.mxu0 0.0
  %663 = vmatprep.subr.mxu0 0.0
  %664 = vmatpush1.msra.mxu0 0.0
  %665 = vmatprep.subr.mxu0 0.0
  %666 = vmatpush1.msra.mxu0 0.0
  %667 = vmatprep.subr.mxu0 0.0
  %668 = vmatpush1.msra.mxu0 0.0
  %669 = vmatprep.subr.mxu0 0.0
  %670 = vmatpush1.msra.mxu0 0.0
  %671 = vmatprep.subr.mxu0 0.0
  %672 = vmatpush1.msra.mxu0 0.0
  %673 = vmatprep.subr.mxu0 0.0
  %674 = vmatpush1.msra.mxu0 0.0
  %675 = vmatprep.subr.mxu0 0.0
  %676 = vmatpush1.msra.mxu0 0.0
  %677 = vmatprep.subr.mxu0 0.0
  %678 = vmatpush1.msra.mxu0 0.0
  %679 = vmatprep.subr.mxu0 0.0
  %680 = vmatpush1.msra.mxu0 0.0
  %681 = vmatprep.subr.mxu0 0.0
  %682 = vmatpush1.msra.mxu0 0.0
  %683 = vmatprep.subr.mxu0 0.0
  %684 = vmatpush1.msra.mxu0 0.0
  %685 = vmatprep.subr.mxu0 0.0
  %686 = vmatpush1.msra.mxu0 0.0
  %687 = vmatprep.subr.mxu0 0.0
  %688 = vmatpush1.msra.mxu0 0.0
  %689 = vmatprep.subr.mxu0 0.0
  %690 = vmatpush1.msra.mxu0 0.0
  %691 = vmatprep.subr.mxu0 0.0
  %692 = vmatpush1.msra.mxu0 0.0
  %693 = vmatprep.subr.mxu0 0.0
  %694 = vmatpush1.msra.mxu0 0.0
  %695 = vmatprep.subr.mxu0 0.0
  %696 = vmatpush1.msra.mxu0 0.0
  %697 = vmatprep.mubr.f32.mxu0 0.0
  %698 = vmatmul.mubr.f32.gmra.mrb[0].mxu0 %v631
  %v699 = vpop.f32.mrb[0].mxu0
  %v700 = vadd.f32 0.0, %v699
  %v701 = vpop.f32.mrb[0].mxu0
  %v702 = vadd.f32 0.0, %v701
  %703 = vdwg.mxu0
  %v704 = vadd.f32 %v626, %v700
  %v705 = vadd.f32 %v628, %v702
  %v706 = vxor.u32 %v704, 2147483648
  %v707 = vxor.u32 %v705, 2147483648
  %v708 = vmul.f32 %v706, 1.442695
  %v709 = vpow.pop %v708
  %v710 = vmul.f32 %v707, 1.442695
  %v711 = vpow.pop %v710
  %v712 = vadd.f32 %v709, 1.0
  %v713 = vadd.f32 %v711, 1.0
  %v714 = vrcp.pop %v712
  %v715 = vmul.f32 1.0, %v714
  %v716 = vrcp.pop %v713
  %v717 = vmul.f32 1.0, %v716
  %v718 = vtanh.pop %v704
  %v719 = vtanh.pop %v705
  %v720 = vmul.f32 %v715, %v589
  %722 = vrot.lane.b32.xlu0 %v718, 64
  %v723 = vpop.permute.xlu0 %722
  %v725 = vmul.f32 %v715, %v723
  %727 = vrot.lane.b32.xlu0 %v725, 32
  %v728 = vpop.permute.xlu0 %727
  %v730 = vadd.f32 %v720, %v728
  %v731 = vmul.f32 %v717, %v600
  %733 = vrot.lane.b32.xlu0 %v719, 64
  %v734 = vpop.permute.xlu0 %733
  %v736 = vmul.f32 %v717, %v734
  %738 = vrot.lane.b32.xlu0 %v736, 32
  %v739 = vpop.permute.xlu0 %738
  %v741 = vadd.f32 %v731, %v739
  %v742 = vtanh.pop %v730
  %744 = vrot.lane.b32.xlu0 %v742, 64
  %v745 = vpop.permute.xlu0 %744
  %v747 = vmul.f32 %v715, %v745
  %v748 = vtanh.pop %v741
  %750 = vrot.lane.b32.xlu0 %v748, 64
  %v751 = vpop.permute.xlu0 %750
  %v753 = vmul.f32 %v717, %v751
  %755 = vrot.lane.b32.xlu0 %v747, 32
  %v756 = vpop.permute.xlu0 %755
  %s758 = scalar_lea.vmem [#allocation4], 16
  %759 = vst.msk [vmem:[%s758] sm:$0xff] %vm475, %v756
  %761 = vrot.lane.b32.xlu0 %v753, 64
  %v762 = vpop.permute.xlu0 %761
  %s764 = scalar_lea.vmem [#allocation4], 40
  %765 = vst.msk [vmem:[%s764] sm:$0xff] %vm482, %v762
  %s766 = scalar_lea.vmem [#allocation2], 24
  %v767 = vld [vmem:[%s766] sm:$0xff]
  %s768 = scalar_lea.vmem [#allocation3], 32
  %v769 = vld [vmem:[%s768] sm:$0xff]
  %v770 = vsel %vm475, %v756, %v762
  %v772 = vsel %vm346, %v770, 0
  %774 = vmatprep.subr.mxu0 %v328
  %775 = vmatpush1.msra.mxu0 %v327
  %776 = vmatprep.subr.mxu0 %v330
  %777 = vmatpush1.msra.mxu0 %v329
  %778 = vmatprep.subr.mxu0 %v332
  %779 = vmatpush1.msra.mxu0 %v331
  %780 = vmatprep.subr.mxu0 %v334
  %781 = vmatpush1.msra.mxu0 %v333
  %782 = vmatprep.subr.mxu0 %v336
  %783 = vmatpush1.msra.mxu0 %v335
  %784 = vmatprep.subr.mxu0 %v338
  %785 = vmatpush1.msra.mxu0 %v337
  %786 = vmatprep.subr.mxu0 %v340
  %787 = vmatpush1.msra.mxu0 %v339
  %788 = vmatprep.subr.mxu0 %v342
  %789 = vmatpush1.msra.mxu0 %v341
  %790 = vmatprep.subr.mxu0 0.0
  %791 = vmatpush1.msra.mxu0 0.0
  %792 = vmatprep.subr.mxu0 0.0
  %793 = vmatpush1.msra.mxu0 0.0
  %794 = vmatprep.subr.mxu0 0.0
  %795 = vmatpush1.msra.mxu0 0.0
  %796 = vmatprep.subr.mxu0 0.0
  %797 = vmatpush1.msra.mxu0 0.0
  %798 = vmatprep.subr.mxu0 0.0
  %799 = vmatpush1.msra.mxu0 0.0
  %800 = vmatprep.subr.mxu0 0.0
  %801 = vmatpush1.msra.mxu0 0.0
  %802 = vmatprep.subr.mxu0 0.0
  %803 = vmatpush1.msra.mxu0 0.0
  %804 = vmatprep.subr.mxu0 0.0
  %805 = vmatpush1.msra.mxu0 0.0
  %806 = vmatprep.subr.mxu0 0.0
  %807 = vmatpush1.msra.mxu0 0.0
  %808 = vmatprep.subr.mxu0 0.0
  %809 = vmatpush1.msra.mxu0 0.0
  %810 = vmatprep.subr.mxu0 0.0
  %811 = vmatpush1.msra.mxu0 0.0
  %812 = vmatprep.subr.mxu0 0.0
  %813 = vmatpush1.msra.mxu0 0.0
  %814 = vmatprep.subr.mxu0 0.0
  %815 = vmatpush1.msra.mxu0 0.0
  %816 = vmatprep.subr.mxu0 0.0
  %817 = vmatpush1.msra.mxu0 0.0
  %818 = vmatprep.subr.mxu0 0.0
  %819 = vmatpush1.msra.mxu0 0.0
  %820 = vmatprep.subr.mxu0 0.0
  %821 = vmatpush1.msra.mxu0 0.0
  %822 = vmatprep.subr.mxu0 0.0
  %823 = vmatpush1.msra.mxu0 0.0
  %824 = vmatprep.subr.mxu0 0.0
  %825 = vmatpush1.msra.mxu0 0.0
  %826 = vmatprep.subr.mxu0 0.0
  %827 = vmatpush1.msra.mxu0 0.0
  %828 = vmatprep.subr.mxu0 0.0
  %829 = vmatpush1.msra.mxu0 0.0
  %830 = vmatprep.subr.mxu0 0.0
  %831 = vmatpush1.msra.mxu0 0.0
  %832 = vmatprep.subr.mxu0 0.0
  %833 = vmatpush1.msra.mxu0 0.0
  %834 = vmatprep.subr.mxu0 0.0
  %835 = vmatpush1.msra.mxu0 0.0
  %836 = vmatprep.subr.mxu0 0.0
  %837 = vmatpush1.msra.mxu0 0.0
  %838 = vmatprep.mubr.f32.mxu0 0.0
  %839 = vmatmul.mubr.f32.gmra.mrb[0].mxu0 %v772
  %v840 = vpop.f32.mrb[0].mxu0
  %v841 = vadd.f32 0.0, %v840
  %v842 = vpop.f32.mrb[0].mxu0
  %v843 = vadd.f32 0.0, %v842
  %844 = vdwg.mxu0
  %v845 = vadd.f32 %v767, %v841
  %v846 = vadd.f32 %v769, %v843
  %v847 = vxor.u32 %v845, 2147483648
  %v848 = vxor.u32 %v846, 2147483648
  %v849 = vmul.f32 %v847, 1.442695
  %v850 = vpow.pop %v849
  %v851 = vmul.f32 %v848, 1.442695
  %v852 = vpow.pop %v851
  %v853 = vadd.f32 %v850, 1.0
  %v854 = vadd.f32 %v852, 1.0
  %v855 = vrcp.pop %v853
  %v856 = vmul.f32 1.0, %v855
  %v857 = vrcp.pop %v854
  %v858 = vmul.f32 1.0, %v857
  %v859 = vtanh.pop %v845
  %v860 = vtanh.pop %v846
  %v861 = vmul.f32 %v856, %v730
  %863 = vrot.lane.b32.xlu0 %v859, 64
  %v864 = vpop.permute.xlu0 %863
  %v866 = vmul.f32 %v856, %v864
  %868 = vrot.lane.b32.xlu0 %v866, 32
  %v869 = vpop.permute.xlu0 %868
  %v871 = vadd.f32 %v861, %v869
  %v872 = vmul.f32 %v858, %v741
  %874 = vrot.lane.b32.xlu0 %v860, 64
  %v875 = vpop.permute.xlu0 %874
  %v877 = vmul.f32 %v858, %v875
  %879 = vrot.lane.b32.xlu0 %v877, 32
  %v880 = vpop.permute.xlu0 %879
  %v882 = vadd.f32 %v872, %v880
  %v883 = vtanh.pop %v871
  %885 = vrot.lane.b32.xlu0 %v883, 64
  %v886 = vpop.permute.xlu0 %885
  %v888 = vmul.f32 %v856, %v886
  %v889 = vtanh.pop %v882
  %891 = vrot.lane.b32.xlu0 %v889, 64
  %v892 = vpop.permute.xlu0 %891
  %v894 = vmul.f32 %v858, %v892
  %896 = vrot.lane.b32.xlu0 %v888, 32
  %v897 = vpop.permute.xlu0 %896
  %s899 = scalar_lea.vmem [#allocation4], 24
  %900 = vst.msk [vmem:[%s899] sm:$0xff] %vm475, %v897
  %902 = vrot.lane.b32.xlu0 %v894, 64
  %v903 = vpop.permute.xlu0 %902
  %s905 = scalar_lea.vmem [#allocation4], 32
  %906 = vst.msk [vmem:[%s905] sm:$0xff] %vm482, %v903
  %s907 = scalar_lea.vmem [#allocation2], 32
  %v908 = vld [vmem:[%s907] sm:$0xff]
  %s909 = scalar_lea.vmem [#allocation3], 24
  %v910 = vld [vmem:[%s909] sm:$0xff]
  %v911 = vsel %vm475, %v897, %v903
  %v913 = vsel %vm346, %v911, 0
  %915 = vmatprep.subr.mxu0 %v328
  %916 = vmatpush1.msra.mxu0 %v327
  %917 = vmatprep.subr.mxu0 %v330
  %918 = vmatpush1.msra.mxu0 %v329
  %919 = vmatprep.subr.mxu0 %v332
  %920 = vmatpush1.msra.mxu0 %v331
  %921 = vmatprep.subr.mxu0 %v334
  %922 = vmatpush1.msra.mxu0 %v333
  %923 = vmatprep.subr.mxu0 %v336
  %924 = vmatpush1.msra.mxu0 %v335
  %925 = vmatprep.subr.mxu0 %v338
  %926 = vmatpush1.msra.mxu0 %v337
  %927 = vmatprep.subr.mxu0 %v340
  %928 = vmatpush1.msra.mxu0 %v339
  %929 = vmatprep.subr.mxu0 %v342
  %930 = vmatpush1.msra.mxu0 %v341
  %931 = vmatprep.subr.mxu0 0.0
  %932 = vmatpush1.msra.mxu0 0.0
  %933 = vmatprep.subr.mxu0 0.0
  %934 = vmatpush1.msra.mxu0 0.0
  %935 = vmatprep.subr.mxu0 0.0
  %936 = vmatpush1.msra.mxu0 0.0
  %937 = vmatprep.subr.mxu0 0.0
  %938 = vmatpush1.msra.mxu0 0.0
  %939 = vmatprep.subr.mxu0 0.0
  %940 = vmatpush1.msra.mxu0 0.0
  %941 = vmatprep.subr.mxu0 0.0
  %942 = vmatpush1.msra.mxu0 0.0
  %943 = vmatprep.subr.mxu0 0.0
  %944 = vmatpush1.msra.mxu0 0.0
  %945 = vmatprep.subr.mxu0 0.0
  %946 = vmatpush1.msra.mxu0 0.0
  %947 = vmatprep.subr.mxu0 0.0
  %948 = vmatpush1.msra.mxu0 0.0
  %949 = vmatprep.subr.mxu0 0.0
  %950 = vmatpush1.msra.mxu0 0.0
  %951 = vmatprep.subr.mxu0 0.0
  %952 = vmatpush1.msra.mxu0 0.0
  %953 = vmatprep.subr.mxu0 0.0
  %954 = vmatpush1.msra.mxu0 0.0
  %955 = vmatprep.subr.mxu0 0.0
  %956 = vmatpush1.msra.mxu0 0.0
  %957 = vmatprep.subr.mxu0 0.0
  %958 = vmatpush1.msra.mxu0 0.0
  %959 = vmatprep.subr.mxu0 0.0
  %960 = vmatpush1.msra.mxu0 0.0
  %961 = vmatprep.subr.mxu0 0.0
  %962 = vmatpush1.msra.mxu0 0.0
  %963 = vmatprep.subr.mxu0 0.0
  %964 = vmatpush1.msra.mxu0 0.0
  %965 = vmatprep.subr.mxu0 0.0
  %966 = vmatpush1.msra.mxu0 0.0
  %967 = vmatprep.subr.mxu0 0.0
  %968 = vmatpush1.msra.mxu0 0.0
  %969 = vmatprep.subr.mxu0 0.0
  %970 = vmatpush1.msra.mxu0 0.0
  %971 = vmatprep.subr.mxu0 0.0
  %972 = vmatpush1.msra.mxu0 0.0
  %973 = vmatprep.subr.mxu0 0.0
  %974 = vmatpush1.msra.mxu0 0.0
  %975 = vmatprep.subr.mxu0 0.0
  %976 = vmatpush1.msra.mxu0 0.0
  %977 = vmatprep.subr.mxu0 0.0
  %978 = vmatpush1.msra.mxu0 0.0
  %979 = vmatprep.mubr.f32.mxu0 0.0
  %980 = vmatmul.mubr.f32.gmra.mrb[0].mxu0 %v913
  %v981 = vpop.f32.mrb[0].mxu0
  %v982 = vadd.f32 0.0, %v981
  %v983 = vpop.f32.mrb[0].mxu0
  %v984 = vadd.f32 0.0, %v983
  %985 = vdwg.mxu0
  %v986 = vadd.f32 %v908, %v982
  %v987 = vadd.f32 %v910, %v984
  %v988 = vxor.u32 %v986, 2147483648
  %v989 = vxor.u32 %v987, 2147483648
  %v990 = vmul.f32 %v988, 1.442695
  %v991 = vpow.pop %v990
  %v992 = vmul.f32 %v989, 1.442695
  %v993 = vpow.pop %v992
  %v994 = vadd.f32 %v991, 1.0
  %v995 = vadd.f32 %v993, 1.0
  %v996 = vrcp.pop %v994
  %v997 = vmul.f32 1.0, %v996
  %v998 = vrcp.pop %v995
  %v999 = vmul.f32 1.0, %v998
  %v1000 = vtanh.pop %v986
  %v1001 = vtanh.pop %v987
  %v1002 = vmul.f32 %v997, %v871
  %1004 = vrot.lane.b32.xlu0 %v1000, 64
  %v1005 = vpop.permute.xlu0 %1004
  %v1007 = vmul.f32 %v997, %v1005
  %1009 = vrot.lane.b32.xlu0 %v1007, 32
  %v1010 = vpop.permute.xlu0 %1009
  %v1012 = vadd.f32 %v1002, %v1010
  %v1013 = vmul.f32 %v999, %v882
  %1015 = vrot.lane.b32.xlu0 %v1001, 64
  %v1016 = vpop.permute.xlu0 %1015
  %v1018 = vmul.f32 %v999, %v1016
  %1020 = vrot.lane.b32.xlu0 %v1018, 32
  %v1021 = vpop.permute.xlu0 %1020
  %v1023 = vadd.f32 %v1013, %v1021
  %v1024 = vtanh.pop %v1012
  %1026 = vrot.lane.b32.xlu0 %v1024, 64
  %v1027 = vpop.permute.xlu0 %1026
  %v1029 = vmul.f32 %v997, %v1027
  %v1030 = vtanh.pop %v1023
  %1032 = vrot.lane.b32.xlu0 %v1030, 64
  %v1033 = vpop.permute.xlu0 %1032
  %v1035 = vmul.f32 %v999, %v1033
  %1037 = vrot.lane.b32.xlu0 %v1029, 32
  %v1038 = vpop.permute.xlu0 %1037
  %1040 = vst.msk [vmem:[%s905] sm:$0xff] %vm475, %v1038
  %1042 = vrot.lane.b32.xlu0 %v1035, 64
  %v1043 = vpop.permute.xlu0 %1042
  %1045 = vst.msk [vmem:[%s899] sm:$0xff] %vm482, %v1043
  %s1046 = scalar_lea.vmem [#allocation2], 40
  %v1047 = vld [vmem:[%s1046] sm:$0xff]
  %s1048 = scalar_lea.vmem [#allocation3], 16
  %v1049 = vld [vmem:[%s1048] sm:$0xff]
  %v1050 = vsel %vm475, %v1038, %v1043
  %v1052 = vsel %vm346, %v1050, 0
  %1054 = vmatprep.subr.mxu0 %v328
  %1055 = vmatpush1.msra.mxu0 %v327
  %1056 = vmatprep.subr.mxu0 %v330
  %1057 = vmatpush1.msra.mxu0 %v329
  %1058 = vmatprep.subr.mxu0 %v332
  %1059 = vmatpush1.msra.mxu0 %v331
  %1060 = vmatprep.subr.mxu0 %v334
  %1061 = vmatpush1.msra.mxu0 %v333
  %1062 = vmatprep.subr.mxu0 %v336
  %1063 = vmatpush1.msra.mxu0 %v335
  %1064 = vmatprep.subr.mxu0 %v338
  %1065 = vmatpush1.msra.mxu0 %v337
  %1066 = vmatprep.subr.mxu0 %v340
  %1067 = vmatpush1.msra.mxu0 %v339
  %1068 = vmatprep.subr.mxu0 %v342
  %1069 = vmatpush1.msra.mxu0 %v341
  %1070 = vmatprep.subr.mxu0 0.0
  %1071 = vmatpush1.msra.mxu0 0.0
  %1072 = vmatprep.subr.mxu0 0.0
  %1073 = vmatpush1.msra.mxu0 0.0
  %1074 = vmatprep.subr.mxu0 0.0
  %1075 = vmatpush1.msra.mxu0 0.0
  %1076 = vmatprep.subr.mxu0 0.0
  %1077 = vmatpush1.msra.mxu0 0.0
  %1078 = vmatprep.subr.mxu0 0.0
  %1079 = vmatpush1.msra.mxu0 0.0
  %1080 = vmatprep.subr.mxu0 0.0
  %1081 = vmatpush1.msra.mxu0 0.0
  %1082 = vmatprep.subr.mxu0 0.0
  %1083 = vmatpush1.msra.mxu0 0.0
  %1084 = vmatprep.subr.mxu0 0.0
  %1085 = vmatpush1.msra.mxu0 0.0
  %1086 = vmatprep.subr.mxu0 0.0
  %1087 = vmatpush1.msra.mxu0 0.0
  %1088 = vmatprep.subr.mxu0 0.0
  %1089 = vmatpush1.msra.mxu0 0.0
  %1090 = vmatprep.subr.mxu0 0.0
  %1091 = vmatpush1.msra.mxu0 0.0
  %1092 = vmatprep.subr.mxu0 0.0
  %1093 = vmatpush1.msra.mxu0 0.0
  %1094 = vmatprep.subr.mxu0 0.0
  %1095 = vmatpush1.msra.mxu0 0.0
  %1096 = vmatprep.subr.mxu0 0.0
  %1097 = vmatpush1.msra.mxu0 0.0
  %1098 = vmatprep.subr.mxu0 0.0
  %1099 = vmatpush1.msra.mxu0 0.0
  %1100 = vmatprep.subr.mxu0 0.0
  %1101 = vmatpush1.msra.mxu0 0.0
  %1102 = vmatprep.subr.mxu0 0.0
  %1103 = vmatpush1.msra.mxu0 0.0
  %1104 = vmatprep.subr.mxu0 0.0
  %1105 = vmatpush1.msra.mxu0 0.0
  %1106 = vmatprep.subr.mxu0 0.0
  %1107 = vmatpush1.msra.mxu0 0.0
  %1108 = vmatprep.subr.mxu0 0.0
  %1109 = vmatpush1.msra.mxu0 0.0
  %1110 = vmatprep.subr.mxu0 0.0
  %1111 = vmatpush1.msra.mxu0 0.0
  %1112 = vmatprep.subr.mxu0 0.0
  %1113 = vmatpush1.msra.mxu0 0.0
  %1114 = vmatprep.subr.mxu0 0.0
  %1115 = vmatpush1.msra.mxu0 0.0
  %1116 = vmatprep.subr.mxu0 0.0
  %1117 = vmatpush1.msra.mxu0 0.0
  %1118 = vmatprep.mubr.f32.mxu0 0.0
  %1119 = vmatmul.mubr.f32.gmra.mrb[0].mxu0 %v1052
  %v1120 = vpop.f32.mrb[0].mxu0
  %v1121 = vadd.f32 0.0, %v1120
  %v1122 = vpop.f32.mrb[0].mxu0
  %v1123 = vadd.f32 0.0, %v1122
  %1124 = vdwg.mxu0
  %v1125 = vadd.f32 %v1047, %v1121
  %v1126 = vadd.f32 %v1049, %v1123
  %v1127 = vxor.u32 %v1125, 2147483648
  %v1128 = vxor.u32 %v1126, 2147483648
  %v1129 = vmul.f32 %v1127, 1.442695
  %v1130 = vpow.pop %v1129
  %v1131 = vmul.f32 %v1128, 1.442695
  %v1132 = vpow.pop %v1131
  %v1133 = vadd.f32 %v1130, 1.0
  %v1134 = vadd.f32 %v1132, 1.0
  %v1135 = vrcp.pop %v1133
  %v1136 = vmul.f32 1.0, %v1135
  %v1137 = vrcp.pop %v1134
  %v1138 = vmul.f32 1.0, %v1137
  %v1139 = vtanh.pop %v1125
  %v1140 = vtanh.pop %v1126
  %v1141 = vmul.f32 %v1136, %v1012
  %1143 = vrot.lane.b32.xlu0 %v1139, 64
  %v1144 = vpop.permute.xlu0 %1143
  %v1146 = vmul.f32 %v1136, %v1144
  %1148 = vrot.lane.b32.xlu0 %v1146, 32
  %v1149 = vpop.permute.xlu0 %1148
  %v1151 = vadd.f32 %v1141, %v1149
  %v1152 = vmul.f32 %v1138, %v1023
  %1154 = vrot.lane.b32.xlu0 %v1140, 64
  %v1155 = vpop.permute.xlu0 %1154
  %v1157 = vmul.f32 %v1138, %v1155
  %1159 = vrot.lane.b32.xlu0 %v1157, 32
  %v1160 = vpop.permute.xlu0 %1159
  %v1162 = vadd.f32 %v1152, %v1160
  %v1163 = vtanh.pop %v1151
  %1165 = vrot.lane.b32.xlu0 %v1163, 64
  %v1166 = vpop.permute.xlu0 %1165
  %v1168 = vmul.f32 %v1136, %v1166
  %v1169 = vtanh.pop %v1162
  %1171 = vrot.lane.b32.xlu0 %v1169, 64
  %v1172 = vpop.permute.xlu0 %1171
  %v1174 = vmul.f32 %v1138, %v1172
  %1176 = vrot.lane.b32.xlu0 %v1168, 32
  %v1177 = vpop.permute.xlu0 %1176
  %1179 = vst.msk [vmem:[%s764] sm:$0xff] %vm475, %v1177
  %1181 = vrot.lane.b32.xlu0 %v1174, 64
  %v1182 = vpop.permute.xlu0 %1181
  %1184 = vst.msk [vmem:[%s758] sm:$0xff] %vm482, %v1182
  %s1185 = scalar_lea.vmem [#allocation2], 48
  %v1186 = vld [vmem:[%s1185] sm:$0xff]
  %s1187 = scalar_lea.vmem [#allocation3], 8
  %v1188 = vld [vmem:[%s1187] sm:$0xff]
  %v1189 = vsel %vm475, %v1177, %v1182
  %v1191 = vsel %vm346, %v1189, 0
  %1193 = vmatprep.subr.mxu0 %v328
  %1194 = vmatpush1.msra.mxu0 %v327
  %1195 = vmatprep.subr.mxu0 %v330
  %1196 = vmatpush1.msra.mxu0 %v329
  %1197 = vmatprep.subr.mxu0 %v332
  %1198 = vmatpush1.msra.mxu0 %v331
  %1199 = vmatprep.subr.mxu0 %v334
  %1200 = vmatpush1.msra.mxu0 %v333
  %1201 = vmatprep.subr.mxu0 %v336
  %1202 = vmatpush1.msra.mxu0 %v335
  %1203 = vmatprep.subr.mxu0 %v338
  %1204 = vmatpush1.msra.mxu0 %v337
  %1205 = vmatprep.subr.mxu0 %v340
  %1206 = vmatpush1.msra.mxu0 %v339
  %1207 = vmatprep.subr.mxu0 %v342
  %1208 = vmatpush1.msra.mxu0 %v341
  %1209 = vmatprep.subr.mxu0 0.0
  %1210 = vmatpush1.msra.mxu0 0.0
  %1211 = vmatprep.subr.mxu0 0.0
  %1212 = vmatpush1.msra.mxu0 0.0
  %1213 = vmatprep.subr.mxu0 0.0
  %1214 = vmatpush1.msra.mxu0 0.0
  %1215 = vmatprep.subr.mxu0 0.0
  %1216 = vmatpush1.msra.mxu0 0.0
  %1217 = vmatprep.subr.mxu0 0.0
  %1218 = vmatpush1.msra.mxu0 0.0
  %1219 = vmatprep.subr.mxu0 0.0
  %1220 = vmatpush1.msra.mxu0 0.0
  %1221 = vmatprep.subr.mxu0 0.0
  %1222 = vmatpush1.msra.mxu0 0.0
  %1223 = vmatprep.subr.mxu0 0.0
  %1224 = vmatpush1.msra.mxu0 0.0
  %1225 = vmatprep.subr.mxu0 0.0
  %1226 = vmatpush1.msra.mxu0 0.0
  %1227 = vmatprep.subr.mxu0 0.0
  %1228 = vmatpush1.msra.mxu0 0.0
  %1229 = vmatprep.subr.mxu0 0.0
  %1230 = vmatpush1.msra.mxu0 0.0
  %1231 = vmatprep.subr.mxu0 0.0
  %1232 = vmatpush1.msra.mxu0 0.0
  %1233 = vmatprep.subr.mxu0 0.0
  %1234 = vmatpush1.msra.mxu0 0.0
  %1235 = vmatprep.subr.mxu0 0.0
  %1236 = vmatpush1.msra.mxu0 0.0
  %1237 = vmatprep.subr.mxu0 0.0
  %1238 = vmatpush1.msra.mxu0 0.0
  %1239 = vmatprep.subr.mxu0 0.0
  %1240 = vmatpush1.msra.mxu0 0.0
  %1241 = vmatprep.subr.mxu0 0.0
  %1242 = vmatpush1.msra.mxu0 0.0
  %1243 = vmatprep.subr.mxu0 0.0
  %1244 = vmatpush1.msra.mxu0 0.0
  %1245 = vmatprep.subr.mxu0 0.0
  %1246 = vmatpush1.msra.mxu0 0.0
  %1247 = vmatprep.subr.mxu0 0.0
  %1248 = vmatpush1.msra.mxu0 0.0
  %1249 = vmatprep.subr.mxu0 0.0
  %1250 = vmatpush1.msra.mxu0 0.0
  %1251 = vmatprep.subr.mxu0 0.0
  %1252 = vmatpush1.msra.mxu0 0.0
  %1253 = vmatprep.subr.mxu0 0.0
  %1254 = vmatpush1.msra.mxu0 0.0
  %1255 = vmatprep.subr.mxu0 0.0
  %1256 = vmatpush1.msra.mxu0 0.0
  %1257 = vmatprep.mubr.f32.mxu0 0.0
  %1258 = vmatmul.mubr.f32.gmra.mrb[0].mxu0 %v1191
  %v1259 = vpop.f32.mrb[0].mxu0
  %v1260 = vadd.f32 0.0, %v1259
  %v1261 = vpop.f32.mrb[0].mxu0
  %v1262 = vadd.f32 0.0, %v1261
  %1263 = vdwg.mxu0
  %v1264 = vadd.f32 %v1186, %v1260
  %v1265 = vadd.f32 %v1188, %v1262
  %v1266 = vxor.u32 %v1264, 2147483648
  %v1267 = vxor.u32 %v1265, 2147483648
  %v1268 = vmul.f32 %v1266, 1.442695
  %v1269 = vpow.pop %v1268
  %v1270 = vmul.f32 %v1267, 1.442695
  %v1271 = vpow.pop %v1270
  %v1272 = vadd.f32 %v1269, 1.0
  %v1273 = vadd.f32 %v1271, 1.0
  %v1274 = vrcp.pop %v1272
  %v1275 = vmul.f32 1.0, %v1274
  %v1276 = vrcp.pop %v1273
  %v1277 = vmul.f32 1.0, %v1276
  %v1278 = vtanh.pop %v1264
  %v1279 = vtanh.pop %v1265
  %v1280 = vmul.f32 %v1275, %v1151
  %1282 = vrot.lane.b32.xlu0 %v1278, 64
  %v1283 = vpop.permute.xlu0 %1282
  %v1285 = vmul.f32 %v1275, %v1283
  %1287 = vrot.lane.b32.xlu0 %v1285, 32
  %v1288 = vpop.permute.xlu0 %1287
  %v1290 = vadd.f32 %v1280, %v1288
  %v1291 = vmul.f32 %v1277, %v1162
  %1293 = vrot.lane.b32.xlu0 %v1279, 64
  %v1294 = vpop.permute.xlu0 %1293
  %v1296 = vmul.f32 %v1277, %v1294
  %1298 = vrot.lane.b32.xlu0 %v1296, 32
  %v1299 = vpop.permute.xlu0 %1298
  %v1301 = vadd.f32 %v1291, %v1299
  %v1302 = vtanh.pop %v1290
  %1304 = vrot.lane.b32.xlu0 %v1302, 64
  %v1305 = vpop.permute.xlu0 %1304
  %v1307 = vmul.f32 %v1275, %v1305
  %v1308 = vtanh.pop %v1301
  %1310 = vrot.lane.b32.xlu0 %v1308, 64
  %v1311 = vpop.permute.xlu0 %1310
  %v1313 = vmul.f32 %v1277, %v1311
  %1315 = vrot.lane.b32.xlu0 %v1307, 32
  %v1316 = vpop.permute.xlu0 %1315
  %1318 = vst.msk [vmem:[%s623] sm:$0xff] %vm475, %v1316
  %1320 = vrot.lane.b32.xlu0 %v1313, 64
  %v1321 = vpop.permute.xlu0 %1320
  %1323 = vst.msk [vmem:[%s617] sm:$0xff] %vm482, %v1321
  %s1324 = scalar_lea.vmem [#allocation2], 56
  %v1325 = vld [vmem:[%s1324] sm:$0xff]
  %v1326 = vld [vmem:[#allocation3] sm:$0xff]
  %v1327 = vsel %vm475, %v1316, %v1321
  %v1329 = vsel %vm346, %v1327, 0
  %1331 = vmatprep.subr.mxu0 %v328
  %1332 = vmatpush1.msra.mxu0 %v327
  %1333 = vmatprep.subr.mxu0 %v330
  %1334 = vmatpush1.msra.mxu0 %v329
  %1335 = vmatprep.subr.mxu0 %v332
  %1336 = vmatpush1.msra.mxu0 %v331
  %1337 = vmatprep.subr.mxu0 %v334
  %1338 = vmatpush1.msra.mxu0 %v333
  %1339 = vmatprep.subr.mxu0 %v336
  %1340 = vmatpush1.msra.mxu0 %v335
  %1341 = vmatprep.subr.mxu0 %v338
  %1342 = vmatpush1.msra.mxu0 %v337
  %1343 = vmatprep.subr.mxu0 %v340
  %1344 = vmatpush1.msra.mxu0 %v339
  %1345 = vmatprep.subr.mxu0 %v342
  %1346 = vmatpush1.msra.mxu0 %v341
  %1347 = vmatprep.subr.mxu0 0.0
  %1348 = vmatpush1.msra.mxu0 0.0
  %1349 = vmatprep.subr.mxu0 0.0
  %1350 = vmatpush1.msra.mxu0 0.0
  %1351 = vmatprep.subr.mxu0 0.0
  %1352 = vmatpush1.msra.mxu0 0.0
  %1353 = vmatprep.subr.mxu0 0.0
  %1354 = vmatpush1.msra.mxu0 0.0
  %1355 = vmatprep.subr.mxu0 0.0
  %1356 = vmatpush1.msra.mxu0 0.0
  %1357 = vmatprep.subr.mxu0 0.0
  %1358 = vmatpush1.msra.mxu0 0.0
  %1359 = vmatprep.subr.mxu0 0.0
  %1360 = vmatpush1.msra.mxu0 0.0
  %1361 = vmatprep.subr.mxu0 0.0
  %1362 = vmatpush1.msra.mxu0 0.0
  %1363 = vmatprep.subr.mxu0 0.0
  %1364 = vmatpush1.msra.mxu0 0.0
  %1365 = vmatprep.subr.mxu0 0.0
  %1366 = vmatpush1.msra.mxu0 0.0
  %1367 = vmatprep.subr.mxu0 0.0
  %1368 = vmatpush1.msra.mxu0 0.0
  %1369 = vmatprep.subr.mxu0 0.0
  %1370 = vmatpush1.msra.mxu0 0.0
  %1371 = vmatprep.subr.mxu0 0.0
  %1372 = vmatpush1.msra.mxu0 0.0
  %1373 = vmatprep.subr.mxu0 0.0
  %1374 = vmatpush1.msra.mxu0 0.0
  %1375 = vmatprep.subr.mxu0 0.0
  %1376 = vmatpush1.msra.mxu0 0.0
  %1377 = vmatprep.subr.mxu0 0.0
  %1378 = vmatpush1.msra.mxu0 0.0
  %1379 = vmatprep.subr.mxu0 0.0
  %1380 = vmatpush1.msra.mxu0 0.0
  %1381 = vmatprep.subr.mxu0 0.0
  %1382 = vmatpush1.msra.mxu0 0.0
  %1383 = vmatprep.subr.mxu0 0.0
  %1384 = vmatpush1.msra.mxu0 0.0
  %1385 = vmatprep.subr.mxu0 0.0
  %1386 = vmatpush1.msra.mxu0 0.0
  %1387 = vmatprep.subr.mxu0 0.0
  %1388 = vmatpush1.msra.mxu0 0.0
  %1389 = vmatprep.subr.mxu0 0.0
  %1390 = vmatpush1.msra.mxu0 0.0
  %1391 = vmatprep.subr.mxu0 0.0
  %1392 = vmatpush1.msra.mxu0 0.0
  %1393 = vmatprep.subr.mxu0 0.0
  %1394 = vmatpush1.msra.mxu0 0.0
  %1395 = vmatprep.mubr.f32.mxu0 0.0
  %1396 = vmatmul.mubr.f32.gmra.mrb[0].mxu0 %v1329
  %v1397 = vpop.f32.mrb[0].mxu0
  %v1398 = vadd.f32 0.0, %v1397
  %v1399 = vpop.f32.mrb[0].mxu0
  %v1400 = vadd.f32 0.0, %v1399
  %1401 = vdwg.mxu0
  %v1402 = vadd.f32 %v1325, %v1398
  %v1403 = vadd.f32 %v1326, %v1400
  %v1404 = vxor.u32 %v1402, 2147483648
  %v1405 = vxor.u32 %v1403, 2147483648
  %v1406 = vmul.f32 %v1404, 1.442695
  %v1407 = vpow.pop %v1406
  %v1408 = vmul.f32 %v1405, 1.442695
  %v1409 = vpow.pop %v1408
  %v1410 = vadd.f32 %v1407, 1.0
  %v1411 = vadd.f32 %v1409, 1.0
  %v1412 = vrcp.pop %v1410
  %v1413 = vmul.f32 1.0, %v1412
  %v1414 = vrcp.pop %v1411
  %v1415 = vmul.f32 1.0, %v1414
  %v1416 = vtanh.pop %v1402
  %v1417 = vtanh.pop %v1403
  %v1418 = vmul.f32 %v1413, %v1290
  %1420 = vrot.lane.b32.xlu0 %v1416, 64
  %v1421 = vpop.permute.xlu0 %1420
  %v1423 = vmul.f32 %v1413, %v1421
  %1425 = vrot.lane.b32.xlu0 %v1423, 32
  %v1426 = vpop.permute.xlu0 %1425
  %v1428 = vadd.f32 %v1418, %v1426
  %v1429 = vmul.f32 %v1415, %v1301
  %1431 = vrot.lane.b32.xlu0 %v1417, 64
  %v1432 = vpop.permute.xlu0 %1431
  %v1434 = vmul.f32 %v1415, %v1432
  %1436 = vrot.lane.b32.xlu0 %v1434, 32
  %v1437 = vpop.permute.xlu0 %1436
  %v1439 = vadd.f32 %v1429, %v1437
  %v1440 = vtanh.pop %v1428
  %1442 = vrot.lane.b32.xlu0 %v1440, 64
  %v1443 = vpop.permute.xlu0 %1442
  %v1445 = vmul.f32 %v1413, %v1443
  %v1446 = vtanh.pop %v1439
  %1448 = vrot.lane.b32.xlu0 %v1446, 64
  %v1449 = vpop.permute.xlu0 %1448
  %v1451 = vmul.f32 %v1415, %v1449
  %1453 = vrot.lane.b32.xlu0 %v1445, 32
  %v1454 = vpop.permute.xlu0 %1453
  %1456 = vst.msk [vmem:[%s481] sm:$0xff] %vm475, %v1454
  %1458 = vrot.lane.b32.xlu0 %v1451, 64
  %v1459 = vpop.permute.xlu0 %1458
  %1461 = vst.msk [vmem:[#allocation4] sm:$0xff] %vm482, %v1459
  %v1462 = vld [vmem:[#allocation4] sm:$0xff]
  %v1463 = vld [vmem:[#allocation4 + $0x8] sm:$0xff]
  %v1464 = vld [vmem:[#allocation4 + $0x10] sm:$0xff]
  %v1465 = vld [vmem:[#allocation4 + $0x18] sm:$0xff]
  %v1466 = vld [vmem:[#allocation4 + $0x20] sm:$0xff]
  %v1467 = vld [vmem:[#allocation4 + $0x28] sm:$0xff]
  %v1468 = vld [vmem:[#allocation4 + $0x30] sm:$0xff]
  %v1469 = vld [vmem:[#allocation4 + $0x38] sm:$0xff]
  %v1470 = vld [vmem:[%s6] sm:$0xff]
  %v1471 = vld [vmem:[%s6 + $0x8] sm:$0xff]
  %v1472 = vld [vmem:[%s6 + $0x10] sm:$0xff]
  %v1473 = vld [vmem:[%s6 + $0x18] sm:$0xff]
  %v1474 = vld [vmem:[%s6 + $0x20] sm:$0xff]
  %v1475 = vld [vmem:[%s6 + $0x28] sm:$0xff]
  %v1476 = vld [vmem:[%s6 + $0x30] sm:$0xff]
  %v1477 = vld [vmem:[%s6 + $0x38] sm:$0xff]
  %v1478 = vld [vmem:[%s8] sm:$0x1]
  %v1480 = vlaneseq
  %v1481 = vshrl.u32 %v1480, 7
  %v1482 = vsub.s32 0, %v1481
  %v1483 = vrot.slane %v1478, %v1482
  %v1486 = vsel %vm346, %v1462, 0
  %v1489 = vsel %vm346, %v1463, 0
  %v1492 = vsel %vm346, %v1464, 0
  %v1495 = vsel %vm346, %v1465, 0
  %v1498 = vsel %vm346, %v1466, 0
  %v1501 = vsel %vm346, %v1467, 0
  %v1504 = vsel %vm346, %v1468, 0
  %v1507 = vsel %vm346, %v1469, 0
  %1509 = vmatprep.subr.mxu0 0.0
  %1510 = vmatpush1.msra.mxu0 %v1470
  %1511 = vmatprep.subr.mxu0 0.0
  %1512 = vmatpush1.msra.mxu0 %v1471
  %1513 = vmatprep.subr.mxu0 0.0
  %1514 = vmatpush1.msra.mxu0 %v1472
  %1515 = vmatprep.subr.mxu0 0.0
  %1516 = vmatpush1.msra.mxu0 %v1473
  %1517 = vmatprep.subr.mxu0 0.0
  %1518 = vmatpush1.msra.mxu0 %v1474
  %1519 = vmatprep.subr.mxu0 0.0
  %1520 = vmatpush1.msra.mxu0 %v1475
  %1521 = vmatprep.subr.mxu0 0.0
  %1522 = vmatpush1.msra.mxu0 %v1476
  %1523 = vmatprep.subr.mxu0 0.0
  %1524 = vmatpush1.msra.mxu0 %v1477
  %1525 = vmatprep.subr.mxu0 0.0
  %1526 = vmatpush1.msra.mxu0 0.0
  %1527 = vmatprep.subr.mxu0 0.0
  %1528 = vmatpush1.msra.mxu0 0.0
  %1529 = vmatprep.subr.mxu0 0.0
  %1530 = vmatpush1.msra.mxu0 0.0
  %1531 = vmatprep.subr.mxu0 0.0
  %1532 = vmatpush1.msra.mxu0 0.0
  %1533 = vmatprep.subr.mxu0 0.0
  %1534 = vmatpush1.msra.mxu0 0.0
  %1535 = vmatprep.subr.mxu0 0.0
  %1536 = vmatpush1.msra.mxu0 0.0
  %1537 = vmatprep.subr.mxu0 0.0
  %1538 = vmatpush1.msra.mxu0 0.0
  %1539 = vmatprep.subr.mxu0 0.0
  %1540 = vmatpush1.msra.mxu0 0.0
  %1541 = vmatprep.subr.mxu0 0.0
  %1542 = vmatpush1.msra.mxu0 0.0
  %1543 = vmatprep.subr.mxu0 0.0
  %1544 = vmatpush1.msra.mxu0 0.0
  %1545 = vmatprep.subr.mxu0 0.0
  %1546 = vmatpush1.msra.mxu0 0.0
  %1547 = vmatprep.subr.mxu0 0.0
  %1548 = vmatpush1.msra.mxu0 0.0
  %1549 = vmatprep.subr.mxu0 0.0
  %1550 = vmatpush1.msra.mxu0 0.0
  %1551 = vmatprep.subr.mxu0 0.0
  %1552 = vmatpush1.msra.mxu0 0.0
  %1553 = vmatprep.subr.mxu0 0.0
  %1554 = vmatpush1.msra.mxu0 0.0
  %1555 = vmatprep.subr.mxu0 0.0
  %1556 = vmatpush1.msra.mxu0 0.0
  %1557 = vmatprep.subr.mxu0 0.0
  %1558 = vmatpush1.msra.mxu0 0.0
  %1559 = vmatprep.subr.mxu0 0.0
  %1560 = vmatpush1.msra.mxu0 0.0
  %1561 = vmatprep.subr.mxu0 0.0
  %1562 = vmatpush1.msra.mxu0 0.0
  %1563 = vmatprep.subr.mxu0 0.0
  %1564 = vmatpush1.msra.mxu0 0.0
  %1565 = vmatprep.subr.mxu0 0.0
  %1566 = vmatpush1.msra.mxu0 0.0
  %1567 = vmatprep.subr.mxu0 0.0
  %1568 = vmatpush1.msra.mxu0 0.0
  %1569 = vmatprep.subr.mxu0 0.0
  %1570 = vmatpush1.msra.mxu0 0.0
  %1571 = vmatprep.subr.mxu0 0.0
  %1572 = vmatpush1.msra.mxu0 0.0
  %1573 = vmatprep.mubr.f32.mxu0 0.0
  %1574 = vmatmul.mubr.f32.gmra.mrb[0].mxu0 %v1486
  %v1575 = vpop.f32.mrb[0].mxu0
  %v1576 = vadd.f32 %v1483, %v1575
  %v1577 = vpop.f32.mrb[0].mxu0
  %1578 = vmatprep.mubr.f32.mxu0 0.0
  %1579 = vmatmul.mubr.f32.gmra.mrb[0].mxu0 %v1489
  %v1580 = vpop.f32.mrb[0].mxu0
  %v1581 = vadd.f32 %v1483, %v1580
  %v1582 = vpop.f32.mrb[0].mxu0
  %1583 = vmatprep.mubr.f32.mxu0 0.0
  %1584 = vmatmul.mubr.f32.gmra.mrb[0].mxu0 %v1492
  %v1585 = vpop.f32.mrb[0].mxu0
  %v1586 = vadd.f32 %v1483, %v1585
  %v1587 = vpop.f32.mrb[0].mxu0
  %1588 = vmatprep.mubr.f32.mxu0 0.0
  %1589 = vmatmul.mubr.f32.gmra.mrb[0].mxu0 %v1495
  %v1590 = vpop.f32.mrb[0].mxu0
  %v1591 = vadd.f32 %v1483, %v1590
  %v1592 = vpop.f32.mrb[0].mxu0
  %1593 = vmatprep.mubr.f32.mxu0 0.0
  %1594 = vmatmul.mubr.f32.gmra.mrb[0].mxu0 %v1498
  %v1595 = vpop.f32.mrb[0].mxu0
  %v1596 = vadd.f32 %v1483, %v1595
  %v1597 = vpop.f32.mrb[0].mxu0
  %1598 = vmatprep.mubr.f32.mxu0 0.0
  %1599 = vmatmul.mubr.f32.gmra.mrb[0].mxu0 %v1501
  %v1600 = vpop.f32.mrb[0].mxu0
  %v1601 = vadd.f32 %v1483, %v1600
  %v1602 = vpop.f32.mrb[0].mxu0
  %1603 = vmatprep.mubr.f32.mxu0 0.0
  %1604 = vmatmul.mubr.f32.gmra.mrb[0].mxu0 %v1504
  %v1605 = vpop.f32.mrb[0].mxu0
  %v1606 = vadd.f32 %v1483, %v1605
  %v1607 = vpop.f32.mrb[0].mxu0
  %1608 = vmatprep.mubr.f32.mxu0 0.0
  %1609 = vmatmul.mubr.f32.gmra.mrb[0].mxu0 %v1507
  %v1610 = vpop.f32.mrb[0].mxu0
  %v1611 = vadd.f32 %v1483, %v1610
  %v1612 = vpop.f32.mrb[0].mxu0
  %1613 = vdwg.mxu0
  %1614 = vst [vmem:[#allocation2] sm:$0xff] %v1576
  %1615 = vst [vmem:[#allocation2 + $0x8] sm:$0xff] %v1581
  %1616 = vst [vmem:[#allocation2 + $0x10] sm:$0xff] %v1586
  %1617 = vst [vmem:[#allocation2 + $0x18] sm:$0xff] %v1591
  %1618 = vst [vmem:[#allocation2 + $0x20] sm:$0xff] %v1596
  %1619 = vst [vmem:[#allocation2 + $0x28] sm:$0xff] %v1601
  %1620 = vst [vmem:[#allocation2 + $0x30] sm:$0xff] %v1606
  %1621 = vst [vmem:[#allocation2 + $0x38] sm:$0xff] %v1611
  %v1622 = vld [vmem:[%s7] sm:$0xff]
  %v1623 = vld [vmem:[%s7 + $0x8] sm:$0xff]
  %v1624 = vld [vmem:[%s7 + $0x10] sm:$0xff]
  %v1625 = vld [vmem:[%s7 + $0x18] sm:$0xff]
  %v1626 = vld [vmem:[%s7 + $0x20] sm:$0xff]
  %v1627 = vld [vmem:[%s7 + $0x28] sm:$0xff]
  %v1628 = vld [vmem:[%s7 + $0x30] sm:$0xff]
  %v1629 = vld [vmem:[%s7 + $0x38] sm:$0xff]
  %v1630 = vld [vmem:[%s9] sm:$0x1]
  %v1632 = vlaneseq
  %v1633 = vshrl.u32 %v1632, 7
  %v1634 = vsub.s32 0, %v1633
  %v1635 = vrot.slane %v1630, %v1634
  %1637 = vmatprep.subr.mxu0 0.0
  %1638 = vmatpush1.msra.mxu0 %v1622
  %1639 = vmatprep.subr.mxu0 0.0
  %1640 = vmatpush1.msra.mxu0 %v1623
  %1641 = vmatprep.subr.mxu0 0.0
  %1642 = vmatpush1.msra.mxu0 %v1624
  %1643 = vmatprep.subr.mxu0 0.0
  %1644 = vmatpush1.msra.mxu0 %v1625
  %1645 = vmatprep.subr.mxu0 0.0
  %1646 = vmatpush1.msra.mxu0 %v1626
  %1647 = vmatprep.subr.mxu0 0.0
  %1648 = vmatpush1.msra.mxu0 %v1627
  %1649 = vmatprep.subr.mxu0 0.0
  %1650 = vmatpush1.msra.mxu0 %v1628
  %1651 = vmatprep.subr.mxu0 0.0
  %1652 = vmatpush1.msra.mxu0 %v1629
  %1653 = vmatprep.subr.mxu0 0.0
  %1654 = vmatpush1.msra.mxu0 0.0
  %1655 = vmatprep.subr.mxu0 0.0
  %1656 = vmatpush1.msra.mxu0 0.0
  %1657 = vmatprep.subr.mxu0 0.0
  %1658 = vmatpush1.msra.mxu0 0.0
  %1659 = vmatprep.subr.mxu0 0.0
  %1660 = vmatpush1.msra.mxu0 0.0
  %1661 = vmatprep.subr.mxu0 0.0
  %1662 = vmatpush1.msra.mxu0 0.0
  %1663 = vmatprep.subr.mxu0 0.0
  %1664 = vmatpush1.msra.mxu0 0.0
  %1665 = vmatprep.subr.mxu0 0.0
  %1666 = vmatpush1.msra.mxu0 0.0
  %1667 = vmatprep.subr.mxu0 0.0
  %1668 = vmatpush1.msra.mxu0 0.0
  %1669 = vmatprep.subr.mxu0 0.0
  %1670 = vmatpush1.msra.mxu0 0.0
  %1671 = vmatprep.subr.mxu0 0.0
  %1672 = vmatpush1.msra.mxu0 0.0
  %1673 = vmatprep.subr.mxu0 0.0
  %1674 = vmatpush1.msra.mxu0 0.0
  %1675 = vmatprep.subr.mxu0 0.0
  %1676 = vmatpush1.msra.mxu0 0.0
  %1677 = vmatprep.subr.mxu0 0.0
  %1678 = vmatpush1.msra.mxu0 0.0
  %1679 = vmatprep.subr.mxu0 0.0
  %1680 = vmatpush1.msra.mxu0 0.0
  %1681 = vmatprep.subr.mxu0 0.0
  %1682 = vmatpush1.msra.mxu0 0.0
  %1683 = vmatprep.subr.mxu0 0.0
  %1684 = vmatpush1.msra.mxu0 0.0
  %1685 = vmatprep.subr.mxu0 0.0
  %1686 = vmatpush1.msra.mxu0 0.0
  %1687 = vmatprep.subr.mxu0 0.0
  %1688 = vmatpush1.msra.mxu0 0.0
  %1689 = vmatprep.subr.mxu0 0.0
  %1690 = vmatpush1.msra.mxu0 0.0
  %1691 = vmatprep.subr.mxu0 0.0
  %1692 = vmatpush1.msra.mxu0 0.0
  %1693 = vmatprep.subr.mxu0 0.0
  %1694 = vmatpush1.msra.mxu0 0.0
  %1695 = vmatprep.subr.mxu0 0.0
  %1696 = vmatpush1.msra.mxu0 0.0
  %1697 = vmatprep.subr.mxu0 0.0
  %1698 = vmatpush1.msra.mxu0 0.0
  %1699 = vmatprep.subr.mxu0 0.0
  %1700 = vmatpush1.msra.mxu0 0.0
  %1701 = vmatprep.mubr.f32.mxu0 0.0
  %1702 = vmatmul.mubr.f32.gmra.mrb[0].mxu0 %v1486
  %v1703 = vpop.f32.mrb[0].mxu0
  %v1704 = vadd.f32 %v1635, %v1703
  %v1705 = vpop.f32.mrb[0].mxu0
  %1706 = vmatprep.mubr.f32.mxu0 0.0
  %1707 = vmatmul.mubr.f32.gmra.mrb[0].mxu0 %v1489
  %v1708 = vpop.f32.mrb[0].mxu0
  %v1709 = vadd.f32 %v1635, %v1708
  %v1710 = vpop.f32.mrb[0].mxu0
  %1711 = vmatprep.mubr.f32.mxu0 0.0
  %1712 = vmatmul.mubr.f32.gmra.mrb[0].mxu0 %v1492
  %v1713 = vpop.f32.mrb[0].mxu0
  %v1714 = vadd.f32 %v1635, %v1713
  %v1715 = vpop.f32.mrb[0].mxu0
  %1716 = vmatprep.mubr.f32.mxu0 0.0
  %1717 = vmatmul.mubr.f32.gmra.mrb[0].mxu0 %v1495
  %v1718 = vpop.f32.mrb[0].mxu0
  %v1719 = vadd.f32 %v1635, %v1718
  %v1720 = vpop.f32.mrb[0].mxu0
  %1721 = vmatprep.mubr.f32.mxu0 0.0
  %1722 = vmatmul.mubr.f32.gmra.mrb[0].mxu0 %v1498
  %v1723 = vpop.f32.mrb[0].mxu0
  %v1724 = vadd.f32 %v1635, %v1723
  %v1725 = vpop.f32.mrb[0].mxu0
  %1726 = vmatprep.mubr.f32.mxu0 0.0
  %1727 = vmatmul.mubr.f32.gmra.mrb[0].mxu0 %v1501
  %v1728 = vpop.f32.mrb[0].mxu0
  %v1729 = vadd.f32 %v1635, %v1728
  %v1730 = vpop.f32.mrb[0].mxu0
  %1731 = vmatprep.mubr.f32.mxu0 0.0
  %1732 = vmatmul.mubr.f32.gmra.mrb[0].mxu0 %v1504
  %v1733 = vpop.f32.mrb[0].mxu0
  %v1734 = vadd.f32 %v1635, %v1733
  %v1735 = vpop.f32.mrb[0].mxu0
  %1736 = vmatprep.mubr.f32.mxu0 0.0
  %1737 = vmatmul.mubr.f32.gmra.mrb[0].mxu0 %v1507
  %v1738 = vpop.f32.mrb[0].mxu0
  %v1739 = vadd.f32 %v1635, %v1738
  %v1740 = vpop.f32.mrb[0].mxu0
  %1741 = vdwg.mxu0
  %1742 = vst [vmem:[#allocation3] sm:$0xff] %v1704
  %1743 = vst [vmem:[#allocation3 + $0x8] sm:$0xff] %v1709
  %1744 = vst [vmem:[#allocation3 + $0x10] sm:$0xff] %v1714
  %1745 = vst [vmem:[#allocation3 + $0x18] sm:$0xff] %v1719
  %1746 = vst [vmem:[#allocation3 + $0x20] sm:$0xff] %v1724
  %1747 = vst [vmem:[#allocation3 + $0x28] sm:$0xff] %v1729
  %1748 = vst [vmem:[#allocation3 + $0x30] sm:$0xff] %v1734
  %1749 = vst [vmem:[#allocation3 + $0x38] sm:$0xff] %v1739
  %v1750 = vld [vmem:[%s10] sm:$0xff]
  %v1751 = vld [vmem:[%s10 + $0x8] sm:$0xff]
  %v1752 = vld [vmem:[%s10 + $0x10] sm:$0xff]
  %v1753 = vld [vmem:[%s10 + $0x18] sm:$0xff]
  %v1754 = vld [vmem:[%s10 + $0x20] sm:$0xff]
  %v1755 = vld [vmem:[%s10 + $0x28] sm:$0xff]
  %v1756 = vld [vmem:[%s10 + $0x30] sm:$0xff]
  %v1757 = vld [vmem:[%s10 + $0x38] sm:$0xff]
  %v1758 = vld [vmem:[%s10 + $0x40] sm:$0xff]
  %v1759 = vld [vmem:[%s10 + $0x48] sm:$0xff]
  %v1760 = vld [vmem:[%s10 + $0x50] sm:$0xff]
  %v1761 = vld [vmem:[%s10 + $0x58] sm:$0xff]
  %v1762 = vld [vmem:[%s10 + $0x60] sm:$0xff]
  %v1763 = vld [vmem:[%s10 + $0x68] sm:$0xff]
  %v1764 = vld [vmem:[%s10 + $0x70] sm:$0xff]
  %v1765 = vld [vmem:[%s10 + $0x78] sm:$0xff]
  %v1766 = vld [vmem:[#allocation2] sm:$0xff]
  %v1767 = vld [vmem:[%s344] sm:$0xff]
  %1768 = vmatprep.subr.mxu0 %v1751
  %1769 = vmatpush1.msra.mxu0 %v1750
  %1770 = vmatprep.subr.mxu0 %v1753
  %1771 = vmatpush1.msra.mxu0 %v1752
  %1772 = vmatprep.subr.mxu0 %v1755
  %1773 = vmatpush1.msra.mxu0 %v1754
  %1774 = vmatprep.subr.mxu0 %v1757
  %1775 = vmatpush1.msra.mxu0 %v1756
  %1776 = vmatprep.subr.mxu0 %v1759
  %1777 = vmatpush1.msra.mxu0 %v1758
  %1778 = vmatprep.subr.mxu0 %v1761
  %1779 = vmatpush1.msra.mxu0 %v1760
  %1780 = vmatprep.subr.mxu0 %v1763
  %1781 = vmatpush1.msra.mxu0 %v1762
  %1782 = vmatprep.subr.mxu0 %v1765
  %1783 = vmatpush1.msra.mxu0 %v1764
  %1784 = vmatprep.subr.mxu0 0.0
  %1785 = vmatpush1.msra.mxu0 0.0
  %1786 = vmatprep.subr.mxu0 0.0
  %1787 = vmatpush1.msra.mxu0 0.0
  %1788 = vmatprep.subr.mxu0 0.0
  %1789 = vmatpush1.msra.mxu0 0.0
  %1790 = vmatprep.subr.mxu0 0.0
  %1791 = vmatpush1.msra.mxu0 0.0
  %1792 = vmatprep.subr.mxu0 0.0
  %1793 = vmatpush1.msra.mxu0 0.0
  %1794 = vmatprep.subr.mxu0 0.0
  %1795 = vmatpush1.msra.mxu0 0.0
  %1796 = vmatprep.subr.mxu0 0.0
  %1797 = vmatpush1.msra.mxu0 0.0
  %1798 = vmatprep.subr.mxu0 0.0
  %1799 = vmatpush1.msra.mxu0 0.0
  %1800 = vmatprep.subr.mxu0 0.0
  %1801 = vmatpush1.msra.mxu0 0.0
  %1802 = vmatprep.subr.mxu0 0.0
  %1803 = vmatpush1.msra.mxu0 0.0
  %1804 = vmatprep.subr.mxu0 0.0
  %1805 = vmatpush1.msra.mxu0 0.0
  %1806 = vmatprep.subr.mxu0 0.0
  %1807 = vmatpush1.msra.mxu0 0.0
  %1808 = vmatprep.subr.mxu0 0.0
  %1809 = vmatpush1.msra.mxu0 0.0
  %1810 = vmatprep.subr.mxu0 0.0
  %1811 = vmatpush1.msra.mxu0 0.0
  %1812 = vmatprep.subr.mxu0 0.0
  %1813 = vmatpush1.msra.mxu0 0.0
  %1814 = vmatprep.subr.mxu0 0.0
  %1815 = vmatpush1.msra.mxu0 0.0
  %1816 = vmatprep.subr.mxu0 0.0
  %1817 = vmatpush1.msra.mxu0 0.0
  %1818 = vmatprep.subr.mxu0 0.0
  %1819 = vmatpush1.msra.mxu0 0.0
  %1820 = vmatprep.subr.mxu0 0.0
  %1821 = vmatpush1.msra.mxu0 0.0
  %1822 = vmatprep.subr.mxu0 0.0
  %1823 = vmatpush1.msra.mxu0 0.0
  %1824 = vmatprep.subr.mxu0 0.0
  %1825 = vmatpush1.msra.mxu0 0.0
  %1826 = vmatprep.subr.mxu0 0.0
  %1827 = vmatpush1.msra.mxu0 0.0
  %1828 = vmatprep.subr.mxu0 0.0
  %1829 = vmatpush1.msra.mxu0 0.0
  %1830 = vmatprep.subr.mxu0 0.0
  %1831 = vmatpush1.msra.mxu0 0.0
  %1832 = vmatprep.mubr.f32.mxu0 0.0
  %1833 = vmatmul.mubr.f32.gmra.mrb[0].mxu0 %v348
  %v1834 = vpop.f32.mrb[0].mxu0
  %v1835 = vadd.f32 0.0, %v1834
  %v1836 = vpop.f32.mrb[0].mxu0
  %v1837 = vadd.f32 0.0, %v1836
  %1838 = vdwg.mxu0
  %v1839 = vadd.f32 %v1766, %v1835
  %v1840 = vadd.f32 %v1767, %v1837
  %v1841 = vxor.u32 %v1839, 2147483648
  %v1842 = vxor.u32 %v1840, 2147483648
  %v1843 = vmul.f32 %v1841, 1.442695
  %v1844 = vpow.pop %v1843
  %v1845 = vmul.f32 %v1842, 1.442695
  %v1846 = vpow.pop %v1845
  %v1847 = vadd.f32 %v1844, 1.0
  %v1848 = vadd.f32 %v1846, 1.0
  %v1849 = vrcp.pop %v1847
  %v1850 = vmul.f32 1.0, %v1849
  %v1851 = vrcp.pop %v1848
  %v1852 = vmul.f32 1.0, %v1851
  %v1853 = vtanh.pop %v1839
  %v1854 = vtanh.pop %v1840
  %v1855 = vmul.f32 %v1850, 0.0
  %1857 = vrot.lane.b32.xlu0 %v1853, 64
  %v1858 = vpop.permute.xlu0 %1857
  %v1860 = vmul.f32 %v1850, %v1858
  %1862 = vrot.lane.b32.xlu0 %v1860, 32
  %v1863 = vpop.permute.xlu0 %1862
  %v1865 = vadd.f32 %v1855, %v1863
  %v1866 = vmul.f32 %v1852, 0.0
  %1868 = vrot.lane.b32.xlu0 %v1854, 64
  %v1869 = vpop.permute.xlu0 %1868
  %v1871 = vmul.f32 %v1852, %v1869
  %1873 = vrot.lane.b32.xlu0 %v1871, 32
  %v1874 = vpop.permute.xlu0 %1873
  %v1876 = vadd.f32 %v1866, %v1874
  %v1877 = vtanh.pop %v1865
  %1879 = vrot.lane.b32.xlu0 %v1877, 64
  %v1880 = vpop.permute.xlu0 %1879
  %v1882 = vmul.f32 %v1850, %v1880
  %v1883 = vtanh.pop %v1876
  %1885 = vrot.lane.b32.xlu0 %v1883, 64
  %v1886 = vpop.permute.xlu0 %1885
  %v1888 = vmul.f32 %v1852, %v1886
  %1890 = vrot.lane.b32.xlu0 %v1882, 32
  %v1891 = vpop.permute.xlu0 %1890
  %1893 = vst.msk [vmem:[#allocation4] sm:$0xff] %vm475, %v1891
  %1895 = vrot.lane.b32.xlu0 %v1888, 64
  %v1896 = vpop.permute.xlu0 %1895
  %1898 = vst.msk [vmem:[%s481] sm:$0xff] %vm482, %v1896
  %v1899 = vld [vmem:[%s484] sm:$0xff]
  %v1900 = vld [vmem:[%s486] sm:$0xff]
  %v1901 = vsel %vm475, %v1891, %v1896
  %v1903 = vsel %vm346, %v1901, 0
  %1905 = vmatprep.subr.mxu0 %v1751
  %1906 = vmatpush1.msra.mxu0 %v1750
  %1907 = vmatprep.subr.mxu0 %v1753
  %1908 = vmatpush1.msra.mxu0 %v1752
  %1909 = vmatprep.subr.mxu0 %v1755
  %1910 = vmatpush1.msra.mxu0 %v1754
  %1911 = vmatprep.subr.mxu0 %v1757
  %1912 = vmatpush1.msra.mxu0 %v1756
  %1913 = vmatprep.subr.mxu0 %v1759
  %1914 = vmatpush1.msra.mxu0 %v1758
  %1915 = vmatprep.subr.mxu0 %v1761
  %1916 = vmatpush1.msra.mxu0 %v1760
  %1917 = vmatprep.subr.mxu0 %v1763
  %1918 = vmatpush1.msra.mxu0 %v1762
  %1919 = vmatprep.subr.mxu0 %v1765
  %1920 = vmatpush1.msra.mxu0 %v1764
  %1921 = vmatprep.subr.mxu0 0.0
  %1922 = vmatpush1.msra.mxu0 0.0
  %1923 = vmatprep.subr.mxu0 0.0
  %1924 = vmatpush1.msra.mxu0 0.0
  %1925 = vmatprep.subr.mxu0 0.0
  %1926 = vmatpush1.msra.mxu0 0.0
  %1927 = vmatprep.subr.mxu0 0.0
  %1928 = vmatpush1.msra.mxu0 0.0
  %1929 = vmatprep.subr.mxu0 0.0
  %1930 = vmatpush1.msra.mxu0 0.0
  %1931 = vmatprep.subr.mxu0 0.0
  %1932 = vmatpush1.msra.mxu0 0.0
  %1933 = vmatprep.subr.mxu0 0.0
  %1934 = vmatpush1.msra.mxu0 0.0
  %1935 = vmatprep.subr.mxu0 0.0
  %1936 = vmatpush1.msra.mxu0 0.0
  %1937 = vmatprep.subr.mxu0 0.0
  %1938 = vmatpush1.msra.mxu0 0.0
  %1939 = vmatprep.subr.mxu0 0.0
  %1940 = vmatpush1.msra.mxu0 0.0
  %1941 = vmatprep.subr.mxu0 0.0
  %1942 = vmatpush1.msra.mxu0 0.0
  %1943 = vmatprep.subr.mxu0 0.0
  %1944 = vmatpush1.msra.mxu0 0.0
  %1945 = vmatprep.subr.mxu0 0.0
  %1946 = vmatpush1.msra.mxu0 0.0
  %1947 = vmatprep.subr.mxu0 0.0
  %1948 = vmatpush1.msra.mxu0 0.0
  %1949 = vmatprep.subr.mxu0 0.0
  %1950 = vmatpush1.msra.mxu0 0.0
  %1951 = vmatprep.subr.mxu0 0.0
  %1952 = vmatpush1.msra.mxu0 0.0
  %1953 = vmatprep.subr.mxu0 0.0
  %1954 = vmatpush1.msra.mxu0 0.0
  %1955 = vmatprep.subr.mxu0 0.0
  %1956 = vmatpush1.msra.mxu0 0.0
  %1957 = vmatprep.subr.mxu0 0.0
  %1958 = vmatpush1.msra.mxu0 0.0
  %1959 = vmatprep.subr.mxu0 0.0
  %1960 = vmatpush1.msra.mxu0 0.0
  %1961 = vmatprep.subr.mxu0 0.0
  %1962 = vmatpush1.msra.mxu0 0.0
  %1963 = vmatprep.subr.mxu0 0.0
  %1964 = vmatpush1.msra.mxu0 0.0
  %1965 = vmatprep.subr.mxu0 0.0
  %1966 = vmatpush1.msra.mxu0 0.0
  %1967 = vmatprep.subr.mxu0 0.0
  %1968 = vmatpush1.msra.mxu0 0.0
  %1969 = vmatprep.mubr.f32.mxu0 0.0
  %1970 = vmatmul.mubr.f32.gmra.mrb[0].mxu0 %v1903
  %v1971 = vpop.f32.mrb[0].mxu0
  %v1972 = vadd.f32 0.0, %v1971
  %v1973 = vpop.f32.mrb[0].mxu0
  %v1974 = vadd.f32 0.0, %v1973
  %1975 = vdwg.mxu0
  %v1976 = vadd.f32 %v1899, %v1972
  %v1977 = vadd.f32 %v1900, %v1974
  %v1978 = vxor.u32 %v1976, 2147483648
  %v1979 = vxor.u32 %v1977, 2147483648
  %v1980 = vmul.f32 %v1978, 1.442695
  %v1981 = vpow.pop %v1980
  %v1982 = vmul.f32 %v1979, 1.442695
  %v1983 = vpow.pop %v1982
  %v1984 = vadd.f32 %v1981, 1.0
  %v1985 = vadd.f32 %v1983, 1.0
  %v1986 = vrcp.pop %v1984
  %v1987 = vmul.f32 1.0, %v1986
  %v1988 = vrcp.pop %v1985
  %v1989 = vmul.f32 1.0, %v1988
  %v1990 = vtanh.pop %v1976
  %v1991 = vtanh.pop %v1977
  %v1992 = vmul.f32 %v1987, %v1865
  %1994 = vrot.lane.b32.xlu0 %v1990, 64
  %v1995 = vpop.permute.xlu0 %1994
  %v1997 = vmul.f32 %v1987, %v1995
  %1999 = vrot.lane.b32.xlu0 %v1997, 32
  %v2000 = vpop.permute.xlu0 %1999
  %v2002 = vadd.f32 %v1992, %v2000
  %v2003 = vmul.f32 %v1989, %v1876
  %2005 = vrot.lane.b32.xlu0 %v1991, 64
  %v2006 = vpop.permute.xlu0 %2005
  %v2008 = vmul.f32 %v1989, %v2006
  %2010 = vrot.lane.b32.xlu0 %v2008, 32
  %v2011 = vpop.permute.xlu0 %2010
  %v2013 = vadd.f32 %v2003, %v2011
  %v2014 = vtanh.pop %v2002
  %2016 = vrot.lane.b32.xlu0 %v2014, 64
  %v2017 = vpop.permute.xlu0 %2016
  %v2019 = vmul.f32 %v1987, %v2017
  %v2020 = vtanh.pop %v2013
  %2022 = vrot.lane.b32.xlu0 %v2020, 64
  %v2023 = vpop.permute.xlu0 %2022
  %v2025 = vmul.f32 %v1989, %v2023
  %2027 = vrot.lane.b32.xlu0 %v2019, 32
  %v2028 = vpop.permute.xlu0 %2027
  %2030 = vst.msk [vmem:[%s617] sm:$0xff] %vm475, %v2028
  %2032 = vrot.lane.b32.xlu0 %v2025, 64
  %v2033 = vpop.permute.xlu0 %2032
  %2035 = vst.msk [vmem:[%s623] sm:$0xff] %vm482, %v2033
  %v2036 = vld [vmem:[%s625] sm:$0xff]
  %v2037 = vld [vmem:[%s627] sm:$0xff]
  %v2038 = vsel %vm475, %v2028, %v2033
  %v2040 = vsel %vm346, %v2038, 0
  %2042 = vmatprep.subr.mxu0 %v1751
  %2043 = vmatpush1.msra.mxu0 %v1750
  %2044 = vmatprep.subr.mxu0 %v1753
  %2045 = vmatpush1.msra.mxu0 %v1752
  %2046 = vmatprep.subr.mxu0 %v1755
  %2047 = vmatpush1.msra.mxu0 %v1754
  %2048 = vmatprep.subr.mxu0 %v1757
  %2049 = vmatpush1.msra.mxu0 %v1756
  %2050 = vmatprep.subr.mxu0 %v1759
  %2051 = vmatpush1.msra.mxu0 %v1758
  %2052 = vmatprep.subr.mxu0 %v1761
  %2053 = vmatpush1.msra.mxu0 %v1760
  %2054 = vmatprep.subr.mxu0 %v1763
  %2055 = vmatpush1.msra.mxu0 %v1762
  %2056 = vmatprep.subr.mxu0 %v1765
  %2057 = vmatpush1.msra.mxu0 %v1764
  %2058 = vmatprep.subr.mxu0 0.0
  %2059 = vmatpush1.msra.mxu0 0.0
  %2060 = vmatprep.subr.mxu0 0.0
  %2061 = vmatpush1.msra.mxu0 0.0
  %2062 = vmatprep.subr.mxu0 0.0
  %2063 = vmatpush1.msra.mxu0 0.0
  %2064 = vmatprep.subr.mxu0 0.0
  %2065 = vmatpush1.msra.mxu0 0.0
  %2066 = vmatprep.subr.mxu0 0.0
  %2067 = vmatpush1.msra.mxu0 0.0
  %2068 = vmatprep.subr.mxu0 0.0
  %2069 = vmatpush1.msra.mxu0 0.0
  %2070 = vmatprep.subr.mxu0 0.0
  %2071 = vmatpush1.msra.mxu0 0.0
  %2072 = vmatprep.subr.mxu0 0.0
  %2073 = vmatpush1.msra.mxu0 0.0
  %2074 = vmatprep.subr.mxu0 0.0
  %2075 = vmatpush1.msra.mxu0 0.0
  %2076 = vmatprep.subr.mxu0 0.0
  %2077 = vmatpush1.msra.mxu0 0.0
  %2078 = vmatprep.subr.mxu0 0.0
  %2079 = vmatpush1.msra.mxu0 0.0
  %2080 = vmatprep.subr.mxu0 0.0
  %2081 = vmatpush1.msra.mxu0 0.0
  %2082 = vmatprep.subr.mxu0 0.0
  %2083 = vmatpush1.msra.mxu0 0.0
  %2084 = vmatprep.subr.mxu0 0.0
  %2085 = vmatpush1.msra.mxu0 0.0
  %2086 = vmatprep.subr.mxu0 0.0
  %2087 = vmatpush1.msra.mxu0 0.0
  %2088 = vmatprep.subr.mxu0 0.0
  %2089 = vmatpush1.msra.mxu0 0.0
  %2090 = vmatprep.subr.mxu0 0.0
  %2091 = vmatpush1.msra.mxu0 0.0
  %2092 = vmatprep.subr.mxu0 0.0
  %2093 = vmatpush1.msra.mxu0 0.0
  %2094 = vmatprep.subr.mxu0 0.0
  %2095 = vmatpush1.msra.mxu0 0.0
  %2096 = vmatprep.subr.mxu0 0.0
  %2097 = vmatpush1.msra.mxu0 0.0
  %2098 = vmatprep.subr.mxu0 0.0
  %2099 = vmatpush1.msra.mxu0 0.0
  %2100 = vmatprep.subr.mxu0 0.0
  %2101 = vmatpush1.msra.mxu0 0.0
  %2102 = vmatprep.subr.mxu0 0.0
  %2103 = vmatpush1.msra.mxu0 0.0
  %2104 = vmatprep.subr.mxu0 0.0
  %2105 = vmatpush1.msra.mxu0 0.0
  %2106 = vmatprep.mubr.f32.mxu0 0.0
  %2107 = vmatmul.mubr.f32.gmra.mrb[0].mxu0 %v2040
  %v2108 = vpop.f32.mrb[0].mxu0
  %v2109 = vadd.f32 0.0, %v2108
  %v2110 = vpop.f32.mrb[0].mxu0
  %v2111 = vadd.f32 0.0, %v2110
  %2112 = vdwg.mxu0
  %v2113 = vadd.f32 %v2036, %v2109
  %v2114 = vadd.f32 %v2037, %v2111
  %v2115 = vxor.u32 %v2113, 2147483648
  %v2116 = vxor.u32 %v2114, 2147483648
  %v2117 = vmul.f32 %v2115, 1.442695
  %v2118 = vpow.pop %v2117
  %v2119 = vmul.f32 %v2116, 1.442695
  %v2120 = vpow.pop %v2119
  %v2121 = vadd.f32 %v2118, 1.0
  %v2122 = vadd.f32 %v2120, 1.0
  %v2123 = vrcp.pop %v2121
  %v2124 = vmul.f32 1.0, %v2123
  %v2125 = vrcp.pop %v2122
  %v2126 = vmul.f32 1.0, %v2125
  %v2127 = vtanh.pop %v2113
  %v2128 = vtanh.pop %v2114
  %v2129 = vmul.f32 %v2124, %v2002
  %2131 = vrot.lane.b32.xlu0 %v2127, 64
  %v2132 = vpop.permute.xlu0 %2131
  %v2134 = vmul.f32 %v2124, %v2132
  %2136 = vrot.lane.b32.xlu0 %v2134, 32
  %v2137 = vpop.permute.xlu0 %2136
  %v2139 = vadd.f32 %v2129, %v2137
  %v2140 = vmul.f32 %v2126, %v2013
  %2142 = vrot.lane.b32.xlu0 %v2128, 64
  %v2143 = vpop.permute.xlu0 %2142
  %v2145 = vmul.f32 %v2126, %v2143
  %2147 = vrot.lane.b32.xlu0 %v2145, 32
  %v2148 = vpop.permute.xlu0 %2147
  %v2150 = vadd.f32 %v2140, %v2148
  %v2151 = vtanh.pop %v2139
  %2153 = vrot.lane.b32.xlu0 %v2151, 64
  %v2154 = vpop.permute.xlu0 %2153
  %v2156 = vmul.f32 %v2124, %v2154
  %v2157 = vtanh.pop %v2150
  %2159 = vrot.lane.b32.xlu0 %v2157, 64
  %v2160 = vpop.permute.xlu0 %2159
  %v2162 = vmul.f32 %v2126, %v2160
  %2164 = vrot.lane.b32.xlu0 %v2156, 32
  %v2165 = vpop.permute.xlu0 %2164
  %2167 = vst.msk [vmem:[%s758] sm:$0xff] %vm475, %v2165
  %2169 = vrot.lane.b32.xlu0 %v2162, 64
  %v2170 = vpop.permute.xlu0 %2169
  %2172 = vst.msk [vmem:[%s764] sm:$0xff] %vm482, %v2170
  %v2173 = vld [vmem:[%s766] sm:$0xff]
  %v2174 = vld [vmem:[%s768] sm:$0xff]
  %v2175 = vsel %vm475, %v2165, %v2170
  %v2177 = vsel %vm346, %v2175, 0
  %2179 = vmatprep.subr.mxu0 %v1751
  %2180 = vmatpush1.msra.mxu0 %v1750
  %2181 = vmatprep.subr.mxu0 %v1753
  %2182 = vmatpush1.msra.mxu0 %v1752
  %2183 = vmatprep.subr.mxu0 %v1755
  %2184 = vmatpush1.msra.mxu0 %v1754
  %2185 = vmatprep.subr.mxu0 %v1757
  %2186 = vmatpush1.msra.mxu0 %v1756
  %2187 = vmatprep.subr.mxu0 %v1759
  %2188 = vmatpush1.msra.mxu0 %v1758
  %2189 = vmatprep.subr.mxu0 %v1761
  %2190 = vmatpush1.msra.mxu0 %v1760
  %2191 = vmatprep.subr.mxu0 %v1763
  %2192 = vmatpush1.msra.mxu0 %v1762
  %2193 = vmatprep.subr.mxu0 %v1765
  %2194 = vmatpush1.msra.mxu0 %v1764
  %2195 = vmatprep.subr.mxu0 0.0
  %2196 = vmatpush1.msra.mxu0 0.0
  %2197 = vmatprep.subr.mxu0 0.0
  %2198 = vmatpush1.msra.mxu0 0.0
  %2199 = vmatprep.subr.mxu0 0.0
  %2200 = vmatpush1.msra.mxu0 0.0
  %2201 = vmatprep.subr.mxu0 0.0
  %2202 = vmatpush1.msra.mxu0 0.0
  %2203 = vmatprep.subr.mxu0 0.0
  %2204 = vmatpush1.msra.mxu0 0.0
  %2205 = vmatprep.subr.mxu0 0.0
  %2206 = vmatpush1.msra.mxu0 0.0
  %2207 = vmatprep.subr.mxu0 0.0
  %2208 = vmatpush1.msra.mxu0 0.0
  %2209 = vmatprep.subr.mxu0 0.0
  %2210 = vmatpush1.msra.mxu0 0.0
  %2211 = vmatprep.subr.mxu0 0.0
  %2212 = vmatpush1.msra.mxu0 0.0
  %2213 = vmatprep.subr.mxu0 0.0
  %2214 = vmatpush1.msra.mxu0 0.0
  %2215 = vmatprep.subr.mxu0 0.0
  %2216 = vmatpush1.msra.mxu0 0.0
  %2217 = vmatprep.subr.mxu0 0.0
  %2218 = vmatpush1.msra.mxu0 0.0
  %2219 = vmatprep.subr.mxu0 0.0
  %2220 = vmatpush1.msra.mxu0 0.0
  %2221 = vmatprep.subr.mxu0 0.0
  %2222 = vmatpush1.msra.mxu0 0.0
  %2223 = vmatprep.subr.mxu0 0.0
  %2224 = vmatpush1.msra.mxu0 0.0
  %2225 = vmatprep.subr.mxu0 0.0
  %2226 = vmatpush1.msra.mxu0 0.0
  %2227 = vmatprep.subr.mxu0 0.0
  %2228 = vmatpush1.msra.mxu0 0.0
  %2229 = vmatprep.subr.mxu0 0.0
  %2230 = vmatpush1.msra.mxu0 0.0
  %2231 = vmatprep.subr.mxu0 0.0
  %2232 = vmatpush1.msra.mxu0 0.0
  %2233 = vmatprep.subr.mxu0 0.0
  %2234 = vmatpush1.msra.mxu0 0.0
  %2235 = vmatprep.subr.mxu0 0.0
  %2236 = vmatpush1.msra.mxu0 0.0
  %2237 = vmatprep.subr.mxu0 0.0
  %2238 = vmatpush1.msra.mxu0 0.0
  %2239 = vmatprep.subr.mxu0 0.0
  %2240 = vmatpush1.msra.mxu0 0.0
  %2241 = vmatprep.subr.mxu0 0.0
  %2242 = vmatpush1.msra.mxu0 0.0
  %2243 = vmatprep.mubr.f32.mxu0 0.0
  %2244 = vmatmul.mubr.f32.gmra.mrb[0].mxu0 %v2177
  %v2245 = vpop.f32.mrb[0].mxu0
  %v2246 = vadd.f32 0.0, %v2245
  %v2247 = vpop.f32.mrb[0].mxu0
  %v2248 = vadd.f32 0.0, %v2247
  %2249 = vdwg.mxu0
  %v2250 = vadd.f32 %v2173, %v2246
  %v2251 = vadd.f32 %v2174, %v2248
  %v2252 = vxor.u32 %v2250, 2147483648
  %v2253 = vxor.u32 %v2251, 2147483648
  %v2254 = vmul.f32 %v2252, 1.442695
  %v2255 = vpow.pop %v2254
  %v2256 = vmul.f32 %v2253, 1.442695
  %v2257 = vpow.pop %v2256
  %v2258 = vadd.f32 %v2255, 1.0
  %v2259 = vadd.f32 %v2257, 1.0
  %v2260 = vrcp.pop %v2258
  %v2261 = vmul.f32 1.0, %v2260
  %v2262 = vrcp.pop %v2259
  %v2263 = vmul.f32 1.0, %v2262
  %v2264 = vtanh.pop %v2250
  %v2265 = vtanh.pop %v2251
  %v2266 = vmul.f32 %v2261, %v2139
  %2268 = vrot.lane.b32.xlu0 %v2264, 64
  %v2269 = vpop.permute.xlu0 %2268
  %v2271 = vmul.f32 %v2261, %v2269
  %2273 = vrot.lane.b32.xlu0 %v2271, 32
  %v2274 = vpop.permute.xlu0 %2273
  %v2276 = vadd.f32 %v2266, %v2274
  %v2277 = vmul.f32 %v2263, %v2150
  %2279 = vrot.lane.b32.xlu0 %v2265, 64
  %v2280 = vpop.permute.xlu0 %2279
  %v2282 = vmul.f32 %v2263, %v2280
  %2284 = vrot.lane.b32.xlu0 %v2282, 32
  %v2285 = vpop.permute.xlu0 %2284
  %v2287 = vadd.f32 %v2277, %v2285
  %v2288 = vtanh.pop %v2276
  %2290 = vrot.lane.b32.xlu0 %v2288, 64
  %v2291 = vpop.permute.xlu0 %2290
  %v2293 = vmul.f32 %v2261, %v2291
  %v2294 = vtanh.pop %v2287
  %2296 = vrot.lane.b32.xlu0 %v2294, 64
  %v2297 = vpop.permute.xlu0 %2296
  %v2299 = vmul.f32 %v2263, %v2297
  %2301 = vrot.lane.b32.xlu0 %v2293, 32
  %v2302 = vpop.permute.xlu0 %2301
  %2304 = vst.msk [vmem:[%s899] sm:$0xff] %vm475, %v2302
  %2306 = vrot.lane.b32.xlu0 %v2299, 64
  %v2307 = vpop.permute.xlu0 %2306
  %2309 = vst.msk [vmem:[%s905] sm:$0xff] %vm482, %v2307
  %v2310 = vld [vmem:[%s907] sm:$0xff]
  %v2311 = vld [vmem:[%s909] sm:$0xff]
  %v2312 = vsel %vm475, %v2302, %v2307
  %v2314 = vsel %vm346, %v2312, 0
  %2316 = vmatprep.subr.mxu0 %v1751
  %2317 = vmatpush1.msra.mxu0 %v1750
  %2318 = vmatprep.subr.mxu0 %v1753
  %2319 = vmatpush1.msra.mxu0 %v1752
  %2320 = vmatprep.subr.mxu0 %v1755
  %2321 = vmatpush1.msra.mxu0 %v1754
  %2322 = vmatprep.subr.mxu0 %v1757
  %2323 = vmatpush1.msra.mxu0 %v1756
  %2324 = vmatprep.subr.mxu0 %v1759
  %2325 = vmatpush1.msra.mxu0 %v1758
  %2326 = vmatprep.subr.mxu0 %v1761
  %2327 = vmatpush1.msra.mxu0 %v1760
  %2328 = vmatprep.subr.mxu0 %v1763
  %2329 = vmatpush1.msra.mxu0 %v1762
  %2330 = vmatprep.subr.mxu0 %v1765
  %2331 = vmatpush1.msra.mxu0 %v1764
  %2332 = vmatprep.subr.mxu0 0.0
  %2333 = vmatpush1.msra.mxu0 0.0
  %2334 = vmatprep.subr.mxu0 0.0
  %2335 = vmatpush1.msra.mxu0 0.0
  %2336 = vmatprep.subr.mxu0 0.0
  %2337 = vmatpush1.msra.mxu0 0.0
  %2338 = vmatprep.subr.mxu0 0.0
  %2339 = vmatpush1.msra.mxu0 0.0
  %2340 = vmatprep.subr.mxu0 0.0
  %2341 = vmatpush1.msra.mxu0 0.0
  %2342 = vmatprep.subr.mxu0 0.0
  %2343 = vmatpush1.msra.mxu0 0.0
  %2344 = vmatprep.subr.mxu0 0.0
  %2345 = vmatpush1.msra.mxu0 0.0
  %2346 = vmatprep.subr.mxu0 0.0
  %2347 = vmatpush1.msra.mxu0 0.0
  %2348 = vmatprep.subr.mxu0 0.0
  %2349 = vmatpush1.msra.mxu0 0.0
  %2350 = vmatprep.subr.mxu0 0.0
  %2351 = vmatpush1.msra.mxu0 0.0
  %2352 = vmatprep.subr.mxu0 0.0
  %2353 = vmatpush1.msra.mxu0 0.0
  %2354 = vmatprep.subr.mxu0 0.0
  %2355 = vmatpush1.msra.mxu0 0.0
  %2356 = vmatprep.subr.mxu0 0.0
  %2357 = vmatpush1.msra.mxu0 0.0
  %2358 = vmatprep.subr.mxu0 0.0
  %2359 = vmatpush1.msra.mxu0 0.0
  %2360 = vmatprep.subr.mxu0 0.0
  %2361 = vmatpush1.msra.mxu0 0.0
  %2362 = vmatprep.subr.mxu0 0.0
  %2363 = vmatpush1.msra.mxu0 0.0
  %2364 = vmatprep.subr.mxu0 0.0
  %2365 = vmatpush1.msra.mxu0 0.0
  %2366 = vmatprep.subr.mxu0 0.0
  %2367 = vmatpush1.msra.mxu0 0.0
  %2368 = vmatprep.subr.mxu0 0.0
  %2369 = vmatpush1.msra.mxu0 0.0
  %2370 = vmatprep.subr.mxu0 0.0
  %2371 = vmatpush1.msra.mxu0 0.0
  %2372 = vmatprep.subr.mxu0 0.0
  %2373 = vmatpush1.msra.mxu0 0.0
  %2374 = vmatprep.subr.mxu0 0.0
  %2375 = vmatpush1.msra.mxu0 0.0
  %2376 = vmatprep.subr.mxu0 0.0
  %2377 = vmatpush1.msra.mxu0 0.0
  %2378 = vmatprep.subr.mxu0 0.0
  %2379 = vmatpush1.msra.mxu0 0.0
  %2380 = vmatprep.mubr.f32.mxu0 0.0
  %2381 = vmatmul.mubr.f32.gmra.mrb[0].mxu0 %v2314
  %v2382 = vpop.f32.mrb[0].mxu0
  %v2383 = vadd.f32 0.0, %v2382
  %v2384 = vpop.f32.mrb[0].mxu0
  %v2385 = vadd.f32 0.0, %v2384
  %2386 = vdwg.mxu0
  %v2387 = vadd.f32 %v2310, %v2383
  %v2388 = vadd.f32 %v2311, %v2385
  %v2389 = vxor.u32 %v2387, 2147483648
  %v2390 = vxor.u32 %v2388, 2147483648
  %v2391 = vmul.f32 %v2389, 1.442695
  %v2392 = vpow.pop %v2391
  %v2393 = vmul.f32 %v2390, 1.442695
  %v2394 = vpow.pop %v2393
  %v2395 = vadd.f32 %v2392, 1.0
  %v2396 = vadd.f32 %v2394, 1.0
  %v2397 = vrcp.pop %v2395
  %v2398 = vmul.f32 1.0, %v2397
  %v2399 = vrcp.pop %v2396
  %v2400 = vmul.f32 1.0, %v2399
  %v2401 = vtanh.pop %v2387
  %v2402 = vtanh.pop %v2388
  %v2403 = vmul.f32 %v2398, %v2276
  %2405 = vrot.lane.b32.xlu0 %v2401, 64
  %v2406 = vpop.permute.xlu0 %2405
  %v2408 = vmul.f32 %v2398, %v2406
  %2410 = vrot.lane.b32.xlu0 %v2408, 32
  %v2411 = vpop.permute.xlu0 %2410
  %v2413 = vadd.f32 %v2403, %v2411
  %v2414 = vmul.f32 %v2400, %v2287
  %2416 = vrot.lane.b32.xlu0 %v2402, 64
  %v2417 = vpop.permute.xlu0 %2416
  %v2419 = vmul.f32 %v2400, %v2417
  %2421 = vrot.lane.b32.xlu0 %v2419, 32
  %v2422 = vpop.permute.xlu0 %2421
  %v2424 = vadd.f32 %v2414, %v2422
  %v2425 = vtanh.pop %v2413
  %2427 = vrot.lane.b32.xlu0 %v2425, 64
  %v2428 = vpop.permute.xlu0 %2427
  %v2430 = vmul.f32 %v2398, %v2428
  %v2431 = vtanh.pop %v2424
  %2433 = vrot.lane.b32.xlu0 %v2431, 64
  %v2434 = vpop.permute.xlu0 %2433
  %v2436 = vmul.f32 %v2400, %v2434
  %2438 = vrot.lane.b32.xlu0 %v2430, 32
  %v2439 = vpop.permute.xlu0 %2438
  %2441 = vst.msk [vmem:[%s905] sm:$0xff] %vm475, %v2439
  %2443 = vrot.lane.b32.xlu0 %v2436, 64
  %v2444 = vpop.permute.xlu0 %2443
  %2446 = vst.msk [vmem:[%s899] sm:$0xff] %vm482, %v2444
  %v2447 = vld [vmem:[%s1046] sm:$0xff]
  %v2448 = vld [vmem:[%s1048] sm:$0xff]
  %v2449 = vsel %vm475, %v2439, %v2444
  %v2451 = vsel %vm346, %v2449, 0
  %2453 = vmatprep.subr.mxu0 %v1751
  %2454 = vmatpush1.msra.mxu0 %v1750
  %2455 = vmatprep.subr.mxu0 %v1753
  %2456 = vmatpush1.msra.mxu0 %v1752
  %2457 = vmatprep.subr.mxu0 %v1755
  %2458 = vmatpush1.msra.mxu0 %v1754
  %2459 = vmatprep.subr.mxu0 %v1757
  %2460 = vmatpush1.msra.mxu0 %v1756
  %2461 = vmatprep.subr.mxu0 %v1759
  %2462 = vmatpush1.msra.mxu0 %v1758
  %2463 = vmatprep.subr.mxu0 %v1761
  %2464 = vmatpush1.msra.mxu0 %v1760
  %2465 = vmatprep.subr.mxu0 %v1763
  %2466 = vmatpush1.msra.mxu0 %v1762
  %2467 = vmatprep.subr.mxu0 %v1765
  %2468 = vmatpush1.msra.mxu0 %v1764
  %2469 = vmatprep.subr.mxu0 0.0
  %2470 = vmatpush1.msra.mxu0 0.0
  %2471 = vmatprep.subr.mxu0 0.0
  %2472 = vmatpush1.msra.mxu0 0.0
  %2473 = vmatprep.subr.mxu0 0.0
  %2474 = vmatpush1.msra.mxu0 0.0
  %2475 = vmatprep.subr.mxu0 0.0
  %2476 = vmatpush1.msra.mxu0 0.0
  %2477 = vmatprep.subr.mxu0 0.0
  %2478 = vmatpush1.msra.mxu0 0.0
  %2479 = vmatprep.subr.mxu0 0.0
  %2480 = vmatpush1.msra.mxu0 0.0
  %2481 = vmatprep.subr.mxu0 0.0
  %2482 = vmatpush1.msra.mxu0 0.0
  %2483 = vmatprep.subr.mxu0 0.0
  %2484 = vmatpush1.msra.mxu0 0.0
  %2485 = vmatprep.subr.mxu0 0.0
  %2486 = vmatpush1.msra.mxu0 0.0
  %2487 = vmatprep.subr.mxu0 0.0
  %2488 = vmatpush1.msra.mxu0 0.0
  %2489 = vmatprep.subr.mxu0 0.0
  %2490 = vmatpush1.msra.mxu0 0.0
  %2491 = vmatprep.subr.mxu0 0.0
  %2492 = vmatpush1.msra.mxu0 0.0
  %2493 = vmatprep.subr.mxu0 0.0
  %2494 = vmatpush1.msra.mxu0 0.0
  %2495 = vmatprep.subr.mxu0 0.0
  %2496 = vmatpush1.msra.mxu0 0.0
  %2497 = vmatprep.subr.mxu0 0.0
  %2498 = vmatpush1.msra.mxu0 0.0
  %2499 = vmatprep.subr.mxu0 0.0
  %2500 = vmatpush1.msra.mxu0 0.0
  %2501 = vmatprep.subr.mxu0 0.0
  %2502 = vmatpush1.msra.mxu0 0.0
  %2503 = vmatprep.subr.mxu0 0.0
  %2504 = vmatpush1.msra.mxu0 0.0
  %2505 = vmatprep.subr.mxu0 0.0
  %2506 = vmatpush1.msra.mxu0 0.0
  %2507 = vmatprep.subr.mxu0 0.0
  %2508 = vmatpush1.msra.mxu0 0.0
  %2509 = vmatprep.subr.mxu0 0.0
  %2510 = vmatpush1.msra.mxu0 0.0
  %2511 = vmatprep.subr.mxu0 0.0
  %2512 = vmatpush1.msra.mxu0 0.0
  %2513 = vmatprep.subr.mxu0 0.0
  %2514 = vmatpush1.msra.mxu0 0.0
  %2515 = vmatprep.subr.mxu0 0.0
  %2516 = vmatpush1.msra.mxu0 0.0
  %2517 = vmatprep.mubr.f32.mxu0 0.0
  %2518 = vmatmul.mubr.f32.gmra.mrb[0].mxu0 %v2451
  %v2519 = vpop.f32.mrb[0].mxu0
  %v2520 = vadd.f32 0.0, %v2519
  %v2521 = vpop.f32.mrb[0].mxu0
  %v2522 = vadd.f32 0.0, %v2521
  %2523 = vdwg.mxu0
  %v2524 = vadd.f32 %v2447, %v2520
  %v2525 = vadd.f32 %v2448, %v2522
  %v2526 = vxor.u32 %v2524, 2147483648
  %v2527 = vxor.u32 %v2525, 2147483648
  %v2528 = vmul.f32 %v2526, 1.442695
  %v2529 = vpow.pop %v2528
  %v2530 = vmul.f32 %v2527, 1.442695
  %v2531 = vpow.pop %v2530
  %v2532 = vadd.f32 %v2529, 1.0
  %v2533 = vadd.f32 %v2531, 1.0
  %v2534 = vrcp.pop %v2532
  %v2535 = vmul.f32 1.0, %v2534
  %v2536 = vrcp.pop %v2533
  %v2537 = vmul.f32 1.0, %v2536
  %v2538 = vtanh.pop %v2524
  %v2539 = vtanh.pop %v2525
  %v2540 = vmul.f32 %v2535, %v2413
  %2542 = vrot.lane.b32.xlu0 %v2538, 64
  %v2543 = vpop.permute.xlu0 %2542
  %v2545 = vmul.f32 %v2535, %v2543
  %2547 = vrot.lane.b32.xlu0 %v2545, 32
  %v2548 = vpop.permute.xlu0 %2547
  %v2550 = vadd.f32 %v2540, %v2548
  %v2551 = vmul.f32 %v2537, %v2424
  %2553 = vrot.lane.b32.xlu0 %v2539, 64
  %v2554 = vpop.permute.xlu0 %2553
  %v2556 = vmul.f32 %v2537, %v2554
  %2558 = vrot.lane.b32.xlu0 %v2556, 32
  %v2559 = vpop.permute.xlu0 %2558
  %v2561 = vadd.f32 %v2551, %v2559
  %v2562 = vtanh.pop %v2550
  %2564 = vrot.lane.b32.xlu0 %v2562, 64
  %v2565 = vpop.permute.xlu0 %2564
  %v2567 = vmul.f32 %v2535, %v2565
  %v2568 = vtanh.pop %v2561
  %2570 = vrot.lane.b32.xlu0 %v2568, 64
  %v2571 = vpop.permute.xlu0 %2570
  %v2573 = vmul.f32 %v2537, %v2571
  %2575 = vrot.lane.b32.xlu0 %v2567, 32
  %v2576 = vpop.permute.xlu0 %2575
  %2578 = vst.msk [vmem:[%s764] sm:$0xff] %vm475, %v2576
  %2580 = vrot.lane.b32.xlu0 %v2573, 64
  %v2581 = vpop.permute.xlu0 %2580
  %2583 = vst.msk [vmem:[%s758] sm:$0xff] %vm482, %v2581
  %v2584 = vld [vmem:[%s1185] sm:$0xff]
  %v2585 = vld [vmem:[%s1187] sm:$0xff]
  %v2586 = vsel %vm475, %v2576, %v2581
  %v2588 = vsel %vm346, %v2586, 0
  %2590 = vmatprep.subr.mxu0 %v1751
  %2591 = vmatpush1.msra.mxu0 %v1750
  %2592 = vmatprep.subr.mxu0 %v1753
  %2593 = vmatpush1.msra.mxu0 %v1752
  %2594 = vmatprep.subr.mxu0 %v1755
  %2595 = vmatpush1.msra.mxu0 %v1754
  %2596 = vmatprep.subr.mxu0 %v1757
  %2597 = vmatpush1.msra.mxu0 %v1756
  %2598 = vmatprep.subr.mxu0 %v1759
  %2599 = vmatpush1.msra.mxu0 %v1758
  %2600 = vmatprep.subr.mxu0 %v1761
  %2601 = vmatpush1.msra.mxu0 %v1760
  %2602 = vmatprep.subr.mxu0 %v1763
  %2603 = vmatpush1.msra.mxu0 %v1762
  %2604 = vmatprep.subr.mxu0 %v1765
  %2605 = vmatpush1.msra.mxu0 %v1764
  %2606 = vmatprep.subr.mxu0 0.0
  %2607 = vmatpush1.msra.mxu0 0.0
  %2608 = vmatprep.subr.mxu0 0.0
  %2609 = vmatpush1.msra.mxu0 0.0
  %2610 = vmatprep.subr.mxu0 0.0
  %2611 = vmatpush1.msra.mxu0 0.0
  %2612 = vmatprep.subr.mxu0 0.0
  %2613 = vmatpush1.msra.mxu0 0.0
  %2614 = vmatprep.subr.mxu0 0.0
  %2615 = vmatpush1.msra.mxu0 0.0
  %2616 = vmatprep.subr.mxu0 0.0
  %2617 = vmatpush1.msra.mxu0 0.0
  %2618 = vmatprep.subr.mxu0 0.0
  %2619 = vmatpush1.msra.mxu0 0.0
  %2620 = vmatprep.subr.mxu0 0.0
  %2621 = vmatpush1.msra.mxu0 0.0
  %2622 = vmatprep.subr.mxu0 0.0
  %2623 = vmatpush1.msra.mxu0 0.0
  %2624 = vmatprep.subr.mxu0 0.0
  %2625 = vmatpush1.msra.mxu0 0.0
  %2626 = vmatprep.subr.mxu0 0.0
  %2627 = vmatpush1.msra.mxu0 0.0
  %2628 = vmatprep.subr.mxu0 0.0
  %2629 = vmatpush1.msra.mxu0 0.0
  %2630 = vmatprep.subr.mxu0 0.0
  %2631 = vmatpush1.msra.mxu0 0.0
  %2632 = vmatprep.subr.mxu0 0.0
  %2633 = vmatpush1.msra.mxu0 0.0
  %2634 = vmatprep.subr.mxu0 0.0
  %2635 = vmatpush1.msra.mxu0 0.0
  %2636 = vmatprep.subr.mxu0 0.0
  %2637 = vmatpush1.msra.mxu0 0.0
  %2638 = vmatprep.subr.mxu0 0.0
  %2639 = vmatpush1.msra.mxu0 0.0
  %2640 = vmatprep.subr.mxu0 0.0
  %2641 = vmatpush1.msra.mxu0 0.0
  %2642 = vmatprep.subr.mxu0 0.0
  %2643 = vmatpush1.msra.mxu0 0.0
  %2644 = vmatprep.subr.mxu0 0.0
  %2645 = vmatpush1.msra.mxu0 0.0
  %2646 = vmatprep.subr.mxu0 0.0
  %2647 = vmatpush1.msra.mxu0 0.0
  %2648 = vmatprep.subr.mxu0 0.0
  %2649 = vmatpush1.msra.mxu0 0.0
  %2650 = vmatprep.subr.mxu0 0.0
  %2651 = vmatpush1.msra.mxu0 0.0
  %2652 = vmatprep.subr.mxu0 0.0
  %2653 = vmatpush1.msra.mxu0 0.0
  %2654 = vmatprep.mubr.f32.mxu0 0.0
  %2655 = vmatmul.mubr.f32.gmra.mrb[0].mxu0 %v2588
  %v2656 = vpop.f32.mrb[0].mxu0
  %v2657 = vadd.f32 0.0, %v2656
  %v2658 = vpop.f32.mrb[0].mxu0
  %v2659 = vadd.f32 0.0, %v2658
  %2660 = vdwg.mxu0
  %v2661 = vadd.f32 %v2584, %v2657
  %v2662 = vadd.f32 %v2585, %v2659
  %v2663 = vxor.u32 %v2661, 2147483648
  %v2664 = vxor.u32 %v2662, 2147483648
  %v2665 = vmul.f32 %v2663, 1.442695
  %v2666 = vpow.pop %v2665
  %v2667 = vmul.f32 %v2664, 1.442695
  %v2668 = vpow.pop %v2667
  %v2669 = vadd.f32 %v2666, 1.0
  %v2670 = vadd.f32 %v2668, 1.0
  %v2671 = vrcp.pop %v2669
  %v2672 = vmul.f32 1.0, %v2671
  %v2673 = vrcp.pop %v2670
  %v2674 = vmul.f32 1.0, %v2673
  %v2675 = vtanh.pop %v2661
  %v2676 = vtanh.pop %v2662
  %v2677 = vmul.f32 %v2672, %v2550
  %2679 = vrot.lane.b32.xlu0 %v2675, 64
  %v2680 = vpop.permute.xlu0 %2679
  %v2682 = vmul.f32 %v2672, %v2680
  %2684 = vrot.lane.b32.xlu0 %v2682, 32
  %v2685 = vpop.permute.xlu0 %2684
  %v2687 = vadd.f32 %v2677, %v2685
  %v2688 = vmul.f32 %v2674, %v2561
  %2690 = vrot.lane.b32.xlu0 %v2676, 64
  %v2691 = vpop.permute.xlu0 %2690
  %v2693 = vmul.f32 %v2674, %v2691
  %2695 = vrot.lane.b32.xlu0 %v2693, 32
  %v2696 = vpop.permute.xlu0 %2695
  %v2698 = vadd.f32 %v2688, %v2696
  %v2699 = vtanh.pop %v2687
  %2701 = vrot.lane.b32.xlu0 %v2699, 64
  %v2702 = vpop.permute.xlu0 %2701
  %v2704 = vmul.f32 %v2672, %v2702
  %v2705 = vtanh.pop %v2698
  %2707 = vrot.lane.b32.xlu0 %v2705, 64
  %v2708 = vpop.permute.xlu0 %2707
  %v2710 = vmul.f32 %v2674, %v2708
  %2712 = vrot.lane.b32.xlu0 %v2704, 32
  %v2713 = vpop.permute.xlu0 %2712
  %2715 = vst.msk [vmem:[%s623] sm:$0xff] %vm475, %v2713
  %2717 = vrot.lane.b32.xlu0 %v2710, 64
  %v2718 = vpop.permute.xlu0 %2717
  %2720 = vst.msk [vmem:[%s617] sm:$0xff] %vm482, %v2718
  %v2721 = vld [vmem:[%s1324] sm:$0xff]
  %v2722 = vld [vmem:[#allocation3] sm:$0xff]
  %v2723 = vsel %vm475, %v2713, %v2718
  %v2725 = vsel %vm346, %v2723, 0
  %2727 = vmatprep.subr.mxu0 %v1751
  %2728 = vmatpush1.msra.mxu0 %v1750
  %2729 = vmatprep.subr.mxu0 %v1753
  %2730 = vmatpush1.msra.mxu0 %v1752
  %2731 = vmatprep.subr.mxu0 %v1755
  %2732 = vmatpush1.msra.mxu0 %v1754
  %2733 = vmatprep.subr.mxu0 %v1757
  %2734 = vmatpush1.msra.mxu0 %v1756
  %2735 = vmatprep.subr.mxu0 %v1759
  %2736 = vmatpush1.msra.mxu0 %v1758
  %2737 = vmatprep.subr.mxu0 %v1761
  %2738 = vmatpush1.msra.mxu0 %v1760
  %2739 = vmatprep.subr.mxu0 %v1763
  %2740 = vmatpush1.msra.mxu0 %v1762
  %2741 = vmatprep.subr.mxu0 %v1765
  %2742 = vmatpush1.msra.mxu0 %v1764
  %2743 = vmatprep.subr.mxu0 0.0
  %2744 = vmatpush1.msra.mxu0 0.0
  %2745 = vmatprep.subr.mxu0 0.0
  %2746 = vmatpush1.msra.mxu0 0.0
  %2747 = vmatprep.subr.mxu0 0.0
  %2748 = vmatpush1.msra.mxu0 0.0
  %2749 = vmatprep.subr.mxu0 0.0
  %2750 = vmatpush1.msra.mxu0 0.0
  %2751 = vmatprep.subr.mxu0 0.0
  %2752 = vmatpush1.msra.mxu0 0.0
  %2753 = vmatprep.subr.mxu0 0.0
  %2754 = vmatpush1.msra.mxu0 0.0
  %2755 = vmatprep.subr.mxu0 0.0
  %2756 = vmatpush1.msra.mxu0 0.0
  %2757 = vmatprep.subr.mxu0 0.0
  %2758 = vmatpush1.msra.mxu0 0.0
  %2759 = vmatprep.subr.mxu0 0.0
  %2760 = vmatpush1.msra.mxu0 0.0
  %2761 = vmatprep.subr.mxu0 0.0
  %2762 = vmatpush1.msra.mxu0 0.0
  %2763 = vmatprep.subr.mxu0 0.0
  %2764 = vmatpush1.msra.mxu0 0.0
  %2765 = vmatprep.subr.mxu0 0.0
  %2766 = vmatpush1.msra.mxu0 0.0
  %2767 = vmatprep.subr.mxu0 0.0
  %2768 = vmatpush1.msra.mxu0 0.0
  %2769 = vmatprep.subr.mxu0 0.0
  %2770 = vmatpush1.msra.mxu0 0.0
  %2771 = vmatprep.subr.mxu0 0.0
  %2772 = vmatpush1.msra.mxu0 0.0
  %2773 = vmatprep.subr.mxu0 0.0
  %2774 = vmatpush1.msra.mxu0 0.0
  %2775 = vmatprep.subr.mxu0 0.0
  %2776 = vmatpush1.msra.mxu0 0.0
  %2777 = vmatprep.subr.mxu0 0.0
  %2778 = vmatpush1.msra.mxu0 0.0
  %2779 = vmatprep.subr.mxu0 0.0
  %2780 = vmatpush1.msra.mxu0 0.0
  %2781 = vmatprep.subr.mxu0 0.0
  %2782 = vmatpush1.msra.mxu0 0.0
  %2783 = vmatprep.subr.mxu0 0.0
  %2784 = vmatpush1.msra.mxu0 0.0
  %2785 = vmatprep.subr.mxu0 0.0
  %2786 = vmatpush1.msra.mxu0 0.0
  %2787 = vmatprep.subr.mxu0 0.0
  %2788 = vmatpush1.msra.mxu0 0.0
  %2789 = vmatprep.subr.mxu0 0.0
  %2790 = vmatpush1.msra.mxu0 0.0
  %2791 = vmatprep.mubr.f32.mxu0 0.0
  %2792 = vmatmul.mubr.f32.gmra.mrb[0].mxu0 %v2725
  %v2793 = vpop.f32.mrb[0].mxu0
  %v2794 = vadd.f32 0.0, %v2793
  %v2795 = vpop.f32.mrb[0].mxu0
  %v2796 = vadd.f32 0.0, %v2795
  %2797 = vdwg.mxu0
  %v2798 = vadd.f32 %v2721, %v2794
  %v2799 = vadd.f32 %v2722, %v2796
  %v2800 = vxor.u32 %v2798, 2147483648
  %v2801 = vxor.u32 %v2799, 2147483648
  %v2802 = vmul.f32 %v2800, 1.442695
  %v2803 = vpow.pop %v2802
  %v2804 = vmul.f32 %v2801, 1.442695
  %v2805 = vpow.pop %v2804
  %v2806 = vadd.f32 %v2803, 1.0
  %v2807 = vadd.f32 %v2805, 1.0
  %v2808 = vrcp.pop %v2806
  %v2809 = vmul.f32 1.0, %v2808
  %v2810 = vrcp.pop %v2807
  %v2811 = vmul.f32 1.0, %v2810
  %v2812 = vtanh.pop %v2798
  %v2813 = vtanh.pop %v2799
  %v2814 = vmul.f32 %v2809, %v2687
  %2816 = vrot.lane.b32.xlu0 %v2812, 64
  %v2817 = vpop.permute.xlu0 %2816
  %v2819 = vmul.f32 %v2809, %v2817
  %2821 = vrot.lane.b32.xlu0 %v2819, 32
  %v2822 = vpop.permute.xlu0 %2821
  %v2824 = vadd.f32 %v2814, %v2822
  %v2825 = vmul.f32 %v2811, %v2698
  %2827 = vrot.lane.b32.xlu0 %v2813, 64
  %v2828 = vpop.permute.xlu0 %2827
  %v2830 = vmul.f32 %v2811, %v2828
  %2832 = vrot.lane.b32.xlu0 %v2830, 32
  %v2833 = vpop.permute.xlu0 %2832
  %v2835 = vadd.f32 %v2825, %v2833
  %v2836 = vtanh.pop %v2824
  %2838 = vrot.lane.b32.xlu0 %v2836, 64
  %v2839 = vpop.permute.xlu0 %2838
  %v2841 = vmul.f32 %v2809, %v2839
  %v2842 = vtanh.pop %v2835
  %2844 = vrot.lane.b32.xlu0 %v2842, 64
  %v2845 = vpop.permute.xlu0 %2844
  %v2847 = vmul.f32 %v2811, %v2845
  %2849 = vrot.lane.b32.xlu0 %v2841, 32
  %v2850 = vpop.permute.xlu0 %2849
  %2852 = vst.msk [vmem:[%s481] sm:$0xff] %vm475, %v2850
  %2854 = vrot.lane.b32.xlu0 %v2847, 64
  %v2855 = vpop.permute.xlu0 %2854
  %2857 = vst.msk [vmem:[#allocation4] sm:$0xff] %vm482, %v2855
  %v2858 = vld [vmem:[#allocation4] sm:$0xff]
  %v2859 = vld [vmem:[#allocation4 + $0x8] sm:$0xff]
  %v2860 = vld [vmem:[#allocation4 + $0x10] sm:$0xff]
  %v2861 = vld [vmem:[#allocation4 + $0x18] sm:$0xff]
  %v2862 = vld [vmem:[#allocation4 + $0x20] sm:$0xff]
  %v2863 = vld [vmem:[#allocation4 + $0x28] sm:$0xff]
  %v2864 = vld [vmem:[#allocation4 + $0x30] sm:$0xff]
  %v2865 = vld [vmem:[#allocation4 + $0x38] sm:$0xff]
  %v2866 = vsel %vm346, %v2858, 0.0
  %2867 = vadd.xlane.f32.xlu0 %v2866
  %v2868 = vpop.xlane.xlu0 %2867
  %v2869 = vsel %vm346, %v2859, 0.0
  %2870 = vadd.xlane.f32.xlu0 %v2869
  %v2871 = vpop.xlane.xlu0 %2870
  %v2872 = vsel %vm346, %v2860, 0.0
  %2873 = vadd.xlane.f32.xlu0 %v2872
  %v2874 = vpop.xlane.xlu0 %2873
  %v2875 = vsel %vm346, %v2861, 0.0
  %2876 = vadd.xlane.f32.xlu0 %v2875
  %v2877 = vpop.xlane.xlu0 %2876
  %v2878 = vsel %vm346, %v2862, 0.0
  %2879 = vadd.xlane.f32.xlu0 %v2878
  %v2880 = vpop.xlane.xlu0 %2879
  %v2881 = vsel %vm346, %v2863, 0.0
  %2882 = vadd.xlane.f32.xlu0 %v2881
  %v2883 = vpop.xlane.xlu0 %2882
  %v2884 = vsel %vm346, %v2864, 0.0
  %2885 = vadd.xlane.f32.xlu0 %v2884
  %v2886 = vpop.xlane.xlu0 %2885
  %v2887 = vsel %vm346, %v2865, 0.0
  %2888 = vadd.xlane.f32.xlu0 %v2887
  %v2889 = vpop.xlane.xlu0 %2888
  %v2890 = vrcp.pop 64.0
  %v2891 = vmul.f32 %v2868, %v2890
  %v2892 = vmul.f32 %v2871, %v2890
  %v2893 = vmul.f32 %v2874, %v2890
  %v2894 = vmul.f32 %v2877, %v2890
  %v2895 = vmul.f32 %v2880, %v2890
  %v2896 = vmul.f32 %v2883, %v2890
  %v2897 = vmul.f32 %v2886, %v2890
  %v2898 = vmul.f32 %v2889, %v2890
  %v2899 = vsub.f32 %v2858, %v2891
  %v2900 = vsub.f32 %v2859, %v2892
  %v2901 = vsub.f32 %v2860, %v2893
  %v2902 = vsub.f32 %v2861, %v2894
  %v2903 = vsub.f32 %v2862, %v2895
  %v2904 = vsub.f32 %v2863, %v2896
  %v2905 = vsub.f32 %v2864, %v2897
  %v2906 = vsub.f32 %v2865, %v2898
  %v2907 = vmul.f32 %v2899, %v2899
  %v2908 = vmul.f32 %v2900, %v2900
  %v2909 = vmul.f32 %v2901, %v2901
  %v2910 = vmul.f32 %v2902, %v2902
  %v2911 = vmul.f32 %v2903, %v2903
  %v2912 = vmul.f32 %v2904, %v2904
  %v2913 = vmul.f32 %v2905, %v2905
  %v2914 = vmul.f32 %v2906, %v2906
  %v2915 = vsel %vm346, %v2907, 0.0
  %2916 = vadd.xlane.f32.xlu0 %v2915
  %v2917 = vpop.xlane.xlu0 %2916
  %v2918 = vsel %vm346, %v2908, 0.0
  %2919 = vadd.xlane.f32.xlu0 %v2918
  %v2920 = vpop.xlane.xlu0 %2919
  %v2921 = vsel %vm346, %v2909, 0.0
  %2922 = vadd.xlane.f32.xlu0 %v2921
  %v2923 = vpop.xlane.xlu0 %2922
  %v2924 = vsel %vm346, %v2910, 0.0
  %2925 = vadd.xlane.f32.xlu0 %v2924
  %v2926 = vpop.xlane.xlu0 %2925
  %v2927 = vsel %vm346, %v2911, 0.0
  %2928 = vadd.xlane.f32.xlu0 %v2927
  %v2929 = vpop.xlane.xlu0 %2928
  %v2930 = vsel %vm346, %v2912, 0.0
  %2931 = vadd.xlane.f32.xlu0 %v2930
  %v2932 = vpop.xlane.xlu0 %2931
  %v2933 = vsel %vm346, %v2913, 0.0
  %2934 = vadd.xlane.f32.xlu0 %v2933
  %v2935 = vpop.xlane.xlu0 %2934
  %v2936 = vsel %vm346, %v2914, 0.0
  %2937 = vadd.xlane.f32.xlu0 %v2936
  %v2938 = vpop.xlane.xlu0 %2937
  %v2939 = vmul.f32 %v2917, %v2890
  %v2940 = vmul.f32 %v2920, %v2890
  %v2941 = vmul.f32 %v2923, %v2890
  %v2942 = vmul.f32 %v2926, %v2890
  %v2943 = vmul.f32 %v2929, %v2890
  %v2944 = vmul.f32 %v2932, %v2890
  %v2945 = vmul.f32 %v2935, %v2890
  %v2946 = vmul.f32 %v2938, %v2890
  %v2947 = vadd.f32 %v2939, 1e-05
  %v2948 = vadd.f32 %v2940, 1e-05
  %v2949 = vadd.f32 %v2941, 1e-05
  %v2950 = vadd.f32 %v2942, 1e-05
  %v2951 = vadd.f32 %v2943, 1e-05
  %v2952 = vadd.f32 %v2944, 1e-05
  %v2953 = vadd.f32 %v2945, 1e-05
  %v2954 = vadd.f32 %v2946, 1e-05
  %v2955 = vrsqrt.pop %v2947
  %v2956 = vrsqrt.pop %v2948
  %v2957 = vrsqrt.pop %v2949
  %v2958 = vrsqrt.pop %v2950
  %v2959 = vrsqrt.pop %v2951
  %v2960 = vrsqrt.pop %v2952
  %v2961 = vrsqrt.pop %v2953
  %v2962 = vrsqrt.pop %v2954
  %v2963 = vmul.f32 %v2899, %v2955
  %v2964 = vmul.f32 %v2900, %v2956
  %v2965 = vmul.f32 %v2901, %v2957
  %v2966 = vmul.f32 %v2902, %v2958
  %v2967 = vmul.f32 %v2903, %v2959
  %v2968 = vmul.f32 %v2904, %v2960
  %v2969 = vmul.f32 %v2905, %v2961
  %v2970 = vmul.f32 %v2906, %v2962
  %v2971 = vld [vmem:[%s11] sm:$0x1]
  %v2973 = vlaneseq
  %v2974 = vshrl.u32 %v2973, 7
  %v2975 = vsub.s32 0, %v2974
  %v2976 = vrot.slane %v2971, %v2975
  %v2978 = vmul.f32 %v2963, %v2976
  %v2979 = vmul.f32 %v2964, %v2976
  %v2980 = vmul.f32 %v2965, %v2976
  %v2981 = vmul.f32 %v2966, %v2976
  %v2982 = vmul.f32 %v2967, %v2976
  %v2983 = vmul.f32 %v2968, %v2976
  %v2984 = vmul.f32 %v2969, %v2976
  %v2985 = vmul.f32 %v2970, %v2976
  %v2986 = vld [vmem:[%s12] sm:$0x1]
  %v2988 = vlaneseq
  %v2989 = vshrl.u32 %v2988, 7
  %v2990 = vsub.s32 0, %v2989
  %v2991 = vrot.slane %v2986, %v2990
  %v2993 = vadd.f32 %v2978, %v2991
  %v2994 = vadd.f32 %v2979, %v2991
  %v2995 = vadd.f32 %v2980, %v2991
  %v2996 = vadd.f32 %v2981, %v2991
  %v2997 = vadd.f32 %v2982, %v2991
  %v2998 = vadd.f32 %v2983, %v2991
  %v2999 = vadd.f32 %v2984, %v2991
  %v3000 = vadd.f32 %v2985, %v2991
  %v3001 = vld [vmem:[%s13] sm:$0xff]
  %v3002 = vld [vmem:[%s13 + $0x8] sm:$0xff]
  %v3003 = vld [vmem:[%s13 + $0x10] sm:$0xff]
  %v3004 = vld [vmem:[%s13 + $0x18] sm:$0xff]
  %v3005 = vld [vmem:[%s13 + $0x20] sm:$0xff]
  %v3006 = vld [vmem:[%s13 + $0x28] sm:$0xff]
  %v3007 = vld [vmem:[%s13 + $0x30] sm:$0xff]
  %v3008 = vld [vmem:[%s13 + $0x38] sm:$0xff]
  %v3009 = vld [vmem:[%s14] sm:$0x1]
  %v3011 = vlaneseq
  %v3012 = vshrl.u32 %v3011, 7
  %v3013 = vsub.s32 0, %v3012
  %v3014 = vrot.slane %v3009, %v3013
  %v3017 = vsel %vm346, %v2993, 0
  %v3020 = vsel %vm346, %v2994, 0
  %v3023 = vsel %vm346, %v2995, 0
  %v3026 = vsel %vm346, %v2996, 0
  %v3029 = vsel %vm346, %v2997, 0
  %v3032 = vsel %vm346, %v2998, 0
  %v3035 = vsel %vm346, %v2999, 0
  %v3038 = vsel %vm346, %v3000, 0
  %3040 = vmatprep.subr.mxu0 0.0
  %3041 = vmatpush1.msra.mxu0 %v3001
  %3042 = vmatprep.subr.mxu0 0.0
  %3043 = vmatpush1.msra.mxu0 %v3002
  %3044 = vmatprep.subr.mxu0 0.0
  %3045 = vmatpush1.msra.mxu0 %v3003
  %3046 = vmatprep.subr.mxu0 0.0
  %3047 = vmatpush1.msra.mxu0 %v3004
  %3048 = vmatprep.subr.mxu0 0.0
  %3049 = vmatpush1.msra.mxu0 %v3005
  %3050 = vmatprep.subr.mxu0 0.0
  %3051 = vmatpush1.msra.mxu0 %v3006
  %3052 = vmatprep.subr.mxu0 0.0
  %3053 = vmatpush1.msra.mxu0 %v3007
  %3054 = vmatprep.subr.mxu0 0.0
  %3055 = vmatpush1.msra.mxu0 %v3008
  %3056 = vmatprep.subr.mxu0 0.0
  %3057 = vmatpush1.msra.mxu0 0.0
  %3058 = vmatprep.subr.mxu0 0.0
  %3059 = vmatpush1.msra.mxu0 0.0
  %3060 = vmatprep.subr.mxu0 0.0
  %3061 = vmatpush1.msra.mxu0 0.0
  %3062 = vmatprep.subr.mxu0 0.0
  %3063 = vmatpush1.msra.mxu0 0.0
  %3064 = vmatprep.subr.mxu0 0.0
  %3065 = vmatpush1.msra.mxu0 0.0
  %3066 = vmatprep.subr.mxu0 0.0
  %3067 = vmatpush1.msra.mxu0 0.0
  %3068 = vmatprep.subr.mxu0 0.0
  %3069 = vmatpush1.msra.mxu0 0.0
  %3070 = vmatprep.subr.mxu0 0.0
  %3071 = vmatpush1.msra.mxu0 0.0
  %3072 = vmatprep.subr.mxu0 0.0
  %3073 = vmatpush1.msra.mxu0 0.0
  %3074 = vmatprep.subr.mxu0 0.0
  %3075 = vmatpush1.msra.mxu0 0.0
  %3076 = vmatprep.subr.mxu0 0.0
  %3077 = vmatpush1.msra.mxu0 0.0
  %3078 = vmatprep.subr.mxu0 0.0
  %3079 = vmatpush1.msra.mxu0 0.0
  %3080 = vmatprep.subr.mxu0 0.0
  %3081 = vmatpush1.msra.mxu0 0.0
  %3082 = vmatprep.subr.mxu0 0.0
  %3083 = vmatpush1.msra.mxu0 0.0
  %3084 = vmatprep.subr.mxu0 0.0
  %3085 = vmatpush1.msra.mxu0 0.0
  %3086 = vmatprep.subr.mxu0 0.0
  %3087 = vmatpush1.msra.mxu0 0.0
  %3088 = vmatprep.subr.mxu0 0.0
  %3089 = vmatpush1.msra.mxu0 0.0
  %3090 = vmatprep.subr.mxu0 0.0
  %3091 = vmatpush1.msra.mxu0 0.0
  %3092 = vmatprep.subr.mxu0 0.0
  %3093 = vmatpush1.msra.mxu0 0.0
  %3094 = vmatprep.subr.mxu0 0.0
  %3095 = vmatpush1.msra.mxu0 0.0
  %3096 = vmatprep.subr.mxu0 0.0
  %3097 = vmatpush1.msra.mxu0 0.0
  %3098 = vmatprep.subr.mxu0 0.0
  %3099 = vmatpush1.msra.mxu0 0.0
  %3100 = vmatprep.subr.mxu0 0.0
  %3101 = vmatpush1.msra.mxu0 0.0
  %3102 = vmatprep.subr.mxu0 0.0
  %3103 = vmatpush1.msra.mxu0 0.0
  %3104 = vmatprep.mubr.f32.mxu0 0.0
  %3105 = vmatmul.mubr.f32.gmra.mrb[0].mxu0 %v3017
  %v3106 = vpop.f32.mrb[0].mxu0
  %v3107 = vadd.f32 %v3014, %v3106
  %v3108 = vpop.f32.mrb[0].mxu0
  %3109 = vmatprep.mubr.f32.mxu0 0.0
  %3110 = vmatmul.mubr.f32.gmra.mrb[0].mxu0 %v3020
  %v3111 = vpop.f32.mrb[0].mxu0
  %v3112 = vadd.f32 %v3014, %v3111
  %v3113 = vpop.f32.mrb[0].mxu0
  %3114 = vmatprep.mubr.f32.mxu0 0.0
  %3115 = vmatmul.mubr.f32.gmra.mrb[0].mxu0 %v3023
  %v3116 = vpop.f32.mrb[0].mxu0
  %v3117 = vadd.f32 %v3014, %v3116
  %v3118 = vpop.f32.mrb[0].mxu0
  %3119 = vmatprep.mubr.f32.mxu0 0.0
  %3120 = vmatmul.mubr.f32.gmra.mrb[0].mxu0 %v3026
  %v3121 = vpop.f32.mrb[0].mxu0
  %v3122 = vadd.f32 %v3014, %v3121
  %v3123 = vpop.f32.mrb[0].mxu0
  %3124 = vmatprep.mubr.f32.mxu0 0.0
  %3125 = vmatmul.mubr.f32.gmra.mrb[0].mxu0 %v3029
  %v3126 = vpop.f32.mrb[0].mxu0
  %v3127 = vadd.f32 %v3014, %v3126
  %v3128 = vpop.f32.mrb[0].mxu0
  %3129 = vmatprep.mubr.f32.mxu0 0.0
  %3130 = vmatmul.mubr.f32.gmra.mrb[0].mxu0 %v3032
  %v3131 = vpop.f32.mrb[0].mxu0
  %v3132 = vadd.f32 %v3014, %v3131
  %v3133 = vpop.f32.mrb[0].mxu0
  %3134 = vmatprep.mubr.f32.mxu0 0.0
  %3135 = vmatmul.mubr.f32.gmra.mrb[0].mxu0 %v3035
  %v3136 = vpop.f32.mrb[0].mxu0
  %v3137 = vadd.f32 %v3014, %v3136
  %v3138 = vpop.f32.mrb[0].mxu0
  %3139 = vmatprep.mubr.f32.mxu0 0.0
  %3140 = vmatmul.mubr.f32.gmra.mrb[0].mxu0 %v3038
  %v3141 = vpop.f32.mrb[0].mxu0
  %v3142 = vadd.f32 %v3014, %v3141
  %v3143 = vpop.f32.mrb[0].mxu0
  %3144 = vdwg.mxu0
  %3145 = vst [vmem:[%s15] sm:$0xff] %v3107
  %3146 = vst [vmem:[%s15 + $0x8] sm:$0xff] %v3112
  %3147 = vst [vmem:[%s15 + $0x10] sm:$0xff] %v3117
  %3148 = vst [vmem:[%s15 + $0x18] sm:$0xff] %v3122
  %3149 = vst [vmem:[%s15 + $0x20] sm:$0xff] %v3127
  %3150 = vst [vmem:[%s15 + $0x28] sm:$0xff] %v3132
  %3151 = vst [vmem:[%s15 + $0x30] sm:$0xff] %v3137
  %3152 = vst [vmem:[%s15 + $0x38] sm:$0xff] %v3142
  // Predicated region
  $region62: #{_lambda_.1} parent=0 // pred_check
    _
  $region63: #{_lambda_.1} parent=0 // pred_check_branch
    %3154 = sbr.rel (0) target = $region65
  $region64: #{_lambda_.1} parent=0 // pred_region
    _
  $region65: #{_lambda_.1} parent=0 // pred_fallthru
    _
  // Predicated region
  $region66: #{_lambda_.1} parent=0 // pred_check
    _
  $region67: #{_lambda_.1} parent=0 // pred_check_branch
    %3156 = sbr.rel (0) target = $region69
  $region68: #{_lambda_.1} parent=0 // pred_region
    _
  $region69: #{_lambda_.1} parent=0 // pred_fallthru
    _

</llo_original>
